<compile_context>
chip_gen: v6e
topology: v6e:2x2x1
jax: 0.10.0
libtpu: 0.0.40
codegen_flags: <defaults>
</compile_context>

<pallas_src>
import math
import functools

import jax
import jax.numpy as jnp
from jax.experimental import pallas as pl
from jax.experimental.pallas import tpu as pltpu


# ----------------------------------------------------------------------------
# Fused RATLayer kernel
# ----------------------------------------------------------------------------
def _rat_layer_kernel(h_ref, rel_ref,
                      ln1_ref, wqkv_ref, bqkv_ref, wo_ref, bo_ref,
                      ln2_ref, w1_ref, b1_ref, w2_ref, b2_ref,
                      out_ref,
                      q_sc, k_sc, v_sc, m_sc, l_sc, acc_sc,
                      *, head_num, eps):
    i = pl.program_id(1)
    j = pl.program_id(2)
    nj = pl.num_programs(2)

    N, D = q_sc.shape
    H = head_num
    Dh = D // H
    Tq = rel_ref.shape[1]
    Tk = rel_ref.shape[3]
    scale = 1.0 / math.sqrt(Dh)
    f32 = jnp.float32
    bf16 = jnp.bfloat16

    # ---- per-batch prologue: LayerNorm1 + fused [N,D]x[D,3D] QKV ------------
    @pl.when(jnp.logical_and(i == 0, j == 0))
    def _qkv_prologue():
        x = h_ref[0].astype(f32)                                    # [N, D]
        mu = jnp.mean(x, axis=-1, keepdims=True)
        var = jnp.mean(jnp.square(x - mu), axis=-1, keepdims=True)
        g = ln1_ref[...]
        xn = (x - mu) * jax.lax.rsqrt(var + eps) * g[0:1, :] + g[1:2, :]
        qkv = jnp.dot(xn.astype(bf16), wqkv_ref[...],
                      preferred_element_type=f32) + bqkv_ref[...]   # [N, 3D]
        q_sc[...] = qkv[:, 0:D]
        k_sc[...] = qkv[:, D:2 * D] * scale      # fold 1/sqrt(Dh) into K once
        v_sc[...] = qkv[:, 2 * D:3 * D]

    # ---- per-query-tile init of the online-softmax state --------------------
    @pl.when(j == 0)
    def _init_state():
        m_sc[...] = jnp.full(m_sc.shape, -jnp.inf, f32)
        l_sc[...] = jnp.zeros(l_sc.shape, f32)
        acc_sc[...] = jnp.zeros(acc_sc.shape, f32)

    # ---- every step: head-batched relation attention on one (Tq, Tk) tile ---
    qi = pl.multiple_of(i * Tq, 8)
    kj = pl.multiple_of(j * Tk, 8)

    q_nd = q_sc[pl.ds(qi, Tq), :]                                   # [Tq, D]
    k_kd = k_sc[pl.ds(kj, Tk), :]                                   # [Tk, D] (pre-scaled)
    v_kd = v_sc[pl.ds(kj, Tk), :]                                   # [Tk, D]
    r = rel_ref[0]                                                  # [Tq, Dh, Tk] bf16

    q_nhd32 = q_nd.reshape(Tq, H, Dh)
    q_nhd = q_nhd32.astype(bf16)                                    # [Tq, H, Dh]
    q_hnd = jnp.transpose(q_nhd32, (1, 0, 2)).astype(bf16)          # [H, Tq, Dh]
    k_hkd = jnp.transpose(k_kd.reshape(Tk, H, Dh), (1, 0, 2)).astype(bf16)
    v_hkd = jnp.transpose(v_kd.reshape(Tk, H, Dh), (1, 0, 2)).astype(bf16)

    # scores[n,h,k] = q.k/sqrt(Dh) + q.relation   (bf16 operands, f32 accum)
    s_qk = jax.lax.dot_general(q_hnd, k_hkd, (((2,), (2,)), ((0,), (0,))),
                               preferred_element_type=f32)          # [H, Tq, Tk]
    s_rel = jax.lax.dot_general(q_nhd, r, (((2,), (1,)), ((0,), (0,))),
                                preferred_element_type=f32)         # [Tq, H, Tk]
    s = s_rel + jnp.transpose(s_qk, (1, 0, 2))                      # [Tq, H, Tk]
    # TODO(synk): additive attention mask would be added to `s` here.

    m_prev = m_sc[...]                                              # [Tq, H]
    m_new = jnp.maximum(m_prev, jnp.max(s, axis=-1))
    alpha = jnp.exp(m_prev - m_new)                                 # [Tq, H]
    p = jnp.exp(s - m_new[:, :, None])                              # [Tq, H, Tk]
    l_sc[...] = alpha * l_sc[...] + jnp.sum(p, axis=-1)
    m_sc[...] = m_new

    p_nhk = p.astype(bf16)                                          # [Tq, H, Tk]
    p_hnk = jnp.transpose(p, (1, 0, 2)).astype(bf16)                # [H, Tq, Tk]
    # out[n,h,:] += sum_k p * v   +   sum_k p * relation
    pv = jax.lax.dot_general(p_hnk, v_hkd, (((2,), (1,)), ((0,), (0,))),
                             preferred_element_type=f32)            # [H, Tq, Dh]
    pr = jax.lax.dot_general(p_nhk, r, (((2,), (2,)), ((0,), (0,))),
                             preferred_element_type=f32)            # [Tq, H, Dh]
    acc_sc[...] = (alpha[:, :, None] * acc_sc[...]
                   + pr + jnp.transpose(pv, (1, 0, 2)))

    # ---- epilogue: normalize, merge heads, Wo + residual + LN2 + FFN --------
    @pl.when(j == nj - 1)
    def _epilogue():
        inv_l = 1.0 / l_sc[...]                   # exact; once per query tile
        merged = (acc_sc[...] * inv_l[:, :, None]).reshape(Tq, D)   # [Tq, D]

        attn_out = jnp.dot(merged.astype(bf16), wo_ref[...],
                           preferred_element_type=f32) + bo_ref[...]
        y = attn_out + h_ref[0, pl.ds(qi, Tq), :].astype(f32)       # dropout = id

        mu = jnp.mean(y, axis=-1, keepdims=True)
        var = jnp.mean(jnp.square(y - mu), axis=-1, keepdims=True)
        g2 = ln2_ref[...]
        yn = (y - mu) * jax.lax.rsqrt(var + eps) * g2[0:1, :] + g2[1:2, :]
        inter = jnp.maximum(
            jnp.dot(yn.astype(bf16), w1_ref[...],
                    preferred_element_type=f32) + b1_ref[...], 0.0)
        ffo = jnp.dot(inter.astype(bf16), w2_ref[...],
                      preferred_element_type=f32) + b2_ref[...]
        # reference `output + x[:, :, :, 3]` is a source bug; intended `+ x`.
        out_ref[0] = (ffo + y).astype(out_ref.dtype)


# ----------------------------------------------------------------------------
# Wrapper
# ----------------------------------------------------------------------------
def _ceil_to(x, m):
    return (x + m - 1) // m * m


def _vmem_bytes(shape, dtype):
    """Padding-aware VMEM footprint of one buffer (minor dim -> 128 lanes,
    second-minor dim -> 8-sublane x 32-bit packing)."""
    isz = jnp.dtype(dtype).itemsize
    if len(shape) == 0:
        return 4
    if len(shape) == 1:
        return _ceil_to(int(shape[0]), 128) * 8 * isz
    lead = 1
    for d in shape[:-2]:
        lead *= int(d)
    sub = _ceil_to(int(shape[-2]), 8 * max(1, 4 // isz))
    lane = _ceil_to(int(shape[-1]), 128)
    return lead * sub * lane * isz


def rat_layer_forward(h, relation, params, head_num, *,
                      block_q=None, block_k=None, eps=1e-5):
    B, N, D = h.shape
    H = head_num
    assert D % H == 0
    Dh = D // H
    assert relation.shape == (B, N, N, Dh), relation.shape

    Tq = N if block_q is None else block_q
    Tk = N if block_k is None else block_k
    assert N % Tq == 0 and Tq % 8 == 0, (N, Tq)
    # Keys live in the lane dimension of the relation tile, so a split key tile
    # must be a 128-multiple.
    assert N % Tk == 0 and (Tk == N or Tk % 128 == 0), (N, Tk)
    ni, nj = N // Tq, N // Tk

    bf16 = jnp.bfloat16
    # Relation relayout: [B,N,N,Dh] -> [B,N,Dh,N] (keys in lanes) + bf16, so the
    # streamed O(N^2*Dh) operand is lane-dense and MXU-ready without an f32 copy.
    rel_t = jnp.transpose(relation, (0, 1, 3, 2)).astype(bf16)

    # One [D,3D] fused QKV weight; all matmul weights stored bf16 (half the DMA
    # bytes, full-rate MXU); biases / LayerNorm params stay f32.
    wqkv = jnp.concatenate([params["wq_t"], params["wk_t"], params["wv_t"]],
                           axis=1).astype(bf16)
    bqkv = jnp.concatenate([params["bq"], params["bk"], params["bv"]])[None, :]
    ln1 = jnp.stack([params["ln1_g"], params["ln1_b"]])
    ln2 = jnp.stack([params["ln2_g"], params["ln2_b"]])
    wo = params["wo_t"].astype(bf16)
    w1 = params["w1_t"].astype(bf16)
    w2 = params["w2_t"].astype(bf16)
    bo = params["bo"][None, :]
    b1 = params["b1"][None, :]
    b2 = params["b2"][None, :]

    kernel = functools.partial(_rat_layer_kernel, head_num=H, eps=eps)

    const = lambda b, i, j: (0, 0)
    in_specs = [
        pl.BlockSpec((1, N, D), lambda b, i, j: (b, 0, 0)),           # h
        pl.BlockSpec((1, Tq, Dh, Tk), lambda b, i, j: (b, i, 0, j)),  # relation
        # TODO(synk): single-buffer these constant blocks (pl.Buffered(1)).
        pl.BlockSpec((2, D), const),                                  # ln1
        pl.BlockSpec((D, 3 * D), const),                              # Wqkv
        pl.BlockSpec((1, 3 * D), const),                              # bqkv
        pl.BlockSpec((D, D), const),                                  # Wo
        pl.BlockSpec((1, D), const),                                  # bo
        pl.BlockSpec((2, D), const),                                  # ln2
        pl.BlockSpec((D, D), const),                                  # W1
        pl.BlockSpec((1, D), const),                                  # b1
        pl.BlockSpec((D, D), const),                                  # W2
        pl.BlockSpec((1, D), const),                                  # b2
    ]
    out_spec = pl.BlockSpec((1, Tq, D), lambda b, i, j: (b, i, 0))    # lane-dense

    scratch_shapes = [
        pltpu.VMEM((N, D), jnp.float32),          # q
        pltpu.VMEM((N, D), jnp.float32),          # k (pre-scaled by 1/sqrt(Dh))
        pltpu.VMEM((N, D), jnp.float32),          # v
        pltpu.VMEM((Tq, H), jnp.float32),         # online-softmax running max
        pltpu.VMEM((Tq, H), jnp.float32),         # online-softmax running sum
        pltpu.VMEM((Tq, H, Dh), jnp.float32),     # per-head output accumulator
    ]

    # Padding-aware VMEM budget: in/out blocks double-buffered, scratch single;
    # clamped to the queried per-core capacity with headroom (v7x: 64 MiB/TC).
    blocks = [((1, N, D), h.dtype), ((1, Tq, Dh, Tk), bf16),
              ((2, D), jnp.float32), ((D, 3 * D), bf16), ((1, 3 * D), jnp.float32),
              ((D, D), bf16), ((1, D), jnp.float32), ((2, D), jnp.float32),
              ((D, D), bf16), ((1, D), jnp.float32), ((D, D), bf16),
              ((1, D), jnp.float32), ((1, Tq, D), h.dtype)]
    scratch_meta = ([((N, D), jnp.float32)] * 3 + [((Tq, H), jnp.float32)] * 2
                    + [((Tq, H, Dh), jnp.float32)])
    est = (2 * sum(_vmem_bytes(s, d) for s, d in blocks)
           + sum(_vmem_bytes(s, d) for s, d in scratch_meta))
    est = int(est * 1.25) + (4 << 20)            # compiler-internal headroom
    try:
        cap = int(pltpu.get_tpu_info().vmem_capacity_bytes)
    except Exception:
        cap = 64 << 20                           # conservative: v7x per-core VMEM
    vmem_limit = int(min(max(est, 16 << 20), cap - (16 << 20)))

    return pl.pallas_call(
        kernel,
        out_shape=jax.ShapeDtypeStruct((B, N, D), h.dtype),
        grid_spec=pltpu.PrefetchScalarGridSpec(
            num_scalar_prefetch=0,
            grid=(B, ni, nj),
            in_specs=in_specs,
            out_specs=out_spec,
            scratch_shapes=scratch_shapes),
        # Query-tile axis is "arbitrary" because K/V scratch is produced at
        # i==0 and reused for all query tiles of the batch element.
        compiler_params=pltpu.CompilerParams(
            dimension_semantics=("parallel", "arbitrary", "arbitrary"),
            vmem_limit_bytes=vmem_limit),
    )(h, rel_t, ln1, wqkv, bqkv, wo, bo, ln2, w1, b1, w2, b2)


# ----------------------------------------------------------------------------
# Pure-JAX reference (intended RATLayer semantics) for verification.
# ----------------------------------------------------------------------------
def ref_rat_layer(h, relation, params, head_num, eps=1e-5):
    B, N, D = h.shape
    H = head_num
    Dh = D // H

    def layer_norm(x, g, b):
        mu = jnp.mean(x, axis=-1, keepdims=True)
        var = jnp.mean(jnp.square(x - mu), axis=-1, keepdims=True)
        return (x - mu) / jnp.sqrt(var + eps) * g + b

    x = layer_norm(h, params["ln1_g"], params["ln1_b"])
    q = x @ params["wq_t"] + params["bq"]
    k = x @ params["wk_t"] + params["bk"]
    v = x @ params["wv_t"] + params["bv"]
    qh = q.reshape(B, N, H, Dh).transpose(0, 2, 1, 3)
    kh = k.reshape(B, N, H, Dh).transpose(0, 2, 1, 3)
    vh = v.reshape(B, N, H, Dh).transpose(0, 2, 1, 3)
    scores = jnp.einsum("bhid,bhjd->bhij", qh, kh) / math.sqrt(Dh)
    scores = scores + jnp.einsum("bhid,bijd->bhij", qh, relation)
    attn = jax.nn.softmax(scores, axis=-1)
    out_h = (jnp.einsum("bhij,bhjd->bhid", attn, vh)
             + jnp.einsum("bhij,bijd->bhid", attn, relation))
    merged = out_h.transpose(0, 2, 1, 3).reshape(B, N, D)
    attn_out = merged @ params["wo_t"] + params["bo"]
    y = attn_out + h
    yn = layer_norm(y, params["ln2_g"], params["ln2_b"])
    inter = jax.nn.relu(yn @ params["w1_t"] + params["b1"])
    ffo = inter @ params["w2_t"] + params["b2"]
    return ffo + y


# ----------------------------------------------------------------------------
# Deterministic parameter init (PyTorch nn.Linear-style uniform bounds).
# ----------------------------------------------------------------------------
def init_params(key, d_model):
    D = d_model
    keys = jax.random.split(key, 8)

    def lin(k, fan_in, fan_out):
        kw, kb = jax.random.split(k)
        bound = 1.0 / math.sqrt(fan_in)
        w_t = jax.random.uniform(kw, (fan_in, fan_out), jnp.float32, -bound, bound)
        b = jax.random.uniform(kb, (fan_out,), jnp.float32, -bound, bound)
        return w_t, b

    wq_t, bq = lin(keys[0], D, D)
    wk_t, bk = lin(keys[1], D, D)
    wv_t, bv = lin(keys[2], D, D)
    wo_t, bo = lin(keys[3], D, D)
    w1_t, b1 = lin(keys[4], D, D)     # PositionwiseFeedForward(d_model, d_model)
    w2_t, b2 = lin(keys[5], D, D)
    # PyTorch LayerNorm default is gamma=1, beta=0; perturb mildly so the affine
    # part of LN is actually exercised by the correctness check.
    ln1_g = 1.0 + 0.1 * jax.random.normal(keys[6], (D,), jnp.float32)
    ln1_b = 0.1 * jax.random.normal(jax.random.fold_in(keys[6], 1), (D,), jnp.float32)
    ln2_g = 1.0 + 0.1 * jax.random.normal(keys[7], (D,), jnp.float32)
    ln2_b = 0.1 * jax.random.normal(jax.random.fold_in(keys[7], 1), (D,), jnp.float32)
    return dict(ln1_g=ln1_g, ln1_b=ln1_b,
                wq_t=wq_t, bq=bq, wk_t=wk_t, bk=bk, wv_t=wv_t, bv=bv,
                wo_t=wo_t, bo=bo,
                ln2_g=ln2_g, ln2_b=ln2_b,
                w1_t=w1_t, b1=b1, w2_t=w2_t, b2=b2)


if __name__ == "__main__":
    B, N, D, H = 2, 16, 32, 4            # batch, nodes, d_model, heads
    Dh = D // H

    root = jax.random.PRNGKey(0)
    k_h, k_r, k_p = jax.random.split(root, 3)
    h = jax.random.normal(k_h, (B, N, D), jnp.float32)
    relation = jax.random.normal(k_r, (B, N, N, Dh), jnp.float32)
    params = init_params(k_p, D)

    # block_q=8 -> two query tiles per batch element, so the query-tiling /
    # scratch-reuse / per-tile epilogue paths are exercised.  Keys stay as one
    # full lane-dense tile (split key tiles must be 128-multiples).
    out = rat_layer_forward(h, relation, params, H, block_q=8)
    out = jax.block_until_ready(out)

    ref = ref_rat_layer(h, relation, params, H)
    assert out.shape == (B, N, D), out.shape
    # Tolerance accommodates bf16 MXU operands (weights / activations / relation);
    # genuine bugs show up as O(1) errors.
    err = float(jnp.max(jnp.abs(out - ref)))
    assert jnp.allclose(out, ref, atol=6e-2, rtol=6e-2), f"max abs err {err}"
    print("KERNEL_OK")
</pallas_src>

<mosaic_0001>
module attributes {stable_mosaic.version = 11 : i64} {
  func.func @_rat_layer_kernel(%arg0: i32, %arg1: i32, %arg2: i32, %arg3: memref<1x16x32xf32, #tpu.memory_space<vmem>>, %arg4: memref<1x8x8x16xbf16, #tpu.memory_space<vmem>>, %arg5: memref<2x32xf32, #tpu.memory_space<vmem>>, %arg6: memref<32x96xbf16, #tpu.memory_space<vmem>>, %arg7: memref<1x96xf32, #tpu.memory_space<vmem>>, %arg8: memref<32x32xbf16, #tpu.memory_space<vmem>>, %arg9: memref<1x32xf32, #tpu.memory_space<vmem>>, %arg10: memref<2x32xf32, #tpu.memory_space<vmem>>, %arg11: memref<32x32xbf16, #tpu.memory_space<vmem>>, %arg12: memref<1x32xf32, #tpu.memory_space<vmem>>, %arg13: memref<32x32xbf16, #tpu.memory_space<vmem>>, %arg14: memref<1x32xf32, #tpu.memory_space<vmem>>, %arg15: memref<1x8x32xf32, #tpu.memory_space<vmem>>, %arg16: memref<16x32xf32, #tpu.memory_space<vmem>>, %arg17: memref<16x32xf32, #tpu.memory_space<vmem>>, %arg18: memref<16x32xf32, #tpu.memory_space<vmem>>, %arg19: memref<8x4xf32, #tpu.memory_space<vmem>>, %arg20: memref<8x4xf32, #tpu.memory_space<vmem>>, %arg21: memref<8x4x8xf32, #tpu.memory_space<vmem>>) attributes {dimension_semantics = [#tpu.dimension_semantics<parallel>, #tpu.dimension_semantics<arbitrary>, #tpu.dimension_semantics<arbitrary>], iteration_bounds = array<i64: 2, 2, 1>, scalar_prefetch = 0 : i64, scratch_operands = 6 : i64, tpu.core_type = #tpu.core_type<tc>, window_params = [{transform_indices = @transform_0, window_bounds = array<i64: 1, 16, 32>}, {transform_indices = @transform_1, window_bounds = array<i64: 1, 8, 8, 16>}, {pipeline_mode = #tpu.pipeline_mode<synchronous>, transform_indices = @transform_2, window_bounds = array<i64: 2, 32>}, {pipeline_mode = #tpu.pipeline_mode<synchronous>, transform_indices = @transform_3, window_bounds = array<i64: 32, 96>}, {pipeline_mode = #tpu.pipeline_mode<synchronous>, transform_indices = @transform_4, window_bounds = array<i64: 1, 96>}, {pipeline_mode = #tpu.pipeline_mode<synchronous>, transform_indices = @transform_5, window_bounds = array<i64: 32, 32>}, {pipeline_mode = #tpu.pipeline_mode<synchronous>, transform_indices = @transform_6, window_bounds = array<i64: 1, 32>}, {pipeline_mode = #tpu.pipeline_mode<synchronous>, transform_indices = @transform_7, window_bounds = array<i64: 2, 32>}, {pipeline_mode = #tpu.pipeline_mode<synchronous>, transform_indices = @transform_8, window_bounds = array<i64: 32, 32>}, {pipeline_mode = #tpu.pipeline_mode<synchronous>, transform_indices = @transform_9, window_bounds = array<i64: 1, 32>}, {pipeline_mode = #tpu.pipeline_mode<synchronous>, transform_indices = @transform_10, window_bounds = array<i64: 32, 32>}, {pipeline_mode = #tpu.pipeline_mode<synchronous>, transform_indices = @transform_11, window_bounds = array<i64: 1, 32>}, {transform_indices = @transform_12, window_bounds = array<i64: 1, 8, 32>}]} {
    %c0_i32 = arith.constant 0 : i32
    %0 = arith.cmpi eq, %arg1, %c0_i32 : i32
    %c0_i32_0 = arith.constant 0 : i32
    %1 = arith.cmpi eq, %arg2, %c0_i32_0 : i32
    %2 = arith.andi %0, %1 : i1
    %3 = arith.extui %2 : i1 to i32
    %c0_i32_1 = arith.constant 0 : i32
    %4 = arith.cmpi ne, %3, %c0_i32_1 : i32
    scf.if %4 {
      %c0_31 = arith.constant 0 : index
      %c0_32 = arith.constant 0 : index
      %c0_33 = arith.constant 0 : index
      %65 = vector.load %arg3[%c0_31, %c0_32, %c0_33] : memref<1x16x32xf32, #tpu.memory_space<vmem>>, vector<1x16x32xf32>
      %66 = vector.shape_cast %65 : vector<1x16x32xf32> to vector<16x32xf32>
      %cst_34 = arith.constant dense<0.000000e+00> : vector<16xf32>
      %67 = vector.multi_reduction <add>, %66, %cst_34 [1] : vector<16x32xf32> to vector<16xf32>
      %68 = vector.shape_cast %67 : vector<16xf32> to vector<16x1xf32>
      %cst_35 = arith.constant 3.200000e+01 : f32
      %69 = vector.broadcast %cst_35 : f32 to vector<16x1xf32>
      %70 = arith.divf %68, %69 : vector<16x1xf32>
      %71 = vector.broadcast %70 : vector<16x1xf32> to vector<16x32xf32>
      %72 = arith.subf %66, %71 : vector<16x32xf32>
      %73 = arith.mulf %72, %72 : vector<16x32xf32>
      %cst_36 = arith.constant dense<0.000000e+00> : vector<16xf32>
      %74 = vector.multi_reduction <add>, %73, %cst_36 [1] : vector<16x32xf32> to vector<16xf32>
      %75 = vector.shape_cast %74 : vector<16xf32> to vector<16x1xf32>
      %cst_37 = arith.constant 3.200000e+01 : f32
      %76 = vector.broadcast %cst_37 : f32 to vector<16x1xf32>
      %77 = arith.divf %75, %76 : vector<16x1xf32>
      %c0_38 = arith.constant 0 : index
      %c0_39 = arith.constant 0 : index
      %78 = vector.load %arg5[%c0_38, %c0_39] : memref<2x32xf32, #tpu.memory_space<vmem>>, vector<2x32xf32>
      %79 = vector.broadcast %70 : vector<16x1xf32> to vector<16x32xf32>
      %80 = arith.subf %66, %79 : vector<16x32xf32>
      %cst_40 = arith.constant 9.99999974E-6 : f32
      %81 = vector.broadcast %cst_40 : f32 to vector<16x1xf32>
      %82 = arith.addf %77, %81 : vector<16x1xf32>
      %83 = math.rsqrt %82 : vector<16x1xf32>
      %84 = vector.broadcast %83 : vector<16x1xf32> to vector<16x32xf32>
      %85 = arith.mulf %80, %84 : vector<16x32xf32>
      %86 = vector.extract_strided_slice %78 {offsets = [0, 0], sizes = [1, 32], strides = [1, 1]} : vector<2x32xf32> to vector<1x32xf32>
      %87 = vector.broadcast %86 : vector<1x32xf32> to vector<16x32xf32>
      %88 = arith.mulf %85, %87 : vector<16x32xf32>
      %89 = vector.extract_strided_slice %78 {offsets = [1, 0], sizes = [1, 32], strides = [1, 1]} : vector<2x32xf32> to vector<1x32xf32>
      %90 = vector.broadcast %89 : vector<1x32xf32> to vector<16x32xf32>
      %91 = arith.addf %88, %90 : vector<16x32xf32>
      %92 = arith.truncf %91 : vector<16x32xf32> to vector<16x32xbf16>
      %c0_41 = arith.constant 0 : index
      %c0_42 = arith.constant 0 : index
      %93 = vector.load %arg6[%c0_41, %c0_42] : memref<32x96xbf16, #tpu.memory_space<vmem>>, vector<32x96xbf16>
      %cst_43 = arith.constant dense<0.000000e+00> : vector<16x96xf32>
      %94 = tpu.matmul %92, %93, %cst_43 {dimension_numbers = #tpu.dot_dimension_numbers<[1], [0], [0], [1], [0, 0, 1, 1], [], []>} : vector<16x32xbf16>, vector<32x96xbf16>, vector<16x96xf32> -> vector<16x96xf32>
      %c0_44 = arith.constant 0 : index
      %c0_45 = arith.constant 0 : index
      %95 = vector.load %arg7[%c0_44, %c0_45] : memref<1x96xf32, #tpu.memory_space<vmem>>, vector<1x96xf32>
      %96 = vector.broadcast %95 : vector<1x96xf32> to vector<16x96xf32>
      %97 = arith.addf %94, %96 : vector<16x96xf32>
      %98 = vector.extract_strided_slice %97 {offsets = [0, 0], sizes = [16, 32], strides = [1, 1]} : vector<16x96xf32> to vector<16x32xf32>
      %c0_46 = arith.constant 0 : index
      %c0_47 = arith.constant 0 : index
      %99 = vector.load %arg16[%c0_46, %c0_47] : memref<16x32xf32, #tpu.memory_space<vmem>>, vector<16x32xf32>
      tpu.vector_store %arg16[%c0_46, %c0_47], %98 {strides = array<i32>} : memref<16x32xf32, #tpu.memory_space<vmem>>, vector<16x32xf32>,
      %100 = vector.extract_strided_slice %97 {offsets = [0, 32], sizes = [16, 32], strides = [1, 1]} : vector<16x96xf32> to vector<16x32xf32>
      %cst_48 = arith.constant 0.353553385 : f32
      %101 = vector.broadcast %cst_48 : f32 to vector<16x32xf32>
      %102 = arith.mulf %100, %101 : vector<16x32xf32>
      %c0_49 = arith.constant 0 : index
      %c0_50 = arith.constant 0 : index
      %103 = vector.load %arg17[%c0_49, %c0_50] : memref<16x32xf32, #tpu.memory_space<vmem>>, vector<16x32xf32>
      tpu.vector_store %arg17[%c0_49, %c0_50], %102 {strides = array<i32>} : memref<16x32xf32, #tpu.memory_space<vmem>>, vector<16x32xf32>,
      %104 = vector.extract_strided_slice %97 {offsets = [0, 64], sizes = [16, 32], strides = [1, 1]} : vector<16x96xf32> to vector<16x32xf32>
      %c0_51 = arith.constant 0 : index
      %c0_52 = arith.constant 0 : index
      %105 = vector.load %arg18[%c0_51, %c0_52] : memref<16x32xf32, #tpu.memory_space<vmem>>, vector<16x32xf32>
      tpu.vector_store %arg18[%c0_51, %c0_52], %104 {strides = array<i32>} : memref<16x32xf32, #tpu.memory_space<vmem>>, vector<16x32xf32>,
    } else {
    }
    %c0_i32_2 = arith.constant 0 : i32
    %5 = arith.cmpi eq, %arg2, %c0_i32_2 : i32
    %6 = arith.extui %5 : i1 to i32
    %c0_i32_3 = arith.constant 0 : i32
    %7 = arith.cmpi ne, %6, %c0_i32_3 : i32
    scf.if %7 {
      %cst_31 = arith.constant 0xFF800000 : f32
      %65 = vector.broadcast %cst_31 : f32 to vector<8x4xf32>
      %c0_32 = arith.constant 0 : index
      %c0_33 = arith.constant 0 : index
      %66 = vector.load %arg19[%c0_32, %c0_33] : memref<8x4xf32, #tpu.memory_space<vmem>>, vector<8x4xf32>
      tpu.vector_store %arg19[%c0_32, %c0_33], %65 {strides = array<i32>} : memref<8x4xf32, #tpu.memory_space<vmem>>, vector<8x4xf32>,
      %cst_34 = arith.constant 0.000000e+00 : f32
      %67 = vector.broadcast %cst_34 : f32 to vector<8x4xf32>
      %c0_35 = arith.constant 0 : index
      %c0_36 = arith.constant 0 : index
      %68 = vector.load %arg20[%c0_35, %c0_36] : memref<8x4xf32, #tpu.memory_space<vmem>>, vector<8x4xf32>
      tpu.vector_store %arg20[%c0_35, %c0_36], %67 {strides = array<i32>} : memref<8x4xf32, #tpu.memory_space<vmem>>, vector<8x4xf32>,
      %cst_37 = arith.constant 0.000000e+00 : f32
      %69 = vector.broadcast %cst_37 : f32 to vector<8x4x8xf32>
      %c0_38 = arith.constant 0 : index
      %c0_39 = arith.constant 0 : index
      %c0_40 = arith.constant 0 : index
      %70 = vector.load %arg21[%c0_38, %c0_39, %c0_40] : memref<8x4x8xf32, #tpu.memory_space<vmem>>, vector<8x4x8xf32>
      tpu.vector_store %arg21[%c0_38, %c0_39, %c0_40], %69 {strides = array<i32>} : memref<8x4x8xf32, #tpu.memory_space<vmem>>, vector<8x4x8xf32>,
    } else {
    }
    %c8_i32 = arith.constant 8 : i32
    %8 = arith.muli %arg1, %c8_i32 : i32
    %9 = tpu.assume_multiple %8, 8 : i32
    %c16_i32 = arith.constant 16 : i32
    %10 = arith.muli %arg2, %c16_i32 : i32
    %11 = tpu.assume_multiple %10, 8 : i32
    %12 = arith.index_cast %9 : i32 to index
    %c0 = arith.constant 0 : index
    %13 = vector.load %arg16[%12, %c0] : memref<16x32xf32, #tpu.memory_space<vmem>>, vector<8x32xf32>
    %14 = arith.index_cast %11 : i32 to index
    %c0_4 = arith.constant 0 : index
    %15 = vector.load %arg17[%14, %c0_4] : memref<16x32xf32, #tpu.memory_space<vmem>>, vector<16x32xf32>
    %16 = arith.index_cast %11 : i32 to index
    %c0_5 = arith.constant 0 : index
    %17 = vector.load %arg18[%16, %c0_5] : memref<16x32xf32, #tpu.memory_space<vmem>>, vector<16x32xf32>
    %c0_6 = arith.constant 0 : index
    %c0_7 = arith.constant 0 : index
    %c0_8 = arith.constant 0 : index
    %c0_9 = arith.constant 0 : index
    %18 = vector.load %arg4[%c0_6, %c0_7, %c0_8, %c0_9] : memref<1x8x8x16xbf16, #tpu.memory_space<vmem>>, vector<1x8x8x16xbf16>
    %19 = vector.shape_cast %18 : vector<1x8x8x16xbf16> to vector<8x8x16xbf16>
    %20 = vector.shape_cast %13 : vector<8x32xf32> to vector<8x4x8xf32>
    %21 = arith.truncf %20 : vector<8x4x8xf32> to vector<8x4x8xbf16>
    %22 = tpu.transpose %20, [1, 0, 2] : vector<8x4x8xf32> -> vector<4x8x8xf32>
    %23 = arith.truncf %22 : vector<4x8x8xf32> to vector<4x8x8xbf16>
    %24 = vector.shape_cast %15 : vector<16x32xf32> to vector<16x4x8xf32>
    %25 = tpu.transpose %24, [1, 0, 2] : vector<16x4x8xf32> -> vector<4x16x8xf32>
    %26 = arith.truncf %25 : vector<4x16x8xf32> to vector<4x16x8xbf16>
    %27 = vector.shape_cast %17 : vector<16x32xf32> to vector<16x4x8xf32>
    %28 = tpu.transpose %27, [1, 0, 2] : vector<16x4x8xf32> -> vector<4x16x8xf32>
    %29 = arith.truncf %28 : vector<4x16x8xf32> to vector<4x16x8xbf16>
    %cst = arith.constant dense<0.000000e+00> : vector<4x8x16xf32>
    %30 = tpu.matmul %23, %26, %cst {dimension_numbers = #tpu.dot_dimension_numbers<[2], [2], [1], [1], [0, 0, 0, 1, 1, 1], [0], [0]>} : vector<4x8x8xbf16>, vector<4x16x8xbf16>, vector<4x8x16xf32> -> vector<4x8x16xf32>
    %cst_10 = arith.constant dense<0.000000e+00> : vector<8x4x16xf32>
    %31 = tpu.matmul %21, %19, %cst_10 {dimension_numbers = #tpu.dot_dimension_numbers<[2], [1], [1], [2], [0, 0, 0, 1, 1, 2], [0], [0]>} : vector<8x4x8xbf16>, vector<8x8x16xbf16>, vector<8x4x16xf32> -> vector<8x4x16xf32>
    %32 = tpu.transpose %30, [1, 0, 2] : vector<4x8x16xf32> -> vector<8x4x16xf32>
    %33 = arith.addf %31, %32 : vector<8x4x16xf32>
    %c0_11 = arith.constant 0 : index
    %c0_12 = arith.constant 0 : index
    %34 = vector.load %arg19[%c0_11, %c0_12] : memref<8x4xf32, #tpu.memory_space<vmem>>, vector<8x4xf32>
    %cst_13 = arith.constant dense<0xFF800000> : vector<8x4xf32>
    %35 = vector.multi_reduction <maximumf>, %33, %cst_13 [2] : vector<8x4x16xf32> to vector<8x4xf32>
    %36 = arith.maximumf %34, %35 : vector<8x4xf32>
    %37 = arith.subf %34, %36 : vector<8x4xf32>
    %38 = math.exp %37 : vector<8x4xf32>
    %39 = vector.shape_cast %36 : vector<8x4xf32> to vector<8x4x1xf32>
    %40 = vector.broadcast %39 : vector<8x4x1xf32> to vector<8x4x16xf32>
    %41 = arith.subf %33, %40 : vector<8x4x16xf32>
    %42 = math.exp %41 : vector<8x4x16xf32>
    %c0_14 = arith.constant 0 : index
    %c0_15 = arith.constant 0 : index
    %43 = vector.load %arg20[%c0_14, %c0_15] : memref<8x4xf32, #tpu.memory_space<vmem>>, vector<8x4xf32>
    %44 = arith.mulf %38, %43 : vector<8x4xf32>
    %cst_16 = arith.constant dense<0.000000e+00> : vector<8x4xf32>
    %45 = vector.multi_reduction <add>, %42, %cst_16 [2] : vector<8x4x16xf32> to vector<8x4xf32>
    %46 = arith.addf %44, %45 : vector<8x4xf32>
    %c0_17 = arith.constant 0 : index
    %c0_18 = arith.constant 0 : index
    %47 = vector.load %arg20[%c0_17, %c0_18] : memref<8x4xf32, #tpu.memory_space<vmem>>, vector<8x4xf32>
    tpu.vector_store %arg20[%c0_17, %c0_18], %46 {strides = array<i32>} : memref<8x4xf32, #tpu.memory_space<vmem>>, vector<8x4xf32>,
    %c0_19 = arith.constant 0 : index
    %c0_20 = arith.constant 0 : index
    %48 = vector.load %arg19[%c0_19, %c0_20] : memref<8x4xf32, #tpu.memory_space<vmem>>, vector<8x4xf32>
    tpu.vector_store %arg19[%c0_19, %c0_20], %36 {strides = array<i32>} : memref<8x4xf32, #tpu.memory_space<vmem>>, vector<8x4xf32>,
    %49 = arith.truncf %42 : vector<8x4x16xf32> to vector<8x4x16xbf16>
    %50 = tpu.transpose %42, [1, 0, 2] : vector<8x4x16xf32> -> vector<4x8x16xf32>
    %51 = arith.truncf %50 : vector<4x8x16xf32> to vector<4x8x16xbf16>
    %cst_21 = arith.constant dense<0.000000e+00> : vector<4x8x8xf32>
    %52 = tpu.matmul %51, %29, %cst_21 {dimension_numbers = #tpu.dot_dimension_numbers<[2], [1], [1], [2], [0, 0, 0, 1, 1, 2], [0], [0]>} : vector<4x8x16xbf16>, vector<4x16x8xbf16>, vector<4x8x8xf32> -> vector<4x8x8xf32>
    %cst_22 = arith.constant dense<0.000000e+00> : vector<8x4x8xf32>
    %53 = tpu.matmul %49, %19, %cst_22 {dimension_numbers = #tpu.dot_dimension_numbers<[2], [2], [1], [1], [0, 0, 0, 1, 1, 1], [0], [0]>} : vector<8x4x16xbf16>, vector<8x8x16xbf16>, vector<8x4x8xf32> -> vector<8x4x8xf32>
    %54 = vector.shape_cast %38 : vector<8x4xf32> to vector<8x4x1xf32>
    %c0_23 = arith.constant 0 : index
    %c0_24 = arith.constant 0 : index
    %c0_25 = arith.constant 0 : index
    %55 = vector.load %arg21[%c0_23, %c0_24, %c0_25] : memref<8x4x8xf32, #tpu.memory_space<vmem>>, vector<8x4x8xf32>
    %56 = vector.broadcast %54 : vector<8x4x1xf32> to vector<8x4x8xf32>
    %57 = arith.mulf %56, %55 : vector<8x4x8xf32>
    %58 = arith.addf %57, %53 : vector<8x4x8xf32>
    %59 = tpu.transpose %52, [1, 0, 2] : vector<4x8x8xf32> -> vector<8x4x8xf32>
    %60 = arith.addf %58, %59 : vector<8x4x8xf32>
    %c0_26 = arith.constant 0 : index
    %c0_27 = arith.constant 0 : index
    %c0_28 = arith.constant 0 : index
    %61 = vector.load %arg21[%c0_26, %c0_27, %c0_28] : memref<8x4x8xf32, #tpu.memory_space<vmem>>, vector<8x4x8xf32>
    tpu.vector_store %arg21[%c0_26, %c0_27, %c0_28], %60 {strides = array<i32>} : memref<8x4x8xf32, #tpu.memory_space<vmem>>, vector<8x4x8xf32>,
    %c0_i32_29 = arith.constant 0 : i32
    %62 = arith.cmpi eq, %arg2, %c0_i32_29 : i32
    %63 = arith.extui %62 : i1 to i32
    %c0_i32_30 = arith.constant 0 : i32
    %64 = arith.cmpi ne, %63, %c0_i32_30 : i32
    scf.if %64 {
      %c0_31 = arith.constant 0 : index
      %c0_32 = arith.constant 0 : index
      %65 = vector.load %arg20[%c0_31, %c0_32] : memref<8x4xf32, #tpu.memory_space<vmem>>, vector<8x4xf32>
      %cst_33 = arith.constant 1.000000e+00 : f32
      %66 = vector.broadcast %cst_33 : f32 to vector<8x4xf32>
      %67 = arith.divf %66, %65 : vector<8x4xf32>
      %c0_34 = arith.constant 0 : index
      %c0_35 = arith.constant 0 : index
      %c0_36 = arith.constant 0 : index
      %68 = vector.load %arg21[%c0_34, %c0_35, %c0_36] : memref<8x4x8xf32, #tpu.memory_space<vmem>>, vector<8x4x8xf32>
      %69 = vector.shape_cast %67 : vector<8x4xf32> to vector<8x4x1xf32>
      %70 = vector.broadcast %69 : vector<8x4x1xf32> to vector<8x4x8xf32>
      %71 = arith.mulf %68, %70 : vector<8x4x8xf32>
      %72 = vector.shape_cast %71 : vector<8x4x8xf32> to vector<8x32xf32>
      %73 = arith.truncf %72 : vector<8x32xf32> to vector<8x32xbf16>
      %c0_37 = arith.constant 0 : index
      %c0_38 = arith.constant 0 : index
      %74 = vector.load %arg8[%c0_37, %c0_38] : memref<32x32xbf16, #tpu.memory_space<vmem>>, vector<32x32xbf16>
      %cst_39 = arith.constant dense<0.000000e+00> : vector<8x32xf32>
      %75 = tpu.matmul %73, %74, %cst_39 {dimension_numbers = #tpu.dot_dimension_numbers<[1], [0], [0], [1], [0, 0, 1, 1], [], []>} : vector<8x32xbf16>, vector<32x32xbf16>, vector<8x32xf32> -> vector<8x32xf32>
      %c0_40 = arith.constant 0 : index
      %c0_41 = arith.constant 0 : index
      %76 = vector.load %arg9[%c0_40, %c0_41] : memref<1x32xf32, #tpu.memory_space<vmem>>, vector<1x32xf32>
      %77 = vector.broadcast %76 : vector<1x32xf32> to vector<8x32xf32>
      %78 = arith.addf %75, %77 : vector<8x32xf32>
      %c0_42 = arith.constant 0 : index
      %79 = arith.index_cast %9 : i32 to index
      %c0_43 = arith.constant 0 : index
      %80 = vector.load %arg3[%c0_42, %79, %c0_43] : memref<1x16x32xf32, #tpu.memory_space<vmem>>, vector<1x8x32xf32>
      %81 = vector.shape_cast %80 : vector<1x8x32xf32> to vector<8x32xf32>
      %82 = arith.addf %78, %81 : vector<8x32xf32>
      %cst_44 = arith.constant dense<0.000000e+00> : vector<8xf32>
      %83 = vector.multi_reduction <add>, %82, %cst_44 [1] : vector<8x32xf32> to vector<8xf32>
      %84 = vector.shape_cast %83 : vector<8xf32> to vector<8x1xf32>
      %cst_45 = arith.constant 3.200000e+01 : f32
      %85 = vector.broadcast %cst_45 : f32 to vector<8x1xf32>
      %86 = arith.divf %84, %85 : vector<8x1xf32>
      %87 = vector.broadcast %86 : vector<8x1xf32> to vector<8x32xf32>
      %88 = arith.subf %82, %87 : vector<8x32xf32>
      %89 = arith.mulf %88, %88 : vector<8x32xf32>
      %cst_46 = arith.constant dense<0.000000e+00> : vector<8xf32>
      %90 = vector.multi_reduction <add>, %89, %cst_46 [1] : vector<8x32xf32> to vector<8xf32>
      %91 = vector.shape_cast %90 : vector<8xf32> to vector<8x1xf32>
      %cst_47 = arith.constant 3.200000e+01 : f32
      %92 = vector.broadcast %cst_47 : f32 to vector<8x1xf32>
      %93 = arith.divf %91, %92 : vector<8x1xf32>
      %c0_48 = arith.constant 0 : index
      %c0_49 = arith.constant 0 : index
      %94 = vector.load %arg10[%c0_48, %c0_49] : memref<2x32xf32, #tpu.memory_space<vmem>>, vector<2x32xf32>
      %95 = vector.broadcast %86 : vector<8x1xf32> to vector<8x32xf32>
      %96 = arith.subf %82, %95 : vector<8x32xf32>
      %cst_50 = arith.constant 9.99999974E-6 : f32
      %97 = vector.broadcast %cst_50 : f32 to vector<8x1xf32>
      %98 = arith.addf %93, %97 : vector<8x1xf32>
      %99 = math.rsqrt %98 : vector<8x1xf32>
      %100 = vector.broadcast %99 : vector<8x1xf32> to vector<8x32xf32>
      %101 = arith.mulf %96, %100 : vector<8x32xf32>
      %102 = vector.extract_strided_slice %94 {offsets = [0, 0], sizes = [1, 32], strides = [1, 1]} : vector<2x32xf32> to vector<1x32xf32>
      %103 = vector.broadcast %102 : vector<1x32xf32> to vector<8x32xf32>
      %104 = arith.mulf %101, %103 : vector<8x32xf32>
      %105 = vector.extract_strided_slice %94 {offsets = [1, 0], sizes = [1, 32], strides = [1, 1]} : vector<2x32xf32> to vector<1x32xf32>
      %106 = vector.broadcast %105 : vector<1x32xf32> to vector<8x32xf32>
      %107 = arith.addf %104, %106 : vector<8x32xf32>
      %108 = arith.truncf %107 : vector<8x32xf32> to vector<8x32xbf16>
      %c0_51 = arith.constant 0 : index
      %c0_52 = arith.constant 0 : index
      %109 = vector.load %arg11[%c0_51, %c0_52] : memref<32x32xbf16, #tpu.memory_space<vmem>>, vector<32x32xbf16>
      %cst_53 = arith.constant dense<0.000000e+00> : vector<8x32xf32>
      %110 = tpu.matmul %108, %109, %cst_53 {dimension_numbers = #tpu.dot_dimension_numbers<[1], [0], [0], [1], [0, 0, 1, 1], [], []>} : vector<8x32xbf16>, vector<32x32xbf16>, vector<8x32xf32> -> vector<8x32xf32>
      %c0_54 = arith.constant 0 : index
      %c0_55 = arith.constant 0 : index
      %111 = vector.load %arg12[%c0_54, %c0_55] : memref<1x32xf32, #tpu.memory_space<vmem>>, vector<1x32xf32>
      %112 = vector.broadcast %111 : vector<1x32xf32> to vector<8x32xf32>
      %113 = arith.addf %110, %112 : vector<8x32xf32>
      %cst_56 = arith.constant 0.000000e+00 : f32
      %114 = vector.broadcast %cst_56 : f32 to vector<8x32xf32>
      %115 = arith.maximumf %113, %114 : vector<8x32xf32>
      %116 = arith.truncf %115 : vector<8x32xf32> to vector<8x32xbf16>
      %c0_57 = arith.constant 0 : index
      %c0_58 = arith.constant 0 : index
      %117 = vector.load %arg13[%c0_57, %c0_58] : memref<32x32xbf16, #tpu.memory_space<vmem>>, vector<32x32xbf16>
      %cst_59 = arith.constant dense<0.000000e+00> : vector<8x32xf32>
      %118 = tpu.matmul %116, %117, %cst_59 {dimension_numbers = #tpu.dot_dimension_numbers<[1], [0], [0], [1], [0, 0, 1, 1], [], []>} : vector<8x32xbf16>, vector<32x32xbf16>, vector<8x32xf32> -> vector<8x32xf32>
      %c0_60 = arith.constant 0 : index
      %c0_61 = arith.constant 0 : index
      %119 = vector.load %arg14[%c0_60, %c0_61] : memref<1x32xf32, #tpu.memory_space<vmem>>, vector<1x32xf32>
      %120 = vector.broadcast %119 : vector<1x32xf32> to vector<8x32xf32>
      %121 = arith.addf %118, %120 : vector<8x32xf32>
      %122 = arith.addf %121, %82 : vector<8x32xf32>
      %c0_62 = arith.constant 0 : index
      %c0_63 = arith.constant 0 : index
      %c0_64 = arith.constant 0 : index
      %123 = vector.load %arg15[%c0_62, %c0_63, %c0_64] : memref<1x8x32xf32, #tpu.memory_space<vmem>>, vector<1x8x32xf32>
      %124 = vector.shape_cast %123 : vector<1x8x32xf32> to vector<8x32xf32>
      %125 = vector.shape_cast %122 : vector<8x32xf32> to vector<1x8x32xf32>
      tpu.vector_store %arg15[%c0_62, %c0_63, %c0_64], %125 {strides = array<i32>} : memref<1x8x32xf32, #tpu.memory_space<vmem>>, vector<1x8x32xf32>,
    } else {
    }
    return
  }
  func.func @transform_0(%arg0: i32, %arg1: i32, %arg2: i32) -> (i32, i32, i32) {
    %c0_i32 = arith.constant 0 : i32
    %c0_i32_0 = arith.constant 0 : i32
    %c0_i32_1 = arith.constant 0 : i32
    return %arg0, %c0_i32, %c0_i32_0 : i32, i32, i32
  }
  func.func @transform_1(%arg0: i32, %arg1: i32, %arg2: i32) -> (i32, i32, i32, i32) {
    %c0_i32 = arith.constant 0 : i32
    %c0_i32_0 = arith.constant 0 : i32
    return %arg0, %arg1, %c0_i32, %arg2 : i32, i32, i32, i32
  }
  func.func @transform_2(%arg0: i32, %arg1: i32, %arg2: i32) -> (i32, i32) {
    %c0_i32 = arith.constant 0 : i32
    %c0_i32_0 = arith.constant 0 : i32
    %c0_i32_1 = arith.constant 0 : i32
    return %c0_i32, %c0_i32_0 : i32, i32
  }
  func.func @transform_3(%arg0: i32, %arg1: i32, %arg2: i32) -> (i32, i32) {
    %c0_i32 = arith.constant 0 : i32
    %c0_i32_0 = arith.constant 0 : i32
    %c0_i32_1 = arith.constant 0 : i32
    return %c0_i32, %c0_i32_0 : i32, i32
  }
  func.func @transform_4(%arg0: i32, %arg1: i32, %arg2: i32) -> (i32, i32) {
    %c0_i32 = arith.constant 0 : i32
    %c0_i32_0 = arith.constant 0 : i32
    %c0_i32_1 = arith.constant 0 : i32
    return %c0_i32, %c0_i32_0 : i32, i32
  }
  func.func @transform_5(%arg0: i32, %arg1: i32, %arg2: i32) -> (i32, i32) {
    %c0_i32 = arith.constant 0 : i32
    %c0_i32_0 = arith.constant 0 : i32
    %c0_i32_1 = arith.constant 0 : i32
    return %c0_i32, %c0_i32_0 : i32, i32
  }
  func.func @transform_6(%arg0: i32, %arg1: i32, %arg2: i32) -> (i32, i32) {
    %c0_i32 = arith.constant 0 : i32
    %c0_i32_0 = arith.constant 0 : i32
    %c0_i32_1 = arith.constant 0 : i32
    return %c0_i32, %c0_i32_0 : i32, i32
  }
  func.func @transform_7(%arg0: i32, %arg1: i32, %arg2: i32) -> (i32, i32) {
    %c0_i32 = arith.constant 0 : i32
    %c0_i32_0 = arith.constant 0 : i32
    %c0_i32_1 = arith.constant 0 : i32
    return %c0_i32, %c0_i32_0 : i32, i32
  }
  func.func @transform_8(%arg0: i32, %arg1: i32, %arg2: i32) -> (i32, i32) {
    %c0_i32 = arith.constant 0 : i32
    %c0_i32_0 = arith.constant 0 : i32
    %c0_i32_1 = arith.constant 0 : i32
    return %c0_i32, %c0_i32_0 : i32, i32
  }
  func.func @transform_9(%arg0: i32, %arg1: i32, %arg2: i32) -> (i32, i32) {
    %c0_i32 = arith.constant 0 : i32
    %c0_i32_0 = arith.constant 0 : i32
    %c0_i32_1 = arith.constant 0 : i32
    return %c0_i32, %c0_i32_0 : i32, i32
  }
  func.func @transform_10(%arg0: i32, %arg1: i32, %arg2: i32) -> (i32, i32) {
    %c0_i32 = arith.constant 0 : i32
    %c0_i32_0 = arith.constant 0 : i32
    %c0_i32_1 = arith.constant 0 : i32
    return %c0_i32, %c0_i32_0 : i32, i32
  }
  func.func @transform_11(%arg0: i32, %arg1: i32, %arg2: i32) -> (i32, i32) {
    %c0_i32 = arith.constant 0 : i32
    %c0_i32_0 = arith.constant 0 : i32
    %c0_i32_1 = arith.constant 0 : i32
    return %c0_i32, %c0_i32_0 : i32, i32
  }
  func.func @transform_12(%arg0: i32, %arg1: i32, %arg2: i32) -> (i32, i32, i32) {
    %c0_i32 = arith.constant 0 : i32
    %c0_i32_0 = arith.constant 0 : i32
    return %arg0, %arg1, %c0_i32 : i32, i32, i32
  }
}

</mosaic_0001>

<llo_original>
// kernel: tpu_custom_call.1
$region0: #{tpu_custom_call.1}
  #allocation0 [shape = 'u32[]', space=smem, size = 0x4, offset = 0x4, fixed_abs, tag = 'smem constant byte address 0x4 - core index']
  #allocation1 [shape = 'u32[144,128]{1,0:T(1,128)}', space=vmem, size = 0x12000, scoped, tag = 'internal scratch']
  #allocation2 [shape = 'f32[16,32]{1,0:T(8,128)}', space=vmem, size = 0x2000, scoped, tag = 'scratch operand']
  #allocation3 [shape = 'f32[16,32]{1,0:T(8,128)}', space=vmem, size = 0x2000, scoped, tag = 'scratch operand']
  #allocation4 [shape = 'f32[16,32]{1,0:T(8,128)}', space=vmem, size = 0x2000, scoped, tag = 'scratch operand']
  #allocation5 [shape = 'f32[8,4]{1,0:T(8,128)}', space=vmem, size = 0x1000, scoped, tag = 'scratch operand']
  #allocation6 [shape = 'f32[8,4]{1,0:T(8,128)}', space=vmem, size = 0x1000, scoped, tag = 'scratch operand']
  #allocation7 [shape = 'f32[8,4,8]{2,1,0:T(4,128)}', space=vmem, size = 0x4000, scoped, tag = 'scratch operand']
  %s0 = inlined_call_operand.hbm [shape: f32[2,16,32], index: 0, kind: input, shape index: {}]
  %s1 = inlined_call_operand.hbm [shape: bf16[2,16,8,16], index: 1, kind: input, shape index: {}]
  %s2 = inlined_call_operand.vmem [shape: f32[2,32], index: 2, kind: input, shape index: {}]
  %s3 = inlined_call_operand.hbm [shape: bf16[32,96], index: 3, kind: input, shape index: {}]
  %s4 = inlined_call_operand.hbm [shape: f32[1,96], index: 4, kind: input, shape index: {}]
  %s5 = inlined_call_operand.hbm [shape: bf16[32,32], index: 5, kind: input, shape index: {}]
  %s6 = inlined_call_operand.hbm [shape: f32[1,32], index: 6, kind: input, shape index: {}]
  %s7 = inlined_call_operand.hbm [shape: f32[2,32], index: 7, kind: input, shape index: {}]
  %s8 = inlined_call_operand.hbm [shape: bf16[32,32], index: 8, kind: input, shape index: {}]
  %s9 = inlined_call_operand.hbm [shape: f32[1,32], index: 9, kind: input, shape index: {}]
  %s10 = inlined_call_operand.vmem [shape: bf16[32,32], index: 10, kind: input, shape index: {}]
  %s11 = inlined_call_operand.vmem [shape: f32[1,32], index: 11, kind: input, shape index: {}]
  %s12 = inlined_call_operand.hbm [shape: f32[2,16,32], index: 12, kind: output, shape index: {}]
  %s13 = sld [smem:[#allocation0]]
  $region129: #{tpu_custom_call.1} parent=0
    _
  %s15 = ssub.s32 1, %s13
  %s16 = scalar_select 0, %s15, %s13
  $region1: #{tpu_custom_call.1} parent=0
    #allocation8 [shape = 'u8[16384]{0}', space=vmem, size = 0x4000, scoped, tag = 'input window, operand 0']
    #allocation9 [shape = 's32[2]{0}', space=sflag, size = 0x8, scoped, tag = 'scoped memory for tpu_custom_call.1']
    #allocation10 [shape = 's32[2]{0}', space=sflag, size = 0x8, scoped, tag = 'scoped memory for tpu_custom_call.1']
    #allocation11 [shape = 'u8[32768]{0}', space=vmem, size = 0x8000, scoped, tag = 'input window, operand 1']
    #allocation12 [shape = 's32[2]{0}', space=sflag, size = 0x8, scoped, tag = 'scoped memory for tpu_custom_call.1']
    #allocation13 [shape = 'u8[8192]{0}', space=vmem, size = 0x2000, scoped, tag = 'input window, operand 3, single buffered']
    #allocation14 [shape = 'u8[512]{0}', space=vmem, size = 0x400, scoped, tag = 'input window, operand 4, single buffered']
    #allocation15 [shape = 's32[1]{0}', space=sflag, size = 0x4, scoped, tag = 'scoped memory for tpu_custom_call.1']
    #allocation16 [shape = 'u8[8192]{0}', space=vmem, size = 0x2000, scoped, tag = 'input window, operand 5, single buffered']
    #allocation17 [shape = 'u8[512]{0}', space=vmem, size = 0x400, scoped, tag = 'input window, operand 6, single buffered']
    #allocation18 [shape = 's32[1]{0}', space=sflag, size = 0x4, scoped, tag = 'scoped memory for tpu_custom_call.1']
    #allocation19 [shape = 'u8[1024]{0}', space=vmem, size = 0x400, scoped, tag = 'input window, operand 7, single buffered']
    #allocation20 [shape = 'u8[8192]{0}', space=vmem, size = 0x2000, scoped, tag = 'input window, operand 8, single buffered']
    #allocation21 [shape = 's32[1]{0}', space=sflag, size = 0x4, scoped, tag = 'scoped memory for tpu_custom_call.1']
    #allocation22 [shape = 'u8[512]{0}', space=vmem, size = 0x400, scoped, tag = 'input window, operand 9, single buffered']
    #allocation23 [shape = 'u8[8192]{0}', space=vmem, size = 0x2000, scoped, tag = 'output window, operand 0']
    %17 = vsyncpa [#allocation9], 0
    %s18 = scalar_lea.sflag [#allocation9], 1
    %19 = vsyncpa %s18, 0
    %20 = vsyncpa [#allocation12], 0
    %s21 = scalar_lea.sflag [#allocation12], 1
    %22 = vsyncpa %s21, 0
    %23 = vsyncpa [#allocation15], 0
    %24 = vsyncpa [#allocation18], 0
    %25 = vsyncpa [#allocation21], 0
    %26 = vsyncpa [#allocation10], 0
    %s27 = scalar_lea.sflag [#allocation10], 1
    %28 = vsyncpa %s27, 0
    loop: start=0, step=1, limit=6
    $region2: #{tpu_custom_call.1} parent=1 // loop_pre_header
      _
    $region3: #{tpu_custom_call.1} parent=1 // loop_header
      %s30 = sphi 0, %s34
      %p31 = scmp.ge.s32.totalorder %s30, 6
      %s37 = sphi 0, %s56
      %s38 = sphi 0, %s52
      %s39 = sphi 0, %s48
      %s40 = sphi 0, %s37
      %s41 = sphi 0, %s38
      %s42 = sphi 0, %s39
      %s43 = sphi 0, %s40
      %s44 = sphi 0, %s41
      %s45 = sphi 0, %s42
      %s59 = sphi 0, %s61
      %s62 = sphi 0, %s59
      %s63 = sphi 0, %s62
      %s79 = sphi 0, %s63
      %s89 = sphi 0, %s91
      %s92 = sphi 0, %s89
      %s93 = sphi 0, %s92
      %s109 = sphi 0, %s93
      %s113 = sphi 0, %s113
      %s115 = sphi 0, %s113
      %s116 = sphi 0, %s115
      %s130 = sphi 0, %s116
      %s134 = sphi 0, %s134
      %s136 = sphi 0, %s134
      %s137 = sphi 0, %s136
      %s151 = sphi 0, %s137
      %s155 = sphi 0, %s155
      %s157 = sphi 0, %s155
      %s158 = sphi 0, %s157
      %s172 = sphi 0, %s158
      %s176 = sphi 0, %s176
      %s178 = sphi 0, %s176
      %s179 = sphi 0, %s178
      %s193 = sphi 0, %s179
      %s197 = sphi 0, %s197
      %s199 = sphi 0, %s197
      %s200 = sphi 0, %s199
      %s214 = sphi 0, %s200
      %s218 = sphi 0, %s218
      %s220 = sphi 0, %s218
      %s221 = sphi 0, %s220
      %s235 = sphi 0, %s221
      %s239 = sphi 0, %s239
      %s241 = sphi 0, %s239
      %s242 = sphi 0, %s241
      %s256 = sphi 0, %s242
      %s260 = sphi 0, %s260
      %s262 = sphi 0, %s260
      %s263 = sphi 0, %s262
      %s277 = sphi 0, %s263
      %s281 = sphi 0, %s281
      %s283 = sphi 0, %s281
      %s284 = sphi 0, %s283
      %s298 = sphi 0, %s284
      %s302 = sphi 0, %s302
      %s304 = sphi 0, %s302
      %s305 = sphi 0, %s304
      %s319 = sphi 0, %s305
      %s327 = sphi 0, %s329
      %s330 = sphi 0, %s327
      %s331 = sphi 0, %s330
      %s347 = sphi 0, %s331
    $region4: #{tpu_custom_call.1} parent=1 // loop_header_branch
      %33 = sbr.rel (%p31) target = $region8
    $region5: #{tpu_custom_call.1} parent=1 // loop_body
      %s35 = ssub.s32 %s30, 1
      %s36 = ssub.s32 %s30, 2
      %s46 = sadd.s32 1, %s39
      %p47 = scmp.ge.s32.totalorder %s46, 1
      %s48 = scalar_select %p47, 0, %s46
      %s49 = sadd.s32 1, %s38
      %s50 = scalar_select %p47, %s49, %s38
      %p51 = scmp.ge.s32.totalorder %s50, 2
      %s52 = scalar_select %p51, 0, %s50
      %s53 = sadd.s32 1, %s37
      %s54 = scalar_select %p51, %s53, %s37
      %p55 = scmp.ge.s32.totalorder %s54, 2
      %s56 = scalar_select %p55, 0, %s54
      %s57 = ssub.s32 %s37, %s56
      %p58 = scmp.eq.s32.totalorder %s57, 0
      %s60 = sadd.s32 %s59, 1
      %s61 = scalar_select %p58, %s59, %s60
      %p64 = pneg %p58
      %p65 = scmp.eq.s32.totalorder %s30, 3
      %p66 = por %p64, %p65
      %p67 = scmp.ne.s32.totalorder %s59, %s62
      %p68 = scmp.eq.s32.totalorder %s30, 0
      %p69 = por %p67, %p68
      %p70 = scmp.ne.s32.totalorder %s59, %s62
      %p71 = scmp.eq.s32.totalorder %s35, 3
      %p72 = por %p70, %p71
      %p73 = scmp.ne.s32.totalorder %s62, %s63
      %p74 = scmp.eq.s32.totalorder %s35, 0
      %p75 = por %p73, %p74
      %p76 = scmp.ne.s32.totalorder %s62, %s63
      %p77 = scmp.eq.s32.totalorder %s36, 3
      %p78 = por %p76, %p77
      %p80 = scmp.ne.s32.totalorder %s63, %s79
      %p81 = scmp.eq.s32.totalorder %s36, 0
      %p82 = por %p80, %p81
      %s83 = ssub.s32 %s37, %s56
      %s84 = ssub.s32 %s38, %s52
      %s85 = sor.u32 %s83, %s84
      %s86 = ssub.s32 %s39, %s48
      %s87 = sor.u32 %s85, %s86
      %p88 = scmp.eq.s32.totalorder %s87, 0
      %s90 = sadd.s32 %s89, 1
      %s91 = scalar_select %p88, %s89, %s90
      %p94 = pneg %p88
      %p95 = scmp.eq.s32.totalorder %s30, 3
      %p96 = por %p94, %p95
      %p97 = scmp.ne.s32.totalorder %s89, %s92
      %p98 = scmp.eq.s32.totalorder %s30, 0
      %p99 = por %p97, %p98
      %p100 = scmp.ne.s32.totalorder %s89, %s92
      %p101 = scmp.eq.s32.totalorder %s35, 3
      %p102 = por %p100, %p101
      %p103 = scmp.ne.s32.totalorder %s92, %s93
      %p104 = scmp.eq.s32.totalorder %s35, 0
      %p105 = por %p103, %p104
      %p106 = scmp.ne.s32.totalorder %s92, %s93
      %p107 = scmp.eq.s32.totalorder %s36, 3
      %p108 = por %p106, %p107
      %p110 = scmp.ne.s32.totalorder %s93, %s109
      %p111 = scmp.eq.s32.totalorder %s36, 0
      %p112 = por %p110, %p111
      %s114 = sadd.s32 %s113, 1
      %p117 = scmp.eq.s32.totalorder %s30, 3
      %p118 = scmp.ne.s32.totalorder %s113, %s115
      %p119 = scmp.eq.s32.totalorder %s30, 0
      %p120 = por %p118, %p119
      %p121 = scmp.ne.s32.totalorder %s113, %s115
      %p122 = scmp.eq.s32.totalorder %s35, 3
      %p123 = por %p121, %p122
      %p124 = scmp.ne.s32.totalorder %s115, %s116
      %p125 = scmp.eq.s32.totalorder %s35, 0
      %p126 = por %p124, %p125
      %p127 = scmp.ne.s32.totalorder %s115, %s116
      %p128 = scmp.eq.s32.totalorder %s36, 3
      %p129 = por %p127, %p128
      %p131 = scmp.ne.s32.totalorder %s116, %s130
      %p132 = scmp.eq.s32.totalorder %s36, 0
      %p133 = por %p131, %p132
      %s135 = sadd.s32 %s134, 1
      %p138 = scmp.eq.s32.totalorder %s30, 3
      %p139 = scmp.ne.s32.totalorder %s134, %s136
      %p140 = scmp.eq.s32.totalorder %s30, 0
      %p141 = por %p139, %p140
      %p142 = scmp.ne.s32.totalorder %s134, %s136
      %p143 = scmp.eq.s32.totalorder %s35, 3
      %p144 = por %p142, %p143
      %p145 = scmp.ne.s32.totalorder %s136, %s137
      %p146 = scmp.eq.s32.totalorder %s35, 0
      %p147 = por %p145, %p146
      %p148 = scmp.ne.s32.totalorder %s136, %s137
      %p149 = scmp.eq.s32.totalorder %s36, 3
      %p150 = por %p148, %p149
      %p152 = scmp.ne.s32.totalorder %s137, %s151
      %p153 = scmp.eq.s32.totalorder %s36, 0
      %p154 = por %p152, %p153
      %s156 = sadd.s32 %s155, 1
      %p159 = scmp.eq.s32.totalorder %s30, 3
      %p160 = scmp.ne.s32.totalorder %s155, %s157
      %p161 = scmp.eq.s32.totalorder %s30, 0
      %p162 = por %p160, %p161
      %p163 = scmp.ne.s32.totalorder %s155, %s157
      %p164 = scmp.eq.s32.totalorder %s35, 3
      %p165 = por %p163, %p164
      %p166 = scmp.ne.s32.totalorder %s157, %s158
      %p167 = scmp.eq.s32.totalorder %s35, 0
      %p168 = por %p166, %p167
      %p169 = scmp.ne.s32.totalorder %s157, %s158
      %p170 = scmp.eq.s32.totalorder %s36, 3
      %p171 = por %p169, %p170
      %p173 = scmp.ne.s32.totalorder %s158, %s172
      %p174 = scmp.eq.s32.totalorder %s36, 0
      %p175 = por %p173, %p174
      %s177 = sadd.s32 %s176, 1
      %p180 = scmp.eq.s32.totalorder %s30, 3
      %p181 = scmp.ne.s32.totalorder %s176, %s178
      %p182 = scmp.eq.s32.totalorder %s30, 0
      %p183 = por %p181, %p182
      %p184 = scmp.ne.s32.totalorder %s176, %s178
      %p185 = scmp.eq.s32.totalorder %s35, 3
      %p186 = por %p184, %p185
      %p187 = scmp.ne.s32.totalorder %s178, %s179
      %p188 = scmp.eq.s32.totalorder %s35, 0
      %p189 = por %p187, %p188
      %p190 = scmp.ne.s32.totalorder %s178, %s179
      %p191 = scmp.eq.s32.totalorder %s36, 3
      %p192 = por %p190, %p191
      %p194 = scmp.ne.s32.totalorder %s179, %s193
      %p195 = scmp.eq.s32.totalorder %s36, 0
      %p196 = por %p194, %p195
      %s198 = sadd.s32 %s197, 1
      %p201 = scmp.eq.s32.totalorder %s30, 3
      %p202 = scmp.ne.s32.totalorder %s197, %s199
      %p203 = scmp.eq.s32.totalorder %s30, 0
      %p204 = por %p202, %p203
      %p205 = scmp.ne.s32.totalorder %s197, %s199
      %p206 = scmp.eq.s32.totalorder %s35, 3
      %p207 = por %p205, %p206
      %p208 = scmp.ne.s32.totalorder %s199, %s200
      %p209 = scmp.eq.s32.totalorder %s35, 0
      %p210 = por %p208, %p209
      %p211 = scmp.ne.s32.totalorder %s199, %s200
      %p212 = scmp.eq.s32.totalorder %s36, 3
      %p213 = por %p211, %p212
      %p215 = scmp.ne.s32.totalorder %s200, %s214
      %p216 = scmp.eq.s32.totalorder %s36, 0
      %p217 = por %p215, %p216
      %s219 = sadd.s32 %s218, 1
      %p222 = scmp.eq.s32.totalorder %s30, 3
      %p223 = scmp.ne.s32.totalorder %s218, %s220
      %p224 = scmp.eq.s32.totalorder %s30, 0
      %p225 = por %p223, %p224
      %p226 = scmp.ne.s32.totalorder %s218, %s220
      %p227 = scmp.eq.s32.totalorder %s35, 3
      %p228 = por %p226, %p227
      %p229 = scmp.ne.s32.totalorder %s220, %s221
      %p230 = scmp.eq.s32.totalorder %s35, 0
      %p231 = por %p229, %p230
      %p232 = scmp.ne.s32.totalorder %s220, %s221
      %p233 = scmp.eq.s32.totalorder %s36, 3
      %p234 = por %p232, %p233
      %p236 = scmp.ne.s32.totalorder %s221, %s235
      %p237 = scmp.eq.s32.totalorder %s36, 0
      %p238 = por %p236, %p237
      %s240 = sadd.s32 %s239, 1
      %p243 = scmp.eq.s32.totalorder %s30, 3
      %p244 = scmp.ne.s32.totalorder %s239, %s241
      %p245 = scmp.eq.s32.totalorder %s30, 0
      %p246 = por %p244, %p245
      %p247 = scmp.ne.s32.totalorder %s239, %s241
      %p248 = scmp.eq.s32.totalorder %s35, 3
      %p249 = por %p247, %p248
      %p250 = scmp.ne.s32.totalorder %s241, %s242
      %p251 = scmp.eq.s32.totalorder %s35, 0
      %p252 = por %p250, %p251
      %p253 = scmp.ne.s32.totalorder %s241, %s242
      %p254 = scmp.eq.s32.totalorder %s36, 3
      %p255 = por %p253, %p254
      %p257 = scmp.ne.s32.totalorder %s242, %s256
      %p258 = scmp.eq.s32.totalorder %s36, 0
      %p259 = por %p257, %p258
      %s261 = sadd.s32 %s260, 1
      %p264 = scmp.eq.s32.totalorder %s30, 3
      %p265 = scmp.ne.s32.totalorder %s260, %s262
      %p266 = scmp.eq.s32.totalorder %s30, 0
      %p267 = por %p265, %p266
      %p268 = scmp.ne.s32.totalorder %s260, %s262
      %p269 = scmp.eq.s32.totalorder %s35, 3
      %p270 = por %p268, %p269
      %p271 = scmp.ne.s32.totalorder %s262, %s263
      %p272 = scmp.eq.s32.totalorder %s35, 0
      %p273 = por %p271, %p272
      %p274 = scmp.ne.s32.totalorder %s262, %s263
      %p275 = scmp.eq.s32.totalorder %s36, 3
      %p276 = por %p274, %p275
      %p278 = scmp.ne.s32.totalorder %s263, %s277
      %p279 = scmp.eq.s32.totalorder %s36, 0
      %p280 = por %p278, %p279
      %s282 = sadd.s32 %s281, 1
      %p285 = scmp.eq.s32.totalorder %s30, 3
      %p286 = scmp.ne.s32.totalorder %s281, %s283
      %p287 = scmp.eq.s32.totalorder %s30, 0
      %p288 = por %p286, %p287
      %p289 = scmp.ne.s32.totalorder %s281, %s283
      %p290 = scmp.eq.s32.totalorder %s35, 3
      %p291 = por %p289, %p290
      %p292 = scmp.ne.s32.totalorder %s283, %s284
      %p293 = scmp.eq.s32.totalorder %s35, 0
      %p294 = por %p292, %p293
      %p295 = scmp.ne.s32.totalorder %s283, %s284
      %p296 = scmp.eq.s32.totalorder %s36, 3
      %p297 = por %p295, %p296
      %p299 = scmp.ne.s32.totalorder %s284, %s298
      %p300 = scmp.eq.s32.totalorder %s36, 0
      %p301 = por %p299, %p300
      %s303 = sadd.s32 %s302, 1
      %p306 = scmp.eq.s32.totalorder %s30, 3
      %p307 = scmp.ne.s32.totalorder %s302, %s304
      %p308 = scmp.eq.s32.totalorder %s30, 0
      %p309 = por %p307, %p308
      %p310 = scmp.ne.s32.totalorder %s302, %s304
      %p311 = scmp.eq.s32.totalorder %s35, 3
      %p312 = por %p310, %p311
      %p313 = scmp.ne.s32.totalorder %s304, %s305
      %p314 = scmp.eq.s32.totalorder %s35, 0
      %p315 = por %p313, %p314
      %p316 = scmp.ne.s32.totalorder %s304, %s305
      %p317 = scmp.eq.s32.totalorder %s36, 3
      %p318 = por %p316, %p317
      %p320 = scmp.ne.s32.totalorder %s305, %s319
      %p321 = scmp.eq.s32.totalorder %s36, 0
      %p322 = por %p320, %p321
      %s323 = ssub.s32 %s37, %s56
      %s324 = ssub.s32 %s38, %s52
      %s325 = sor.u32 %s323, %s324
      %p326 = scmp.eq.s32.totalorder %s325, 0
      %s328 = sadd.s32 %s327, 1
      %s329 = scalar_select %p326, %s327, %s328
      %p332 = pneg %p326
      %p333 = scmp.eq.s32.totalorder %s30, 3
      %p334 = por %p332, %p333
      %p335 = scmp.ne.s32.totalorder %s327, %s330
      %p336 = scmp.eq.s32.totalorder %s30, 0
      %p337 = por %p335, %p336
      %p338 = scmp.ne.s32.totalorder %s327, %s330
      %p339 = scmp.eq.s32.totalorder %s35, 3
      %p340 = por %p338, %p339
      %p341 = scmp.ne.s32.totalorder %s330, %s331
      %p342 = scmp.eq.s32.totalorder %s35, 0
      %p343 = por %p341, %p342
      %p344 = scmp.ne.s32.totalorder %s330, %s331
      %p345 = scmp.eq.s32.totalorder %s36, 3
      %p346 = por %p344, %p345
      %p348 = scmp.ne.s32.totalorder %s331, %s347
      %p349 = scmp.eq.s32.totalorder %s36, 0
      %p350 = por %p348, %p349
      %p351 = scmp.le.s32.totalorder 1, %s30
      %p352 = scmp.lt.s32.totalorder %s30, 5
      %p353 = pnand %p351, %p352
      %p354 = pneg %p353
      // Predicated region
      $region9: #{tpu_custom_call.1} parent=5 // pred_check
        _
      $region10: #{tpu_custom_call.1} parent=5 // pred_check_branch
        %356 = sbr.rel (%p353) target = $region12
      $region11: #{tpu_custom_call.1} parent=5 // pred_region
        %s357 = ssub.s32 %s30, 1
        // Predicated region
        $region13: #{tpu_custom_call.1} parent=11 // pred_check
          %p358 = pneg %p126
        $region14: #{tpu_custom_call.1} parent=11 // pred_check_branch
          %360 = sbr.rel (%p358) target = $region16
        $region15: #{tpu_custom_call.1} parent=11 // pred_region
          _
        $region16: #{tpu_custom_call.1} parent=11 // pred_fallthru
          _
        // Predicated region
        $region17: #{tpu_custom_call.1} parent=11 // pred_check
          %p361 = pneg %p147
        $region18: #{tpu_custom_call.1} parent=11 // pred_check_branch
          %363 = sbr.rel (%p361) target = $region20
        $region19: #{tpu_custom_call.1} parent=11 // pred_region
          %s365 = ssub.s32 256, 256
          %366 = vsyncadd [#allocation12], %s365
          %s367 = sshll.u32 [#allocation13], 4
          %s368 = int_to_ptr.vmem [resolvable:$true] %s367
          %373 = dma.hbm_to_vmem [thread:$0]  %s3, 256, %s368, [#allocation12], 64, 64, 4
        $region20: #{tpu_custom_call.1} parent=11 // pred_fallthru
          _
        // Predicated region
        $region21: #{tpu_custom_call.1} parent=11 // pred_check
          %p374 = pneg %p168
        $region22: #{tpu_custom_call.1} parent=11 // pred_check_branch
          %376 = sbr.rel (%p374) target = $region24
        $region23: #{tpu_custom_call.1} parent=11 // pred_region
          %s378 = ssub.s32 16, 16
          %379 = vsyncadd [#allocation15], %s378
          %s381 = sshll.u32 [#allocation14], 4
          %s382 = int_to_ptr.vmem [resolvable:$true] %s381
          %384 = dma.hbm_to_vmem [thread:$0]  %s4, 16, %s382, [#allocation15]
        $region24: #{tpu_custom_call.1} parent=11 // pred_fallthru
          _
        // Predicated region
        $region25: #{tpu_custom_call.1} parent=11 // pred_check
          %p385 = pneg %p189
        $region26: #{tpu_custom_call.1} parent=11 // pred_check_branch
          %387 = sbr.rel (%p385) target = $region28
        $region27: #{tpu_custom_call.1} parent=11 // pred_region
          %s389 = ssub.s32 256, 256
          %390 = vsyncadd [#allocation15], %s389
          %s391 = sshll.u32 [#allocation16], 4
          %s392 = int_to_ptr.vmem [resolvable:$true] %s391
          %397 = dma.hbm_to_vmem [thread:$0]  %s5, 256, %s392, [#allocation15], 64, 64, 4
        $region28: #{tpu_custom_call.1} parent=11 // pred_fallthru
          _
        // Predicated region
        $region29: #{tpu_custom_call.1} parent=11 // pred_check
          %p398 = pneg %p210
        $region30: #{tpu_custom_call.1} parent=11 // pred_check_branch
          %400 = sbr.rel (%p398) target = $region32
        $region31: #{tpu_custom_call.1} parent=11 // pred_region
          %s402 = ssub.s32 16, 16
          %403 = vsyncadd [#allocation18], %s402
          %s405 = sshll.u32 [#allocation17], 4
          %s406 = int_to_ptr.vmem [resolvable:$true] %s405
          %408 = dma.hbm_to_vmem [thread:$0]  %s6, 16, %s406, [#allocation18]
        $region32: #{tpu_custom_call.1} parent=11 // pred_fallthru
          _
        // Predicated region
        $region33: #{tpu_custom_call.1} parent=11 // pred_check
          %p409 = pneg %p231
        $region34: #{tpu_custom_call.1} parent=11 // pred_check_branch
          %411 = sbr.rel (%p409) target = $region36
        $region35: #{tpu_custom_call.1} parent=11 // pred_region
          %s413 = ssub.s32 32, 32
          %414 = vsyncadd [#allocation18], %s413
          %s416 = sshll.u32 [#allocation19], 4
          %s417 = int_to_ptr.vmem [resolvable:$true] %s416
          %419 = dma.hbm_to_vmem [thread:$0]  %s7, 32, %s417, [#allocation18]
        $region36: #{tpu_custom_call.1} parent=11 // pred_fallthru
          _
        // Predicated region
        $region37: #{tpu_custom_call.1} parent=11 // pred_check
          %p420 = pneg %p252
        $region38: #{tpu_custom_call.1} parent=11 // pred_check_branch
          %422 = sbr.rel (%p420) target = $region40
        $region39: #{tpu_custom_call.1} parent=11 // pred_region
          %s424 = ssub.s32 256, 256
          %425 = vsyncadd [#allocation21], %s424
          %s426 = sshll.u32 [#allocation20], 4
          %s427 = int_to_ptr.vmem [resolvable:$true] %s426
          %432 = dma.hbm_to_vmem [thread:$0]  %s8, 256, %s427, [#allocation21], 64, 64, 4
        $region40: #{tpu_custom_call.1} parent=11 // pred_fallthru
          _
        // Predicated region
        $region41: #{tpu_custom_call.1} parent=11 // pred_check
          %p433 = pneg %p273
        $region42: #{tpu_custom_call.1} parent=11 // pred_check_branch
          %435 = sbr.rel (%p433) target = $region44
        $region43: #{tpu_custom_call.1} parent=11 // pred_region
          %s437 = ssub.s32 16, 16
          %438 = vsyncadd [#allocation21], %s437
          %s440 = sshll.u32 [#allocation22], 4
          %s441 = int_to_ptr.vmem [resolvable:$true] %s440
          %443 = dma.hbm_to_vmem [thread:$0]  %s9, 16, %s441, [#allocation21]
        $region44: #{tpu_custom_call.1} parent=11 // pred_fallthru
          _
        // Predicated region
        $region45: #{tpu_custom_call.1} parent=11 // pred_check
          %p444 = pneg %p294
        $region46: #{tpu_custom_call.1} parent=11 // pred_check_branch
          %446 = sbr.rel (%p444) target = $region48
        $region47: #{tpu_custom_call.1} parent=11 // pred_region
          _
        $region48: #{tpu_custom_call.1} parent=11 // pred_fallthru
          _
        // Predicated region
        $region49: #{tpu_custom_call.1} parent=11 // pred_check
          %p447 = pneg %p315
        $region50: #{tpu_custom_call.1} parent=11 // pred_check_branch
          %449 = sbr.rel (%p447) target = $region52
        $region51: #{tpu_custom_call.1} parent=11 // pred_region
          _
        $region52: #{tpu_custom_call.1} parent=11 // pred_fallthru
          _
      $region12: #{tpu_custom_call.1} parent=5 // pred_fallthru
        _
      %p450 = scmp.lt.s32.totalorder %s30, 4
      // Predicated region
      $region53: #{tpu_custom_call.1} parent=5 // pred_check
        %p451 = pneg %p450
      $region54: #{tpu_custom_call.1} parent=5 // pred_check_branch
        %453 = sbr.rel (%p451) target = $region56
      $region55: #{tpu_custom_call.1} parent=5 // pred_region
        // Predicated region
        $region57: #{tpu_custom_call.1} parent=55 // pred_check
          %p454 = pneg %p69
        $region58: #{tpu_custom_call.1} parent=55 // pred_check_branch
          %456 = sbr.rel (%p454) target = $region60
        $region59: #{tpu_custom_call.1} parent=55 // pred_region
          %s457 = sand.u32 %s59, 1
          %s458 = scalar_lea.sflag [#allocation9], %s457
          %s459 = sand.u32 %s59, 1
          %s460 = smul.addr %s459, 16
          %s461 = scalar_lea.vmem [#allocation8], %s460
          %s463 = ssub.s32 256, 256
          %464 = vsyncadd %s458, %s463
          %s465 = smul.addr %s37, 2
          %s466 = smul.addr %s465, 128
          %s467 = scalar_lea.hbm %s0, %s466
          %s468 = sshll.u32 %s461, 4
          %s469 = int_to_ptr.vmem [resolvable:$true] %s468
          %474 = dma.hbm_to_vmem [thread:$0]  %s467, 256, %s469, %s458, 128, 128, 8
        $region60: #{tpu_custom_call.1} parent=55 // pred_fallthru
          _
        // Predicated region
        $region61: #{tpu_custom_call.1} parent=55 // pred_check
          %p475 = pneg %p99
        $region62: #{tpu_custom_call.1} parent=55 // pred_check_branch
          %477 = sbr.rel (%p475) target = $region64
        $region63: #{tpu_custom_call.1} parent=55 // pred_region
          %s478 = sand.u32 %s30, 1
          %s479 = scalar_lea.sflag [#allocation12], %s478
          %s480 = sand.u32 %s89, 1
          %s481 = smul.addr %s480, 32
          %s482 = scalar_lea.vmem [#allocation11], %s481
          %s483 = smul.u32 8, %s38
          %s485 = ssub.s32 512, 512
          %486 = vsyncadd %s479, %s485
          %s487 = sadd.s32 %s39, %s483
          %s488 = smul.addr %s37, 16
          %s489 = sadd.s32 %s487, %s488
          %s490 = smul.addr %s489, 64
          %s491 = scalar_lea.hbm %s1, %s490
          %s492 = sshll.u32 %s482, 4
          %s493 = int_to_ptr.vmem [resolvable:$true] %s492
          %498 = dma.hbm_to_vmem [thread:$0]  %s491, 512, %s493, %s479, 64, 64, 4
        $region64: #{tpu_custom_call.1} parent=55 // pred_fallthru
          _
      $region56: #{tpu_custom_call.1} parent=5 // pred_fallthru
        _
      %p499 = scmp.le.s32.totalorder 1, %s30
      %p500 = scmp.lt.s32.totalorder %s30, 5
      %p501 = pnand %p499, %p500
      %p502 = pneg %p501
      // Predicated region
      $region65: #{tpu_custom_call.1} parent=5 // pred_check
        _
      $region66: #{tpu_custom_call.1} parent=5 // pred_check_branch
        %504 = sbr.rel (%p501) target = $region68
      $region67: #{tpu_custom_call.1} parent=5 // pred_region
        %s505 = ssub.s32 %s30, 1
        %s506 = sand.u32 %s62, 1
        %s507 = scalar_lea.sflag [#allocation9], %s506
        %s508 = sand.u32 %s62, 1
        %s509 = smul.addr %s508, 16
        %s510 = scalar_lea.vmem [#allocation8], %s509
        // Predicated region
        $region69: #{tpu_custom_call.1} parent=67 // pred_check
          %p511 = pneg %p75
        $region70: #{tpu_custom_call.1} parent=67 // pred_check_branch
          %513 = sbr.rel (%p511) target = $region72
        $region71: #{tpu_custom_call.1} parent=67 // pred_region
          %514 = dma.done %s507, 256
        $region72: #{tpu_custom_call.1} parent=67 // pred_fallthru
          _
        %s515 = sand.u32 %s35, 1
        %s516 = scalar_lea.sflag [#allocation12], %s515
        %s517 = sand.u32 %s92, 1
        %s518 = smul.addr %s517, 32
        %s519 = scalar_lea.vmem [#allocation11], %s518
        // Predicated region
        $region73: #{tpu_custom_call.1} parent=67 // pred_check
          %p520 = pneg %p105
        $region74: #{tpu_custom_call.1} parent=67 // pred_check_branch
          %522 = sbr.rel (%p520) target = $region76
        $region75: #{tpu_custom_call.1} parent=67 // pred_region
          %523 = dma.done %s516, 512
        $region76: #{tpu_custom_call.1} parent=67 // pred_fallthru
          _
        // Predicated region
        $region77: #{tpu_custom_call.1} parent=67 // pred_check
          %p524 = pneg %p147
        $region78: #{tpu_custom_call.1} parent=67 // pred_check_branch
          %526 = sbr.rel (%p524) target = $region80
        $region79: #{tpu_custom_call.1} parent=67 // pred_region
          %527 = dma.done [#allocation12], 256
        $region80: #{tpu_custom_call.1} parent=67 // pred_fallthru
          _
        // Predicated region
        $region81: #{tpu_custom_call.1} parent=67 // pred_check
          %p528 = pneg %p168
        $region82: #{tpu_custom_call.1} parent=67 // pred_check_branch
          %530 = sbr.rel (%p528) target = $region84
        $region83: #{tpu_custom_call.1} parent=67 // pred_region
          %531 = dma.done [#allocation15], 16
        $region84: #{tpu_custom_call.1} parent=67 // pred_fallthru
          _
        // Predicated region
        $region85: #{tpu_custom_call.1} parent=67 // pred_check
          %p532 = pneg %p189
        $region86: #{tpu_custom_call.1} parent=67 // pred_check_branch
          %534 = sbr.rel (%p532) target = $region88
        $region87: #{tpu_custom_call.1} parent=67 // pred_region
          %535 = dma.done [#allocation15], 256
        $region88: #{tpu_custom_call.1} parent=67 // pred_fallthru
          _
        // Predicated region
        $region89: #{tpu_custom_call.1} parent=67 // pred_check
          %p536 = pneg %p210
        $region90: #{tpu_custom_call.1} parent=67 // pred_check_branch
          %538 = sbr.rel (%p536) target = $region92
        $region91: #{tpu_custom_call.1} parent=67 // pred_region
          %539 = dma.done [#allocation18], 16
        $region92: #{tpu_custom_call.1} parent=67 // pred_fallthru
          _
        // Predicated region
        $region93: #{tpu_custom_call.1} parent=67 // pred_check
          %p540 = pneg %p231
        $region94: #{tpu_custom_call.1} parent=67 // pred_check_branch
          %542 = sbr.rel (%p540) target = $region96
        $region95: #{tpu_custom_call.1} parent=67 // pred_region
          %543 = dma.done [#allocation18], 32
        $region96: #{tpu_custom_call.1} parent=67 // pred_fallthru
          _
        // Predicated region
        $region97: #{tpu_custom_call.1} parent=67 // pred_check
          %p544 = pneg %p252
        $region98: #{tpu_custom_call.1} parent=67 // pred_check_branch
          %546 = sbr.rel (%p544) target = $region100
        $region99: #{tpu_custom_call.1} parent=67 // pred_region
          %547 = dma.done [#allocation21], 256
        $region100: #{tpu_custom_call.1} parent=67 // pred_fallthru
          _
        // Predicated region
        $region101: #{tpu_custom_call.1} parent=67 // pred_check
          %p548 = pneg %p273
        $region102: #{tpu_custom_call.1} parent=67 // pred_check_branch
          %550 = sbr.rel (%p548) target = $region104
        $region103: #{tpu_custom_call.1} parent=67 // pred_region
          %551 = dma.done [#allocation21], 16
        $region104: #{tpu_custom_call.1} parent=67 // pred_fallthru
          _
        %s552 = sand.u32 %s62, 1
        %s553 = scalar_lea.sflag [#allocation9], %s552
        %s554 = sand.u32 %s62, 1
        %s555 = smul.addr %s554, 16
        %s556 = scalar_lea.vmem [#allocation8], %s555
        %p557 = pneg %p75
        %p558 = pneg %p72
        %s559 = sand.u32 %s35, 1
        %s560 = scalar_lea.sflag [#allocation12], %s559
        %s561 = sand.u32 %s92, 1
        %s562 = smul.addr %s561, 32
        %s563 = scalar_lea.vmem [#allocation11], %s562
        %p564 = pneg %p105
        %p565 = pneg %p102
        %p566 = pneg %p126
        %p567 = pneg %p123
        %p568 = pneg %p147
        %p569 = pneg %p144
        %p570 = pneg %p168
        %p571 = pneg %p165
        %p572 = pneg %p189
        %p573 = pneg %p186
        %p574 = pneg %p210
        %p575 = pneg %p207
        %p576 = pneg %p231
        %p577 = pneg %p228
        %p578 = pneg %p252
        %p579 = pneg %p249
        %p580 = pneg %p273
        %p581 = pneg %p270
        %p582 = pneg %p294
        %p583 = pneg %p291
        %p584 = pneg %p315
        %p585 = pneg %p312
        %p586 = pneg %p343
        %p587 = pneg %p340
        %s588 = sand.u32 %s330, 1
        %s589 = scalar_lea.sflag [#allocation10], %s588
        %s590 = sand.u32 %s330, 1
        %s591 = smul.addr %s590, 8
        %s592 = scalar_lea.vmem [#allocation23], %s591
        %s593 = smul.u32 8, %s41
        %p595 = scmp.eq.s32.totalorder %s41, 0
        %p596 = scmp.eq.s32.totalorder %s42, 0
        %p597 = pnand %p595, %p596
        %p598 = pneg %p597
        // Predicated region
        $region105: #{tpu_custom_call.1} parent=67 // pred_check
          _
        $region106: #{tpu_custom_call.1} parent=67 // pred_check_branch
          %600 = sbr.rel (%p597) target = $region108
        $region107: #{tpu_custom_call.1} parent=67 // pred_region
          %v601 = vld [vmem:[%s510] sm:$0xff]
          %v602 = vld [vmem:[%s510 + $0x8] sm:$0xff]
          %vm603 = vcmask 261120
          %v604 = vsel %vm603, %v601, 0.0
          %605 = vadd.xlane.f32.xlu0 %v604
          %v606 = vpop.xlane.xlu0 %605
          %v607 = vsel %vm603, %v602, 0.0
          %608 = vadd.xlane.f32.xlu0 %v607
          %v609 = vpop.xlane.xlu0 %608
          %v610 = vrcp.pop 32.0
          %v611 = vmul.f32 %v606, %v610
          %v612 = vmul.f32 %v609, %v610
          %v613 = vsub.f32 %v601, %v611
          %v614 = vsub.f32 %v602, %v612
          %v615 = vmul.f32 %v613, %v613
          %v616 = vmul.f32 %v614, %v614
          %v617 = vsel %vm603, %v615, 0.0
          %618 = vadd.xlane.f32.xlu0 %v617
          %v619 = vpop.xlane.xlu0 %618
          %v620 = vsel %vm603, %v616, 0.0
          %621 = vadd.xlane.f32.xlu0 %v620
          %v622 = vpop.xlane.xlu0 %621
          %v623 = vmul.f32 %v619, %v610
          %v624 = vmul.f32 %v622, %v610
          %v625 = vld [vmem:[%s2] sm:$0x3]
          %v626 = vadd.f32 %v623, 1e-05
          %v627 = vadd.f32 %v624, 1e-05
          %v628 = vrsqrt.pop %v626
          %v629 = vrsqrt.pop %v627
          %v630 = vmul.f32 %v613, %v628
          %v631 = vmul.f32 %v614, %v629
          %v632 = vlaneseq
          %v633 = vshrl.u32 %v632, 7
          %v634 = vsub.s32 0, %v633
          %v635 = vrot.slane %v625, %v634
          %v636 = vmul.f32 %v630, %v635
          %v637 = vmul.f32 %v631, %v635
          %v638 = vlaneseq
          %v639 = vshrl.u32 %v638, 7
          %v640 = vsub.s32 1, %v639
          %v641 = vrot.slane %v625, %v640
          %v642 = vadd.f32 %v636, %v641
          %v643 = vadd.f32 %v637, %v641
          %v644 = vpack.c.bf16 %v643, %v642
          %v645 = vld [vmem:[#allocation13] sm:$0xf]
          %v646 = vld [vmem:[#allocation13 + $0x4] sm:$0xf]
          %v647 = vld [vmem:[#allocation13 + $0x8] sm:$0xf]
          %v648 = vld [vmem:[#allocation13 + $0xc] sm:$0xf]
          %v649 = vld [vmem:[#allocation14] sm:$0x1]
          %v651 = vlaneseq
          %v652 = vshrl.u32 %v651, 7
          %v653 = vsub.s32 0, %v652
          %v654 = vrot.slane %v649, %v653
          %v660 = vunpack.c.l.b16 %v645
          %v661 = vunpack.c.l.b16 %v646
          %v662 = vunpack.c.l.b16 %v647
          %v663 = vunpack.c.l.b16 %v648
          %v664 = vpack.c.b16 %v661, %v660
          %v665 = vpack.c.b16 %v663, %v662
          %v669 = vsel %vm603, %v644, 0
          %671 = vmatprep.subr.bf16.mxu0 0
          %672 = vmatpush1.bf16.msra.mxu0 0
          %673 = vmatprep.subr.bf16.mxu0 0
          %674 = vmatpush1.bf16.msra.mxu0 0
          %675 = vmatprep.subr.bf16.mxu0 0
          %676 = vmatpush1.bf16.msra.mxu0 0
          %677 = vmatprep.subr.bf16.mxu0 0
          %678 = vmatpush1.bf16.msra.mxu0 0
          %679 = vmatprep.subr.bf16.mxu0 0
          %680 = vmatpush1.bf16.msra.mxu0 0
          %681 = vmatprep.subr.bf16.mxu0 0
          %682 = vmatpush1.bf16.msra.mxu0 0
          %683 = vmatprep.subr.bf16.mxu0 0
          %684 = vmatpush1.bf16.msra.mxu0 %v665
          %685 = vmatprep.subr.bf16.mxu0 0
          %686 = vmatpush1.bf16.msra.mxu0 %v664
          %687 = vmatprep.subr.bf16.mxu0 0
          %688 = vmatpush2.bf16.msra.mxu0 0
          %689 = vmatprep.subr.bf16.mxu0 0
          %690 = vmatpush2.bf16.msra.mxu0 0
          %691 = vmatprep.subr.bf16.mxu0 0
          %692 = vmatpush2.bf16.msra.mxu0 0
          %693 = vmatprep.subr.bf16.mxu0 0
          %694 = vmatpush2.bf16.msra.mxu0 0
          %695 = vmatprep.subr.bf16.mxu0 0
          %696 = vmatpush2.bf16.msra.mxu0 0
          %697 = vmatprep.subr.bf16.mxu0 0
          %698 = vmatpush2.bf16.msra.mxu0 0
          %699 = vmatprep.subr.bf16.mxu0 0
          %700 = vmatpush2.bf16.msra.mxu0 0
          %701 = vmatprep.subr.bf16.mxu0 0
          %702 = vmatpush2.bf16.msra.mxu0 0
          %703 = vmatprep.mubr.bf16.mxu0 0
          %704 = vmatmul.mubr.bf16.gmra.mxu0 %v669
          %v705 = vpop.f32.mrf.mxu0
          %v706 = vadd.f32 %v654, %v705
          %v707 = vpop.f32.mrf.mxu0
          %v708 = vpop.f32.mrf.mxu0
          %v709 = vadd.f32 %v654, %v708
          %v710 = vpop.f32.mrf.mxu0
          %711 = vdwg.mxu0
          %712 = vst.msk [vmem:[#allocation2] sm:$0xff] %vm603, %v706
          %713 = vst.msk [vmem:[#allocation2 + $0x8] sm:$0xff] %vm603, %v709
          %v714 = vmul.f32 %v706, 0.35355338
          %v715 = vmul.f32 %v709, 0.35355338
          %718 = vrot.lane.b32.xlu0 %v714, 96
          %v719 = vpop.permute.xlu0 %718
          %720 = vrot.lane.b32.xlu0 %v715, 96
          %v721 = vpop.permute.xlu0 %720
          %724 = vst.msk [vmem:[#allocation3] sm:$0xff] %vm603, %v719
          %725 = vst.msk [vmem:[#allocation3 + $0x8] sm:$0xff] %vm603, %v721
          %728 = vrot.lane.b32.xlu0 %v706, 64
          %v729 = vpop.permute.xlu0 %728
          %730 = vrot.lane.b32.xlu0 %v709, 64
          %v731 = vpop.permute.xlu0 %730
          %734 = vst.msk [vmem:[#allocation4] sm:$0xff] %vm603, %v729
          %735 = vst.msk [vmem:[#allocation4 + $0x8] sm:$0xff] %vm603, %v731
        $region108: #{tpu_custom_call.1} parent=67 // pred_fallthru
          _
        // Predicated region
        $region109: #{tpu_custom_call.1} parent=67 // pred_check
          %p736 = pneg %p596
        $region110: #{tpu_custom_call.1} parent=67 // pred_check_branch
          %738 = sbr.rel (%p736) target = $region112
        $region111: #{tpu_custom_call.1} parent=67 // pred_region
          %vm739 = vcmask 31744
          %740 = vst.msk [vmem:[#allocation5] sm:$0xff] %vm739, -inf
          %741 = vst.msk [vmem:[#allocation6] sm:$0xff] %vm739, 0.0
          %vm742 = vcmask 60416
          %743 = vst.msk [vmem:[#allocation7] sm:$0xf] %vm742, 0.0
          %744 = vst.msk [vmem:[#allocation7 + $0x4] sm:$0xf] %vm742, 0.0
          %745 = vst.msk [vmem:[#allocation7 + $0x8] sm:$0xf] %vm742, 0.0
          %746 = vst.msk [vmem:[#allocation7 + $0xc] sm:$0xf] %vm742, 0.0
          %747 = vst.msk [vmem:[#allocation7 + $0x10] sm:$0xf] %vm742, 0.0
          %748 = vst.msk [vmem:[#allocation7 + $0x14] sm:$0xf] %vm742, 0.0
          %749 = vst.msk [vmem:[#allocation7 + $0x18] sm:$0xf] %vm742, 0.0
          %750 = vst.msk [vmem:[#allocation7 + $0x1c] sm:$0xf] %vm742, 0.0
        $region112: #{tpu_custom_call.1} parent=67 // pred_fallthru
          _
        %s751 = smul.u32 %s41, 8
        %s752 = smul.u32 %s42, 16
        %s753 = scalar_lea.vmem [#allocation2], %s751
        %v754 = vld [vmem:[%s753] sm:$0xff]
        %s755 = scalar_lea.vmem [#allocation3], %s752
        %v756 = vld [vmem:[%s755] sm:$0xff]
        %v757 = vld [vmem:[%s755 + $0x8] sm:$0xff]
        %s758 = scalar_lea.vmem [#allocation4], %s752
        %v759 = vld [vmem:[%s758] sm:$0xff]
        %v760 = vld [vmem:[%s758 + $0x8] sm:$0xff]
        %v761 = vld [vmem:[%s519] sm:$0xf]
        %v762 = vld [vmem:[%s519 + $0x4] sm:$0xf]
        %v763 = vld [vmem:[%s519 + $0x8] sm:$0xf]
        %v764 = vld [vmem:[%s519 + $0xc] sm:$0xf]
        %v765 = vld [vmem:[%s519 + $0x10] sm:$0xf]
        %v766 = vld [vmem:[%s519 + $0x14] sm:$0xf]
        %v767 = vld [vmem:[%s519 + $0x18] sm:$0xf]
        %v768 = vld [vmem:[%s519 + $0x1c] sm:$0xf]
        %770 = vrot.lane.b32.xlu0 %v754, 120
        %v771 = vpop.permute.xlu0 %770
        %773 = vrot.lane.b32.xlu0 %v754, 112
        %v774 = vpop.permute.xlu0 %773
        %776 = vrot.lane.b32.xlu0 %v754, 104
        %v777 = vpop.permute.xlu0 %776
        %v779 = vcombine.low %v754, %v774
        %v780 = vcombine.high %v754, %v774
        %v782 = vunpack.c.l.s4 1983009808
        %v783 = vunpack.c.0.s8 %v782
        %v784 = vlaneseq
        %v785 = vshrl.u32 %v784, 7
        %v786 = vsub.s32 %v783, %v785
        %v787 = vrot.slane %v779, %v786
        %v789 = vunpack.c.l.s4 1983009808
        %v790 = vunpack.c.0.s8 %v789
        %v791 = vlaneseq
        %v792 = vshrl.u32 %v791, 7
        %v793 = vsub.s32 %v790, %v792
        %v794 = vrot.slane %v780, %v793
        %v795 = vcombine.low %v771, %v777
        %v796 = vcombine.high %v771, %v777
        %v798 = vunpack.c.l.s4 1983009808
        %v799 = vunpack.c.0.s8 %v798
        %v800 = vlaneseq
        %v801 = vshrl.u32 %v800, 7
        %v802 = vsub.s32 %v799, %v801
        %v803 = vrot.slane %v795, %v802
        %v805 = vunpack.c.l.s4 1983009808
        %v806 = vunpack.c.0.s8 %v805
        %v807 = vlaneseq
        %v808 = vshrl.u32 %v807, 7
        %v809 = vsub.s32 %v806, %v808
        %v810 = vrot.slane %v796, %v809
        %v811 = vcombine.low %v787, %v803
        %v812 = vcombine.high %v787, %v803
        %v814 = vunpack.c.l.s4 1934713408
        %v815 = vunpack.c.0.s8 %v814
        %v816 = vlaneseq
        %v817 = vshrl.u32 %v816, 7
        %v818 = vsub.s32 %v815, %v817
        %v819 = vrot.slane %v811, %v818
        %v821 = vunpack.c.l.s4 1934713408
        %v822 = vunpack.c.0.s8 %v821
        %v823 = vlaneseq
        %v824 = vshrl.u32 %v823, 7
        %v825 = vsub.s32 %v822, %v824
        %v826 = vrot.slane %v812, %v825
        %v827 = vcombine.low %v794, %v810
        %v828 = vcombine.high %v794, %v810
        %v830 = vunpack.c.l.s4 1934713408
        %v831 = vunpack.c.0.s8 %v830
        %v832 = vlaneseq
        %v833 = vshrl.u32 %v832, 7
        %v834 = vsub.s32 %v831, %v833
        %v835 = vrot.slane %v827, %v834
        %v837 = vunpack.c.l.s4 1934713408
        %v838 = vunpack.c.0.s8 %v837
        %v839 = vlaneseq
        %v840 = vshrl.u32 %v839, 7
        %v841 = vsub.s32 %v838, %v840
        %v842 = vrot.slane %v828, %v841
        %v843 = vcombine.high %v819, 0.0
        %v844 = vcombine.high %v826, 0.0
        %v845 = vcombine.high %v835, 0.0
        %v846 = vcombine.high %v842, 0.0
        %v847 = vpack.c.bf16 %v819, %v819
        %v848 = vpack.c.bf16 %v843, %v843
        %v849 = vpack.c.bf16 %v826, %v826
        %v850 = vpack.c.bf16 %v844, %v844
        %v851 = vpack.c.bf16 %v835, %v835
        %v852 = vpack.c.bf16 %v845, %v845
        %v853 = vpack.c.bf16 %v842, %v842
        %v854 = vpack.c.bf16 %v846, %v846
        %v855 = vcombine.low %v819, %v826
        %v857 = vunpack.c.l.s4 1983009808
        %v858 = vunpack.c.0.s8 %v857
        %v859 = vlaneseq
        %v860 = vshrl.u32 %v859, 7
        %v861 = vsub.s32 %v858, %v860
        %v862 = vrot.slane %v855, %v861
        %v863 = vcombine.low %v843, %v844
        %v865 = vunpack.c.l.s4 1983009808
        %v866 = vunpack.c.0.s8 %v865
        %v867 = vlaneseq
        %v868 = vshrl.u32 %v867, 7
        %v869 = vsub.s32 %v866, %v868
        %v870 = vrot.slane %v863, %v869
        %v871 = vcombine.low %v835, %v842
        %v873 = vunpack.c.l.s4 1983009808
        %v874 = vunpack.c.0.s8 %v873
        %v875 = vlaneseq
        %v876 = vshrl.u32 %v875, 7
        %v877 = vsub.s32 %v874, %v876
        %v878 = vrot.slane %v871, %v877
        %v879 = vcombine.low %v845, %v846
        %v881 = vunpack.c.l.s4 1983009808
        %v882 = vunpack.c.0.s8 %v881
        %v883 = vlaneseq
        %v884 = vshrl.u32 %v883, 7
        %v885 = vsub.s32 %v882, %v884
        %v886 = vrot.slane %v879, %v885
        %v887 = vcombine.low %v862, %v870
        %v888 = vcombine.high %v862, %v870
        %v890 = vunpack.c.l.s4 1934713408
        %v891 = vunpack.c.0.s8 %v890
        %v892 = vlaneseq
        %v893 = vshrl.u32 %v892, 7
        %v894 = vsub.s32 %v891, %v893
        %v895 = vrot.slane %v887, %v894
        %v897 = vunpack.c.l.s4 1934713408
        %v898 = vunpack.c.0.s8 %v897
        %v899 = vlaneseq
        %v900 = vshrl.u32 %v899, 7
        %v901 = vsub.s32 %v898, %v900
        %v902 = vrot.slane %v888, %v901
        %v903 = vcombine.low %v878, %v886
        %v904 = vcombine.high %v878, %v886
        %v906 = vunpack.c.l.s4 1934713408
        %v907 = vunpack.c.0.s8 %v906
        %v908 = vlaneseq
        %v909 = vshrl.u32 %v908, 7
        %v910 = vsub.s32 %v907, %v909
        %v911 = vrot.slane %v903, %v910
        %v913 = vunpack.c.l.s4 1934713408
        %v914 = vunpack.c.0.s8 %v913
        %v915 = vlaneseq
        %v916 = vshrl.u32 %v915, 7
        %v917 = vsub.s32 %v914, %v916
        %v918 = vrot.slane %v904, %v917
        %v919 = vcombine.low %v895, %v911
        %v920 = vcombine.high %v895, %v911
        %v921 = vcombine.low %v902, %v918
        %v922 = vcombine.high %v902, %v918
        %v923 = vpack.c.bf16 %v919, %v919
        %v924 = vpack.c.bf16 %v920, %v920
        %v925 = vpack.c.bf16 %v921, %v921
        %v926 = vpack.c.bf16 %v922, %v922
        %929 = vrot.lane.b32.xlu0 %v756, 120
        %v930 = vpop.permute.xlu0 %929
        %931 = vrot.lane.b32.xlu0 %v757, 120
        %v932 = vpop.permute.xlu0 %931
        %935 = vrot.lane.b32.xlu0 %v756, 112
        %v936 = vpop.permute.xlu0 %935
        %937 = vrot.lane.b32.xlu0 %v757, 112
        %v938 = vpop.permute.xlu0 %937
        %941 = vrot.lane.b32.xlu0 %v756, 104
        %v942 = vpop.permute.xlu0 %941
        %943 = vrot.lane.b32.xlu0 %v757, 104
        %v944 = vpop.permute.xlu0 %943
        %v947 = vcombine.low %v756, %v936
        %v948 = vcombine.high %v756, %v936
        %v950 = vunpack.c.l.s4 1983009808
        %v951 = vunpack.c.0.s8 %v950
        %v952 = vlaneseq
        %v953 = vshrl.u32 %v952, 7
        %v954 = vsub.s32 %v951, %v953
        %v955 = vrot.slane %v947, %v954
        %v957 = vunpack.c.l.s4 1983009808
        %v958 = vunpack.c.0.s8 %v957
        %v959 = vlaneseq
        %v960 = vshrl.u32 %v959, 7
        %v961 = vsub.s32 %v958, %v960
        %v962 = vrot.slane %v948, %v961
        %v963 = vcombine.low %v930, %v942
        %v964 = vcombine.high %v930, %v942
        %v966 = vunpack.c.l.s4 1983009808
        %v967 = vunpack.c.0.s8 %v966
        %v968 = vlaneseq
        %v969 = vshrl.u32 %v968, 7
        %v970 = vsub.s32 %v967, %v969
        %v971 = vrot.slane %v963, %v970
        %v973 = vunpack.c.l.s4 1983009808
        %v974 = vunpack.c.0.s8 %v973
        %v975 = vlaneseq
        %v976 = vshrl.u32 %v975, 7
        %v977 = vsub.s32 %v974, %v976
        %v978 = vrot.slane %v964, %v977
        %v979 = vcombine.low %v955, %v971
        %v980 = vcombine.high %v955, %v971
        %v982 = vunpack.c.l.s4 1934713408
        %v983 = vunpack.c.0.s8 %v982
        %v984 = vlaneseq
        %v985 = vshrl.u32 %v984, 7
        %v986 = vsub.s32 %v983, %v985
        %v987 = vrot.slane %v979, %v986
        %v989 = vunpack.c.l.s4 1934713408
        %v990 = vunpack.c.0.s8 %v989
        %v991 = vlaneseq
        %v992 = vshrl.u32 %v991, 7
        %v993 = vsub.s32 %v990, %v992
        %v994 = vrot.slane %v980, %v993
        %v995 = vcombine.low %v962, %v978
        %v996 = vcombine.high %v962, %v978
        %v998 = vunpack.c.l.s4 1934713408
        %v999 = vunpack.c.0.s8 %v998
        %v1000 = vlaneseq
        %v1001 = vshrl.u32 %v1000, 7
        %v1002 = vsub.s32 %v999, %v1001
        %v1003 = vrot.slane %v995, %v1002
        %v1005 = vunpack.c.l.s4 1934713408
        %v1006 = vunpack.c.0.s8 %v1005
        %v1007 = vlaneseq
        %v1008 = vshrl.u32 %v1007, 7
        %v1009 = vsub.s32 %v1006, %v1008
        %v1010 = vrot.slane %v996, %v1009
        %v1011 = vcombine.high %v987, 0.0
        %v1012 = vcombine.high %v994, 0.0
        %v1013 = vcombine.high %v1003, 0.0
        %v1014 = vcombine.high %v1010, 0.0
        %v1015 = vcombine.low %v757, %v938
        %v1016 = vcombine.high %v757, %v938
        %v1018 = vunpack.c.l.s4 1983009808
        %v1019 = vunpack.c.0.s8 %v1018
        %v1020 = vlaneseq
        %v1021 = vshrl.u32 %v1020, 7
        %v1022 = vsub.s32 %v1019, %v1021
        %v1023 = vrot.slane %v1015, %v1022
        %v1025 = vunpack.c.l.s4 1983009808
        %v1026 = vunpack.c.0.s8 %v1025
        %v1027 = vlaneseq
        %v1028 = vshrl.u32 %v1027, 7
        %v1029 = vsub.s32 %v1026, %v1028
        %v1030 = vrot.slane %v1016, %v1029
        %v1031 = vcombine.low %v932, %v944
        %v1032 = vcombine.high %v932, %v944
        %v1034 = vunpack.c.l.s4 1983009808
        %v1035 = vunpack.c.0.s8 %v1034
        %v1036 = vlaneseq
        %v1037 = vshrl.u32 %v1036, 7
        %v1038 = vsub.s32 %v1035, %v1037
        %v1039 = vrot.slane %v1031, %v1038
        %v1041 = vunpack.c.l.s4 1983009808
        %v1042 = vunpack.c.0.s8 %v1041
        %v1043 = vlaneseq
        %v1044 = vshrl.u32 %v1043, 7
        %v1045 = vsub.s32 %v1042, %v1044
        %v1046 = vrot.slane %v1032, %v1045
        %v1047 = vcombine.low %v1023, %v1039
        %v1048 = vcombine.high %v1023, %v1039
        %v1050 = vunpack.c.l.s4 1934713408
        %v1051 = vunpack.c.0.s8 %v1050
        %v1052 = vlaneseq
        %v1053 = vshrl.u32 %v1052, 7
        %v1054 = vsub.s32 %v1051, %v1053
        %v1055 = vrot.slane %v1047, %v1054
        %v1057 = vunpack.c.l.s4 1934713408
        %v1058 = vunpack.c.0.s8 %v1057
        %v1059 = vlaneseq
        %v1060 = vshrl.u32 %v1059, 7
        %v1061 = vsub.s32 %v1058, %v1060
        %v1062 = vrot.slane %v1048, %v1061
        %v1063 = vcombine.low %v1030, %v1046
        %v1064 = vcombine.high %v1030, %v1046
        %v1066 = vunpack.c.l.s4 1934713408
        %v1067 = vunpack.c.0.s8 %v1066
        %v1068 = vlaneseq
        %v1069 = vshrl.u32 %v1068, 7
        %v1070 = vsub.s32 %v1067, %v1069
        %v1071 = vrot.slane %v1063, %v1070
        %v1073 = vunpack.c.l.s4 1934713408
        %v1074 = vunpack.c.0.s8 %v1073
        %v1075 = vlaneseq
        %v1076 = vshrl.u32 %v1075, 7
        %v1077 = vsub.s32 %v1074, %v1076
        %v1078 = vrot.slane %v1064, %v1077
        %v1079 = vcombine.high %v1055, 0.0
        %v1080 = vcombine.high %v1062, 0.0
        %v1081 = vcombine.high %v1071, 0.0
        %v1082 = vcombine.high %v1078, 0.0
        %v1083 = vcombine.low %v987, %v994
        %v1085 = vunpack.c.l.s4 1983009808
        %v1086 = vunpack.c.0.s8 %v1085
        %v1087 = vlaneseq
        %v1088 = vshrl.u32 %v1087, 7
        %v1089 = vsub.s32 %v1086, %v1088
        %v1090 = vrot.slane %v1083, %v1089
        %v1091 = vcombine.low %v1011, %v1012
        %v1093 = vunpack.c.l.s4 1983009808
        %v1094 = vunpack.c.0.s8 %v1093
        %v1095 = vlaneseq
        %v1096 = vshrl.u32 %v1095, 7
        %v1097 = vsub.s32 %v1094, %v1096
        %v1098 = vrot.slane %v1091, %v1097
        %v1099 = vcombine.low %v1003, %v1010
        %v1101 = vunpack.c.l.s4 1983009808
        %v1102 = vunpack.c.0.s8 %v1101
        %v1103 = vlaneseq
        %v1104 = vshrl.u32 %v1103, 7
        %v1105 = vsub.s32 %v1102, %v1104
        %v1106 = vrot.slane %v1099, %v1105
        %v1107 = vcombine.low %v1013, %v1014
        %v1109 = vunpack.c.l.s4 1983009808
        %v1110 = vunpack.c.0.s8 %v1109
        %v1111 = vlaneseq
        %v1112 = vshrl.u32 %v1111, 7
        %v1113 = vsub.s32 %v1110, %v1112
        %v1114 = vrot.slane %v1107, %v1113
        %v1115 = vcombine.low %v1090, %v1098
        %v1116 = vcombine.high %v1090, %v1098
        %v1118 = vunpack.c.l.s4 1934713408
        %v1119 = vunpack.c.0.s8 %v1118
        %v1120 = vlaneseq
        %v1121 = vshrl.u32 %v1120, 7
        %v1122 = vsub.s32 %v1119, %v1121
        %v1123 = vrot.slane %v1115, %v1122
        %v1125 = vunpack.c.l.s4 1934713408
        %v1126 = vunpack.c.0.s8 %v1125
        %v1127 = vlaneseq
        %v1128 = vshrl.u32 %v1127, 7
        %v1129 = vsub.s32 %v1126, %v1128
        %v1130 = vrot.slane %v1116, %v1129
        %v1131 = vcombine.low %v1106, %v1114
        %v1132 = vcombine.high %v1106, %v1114
        %v1134 = vunpack.c.l.s4 1934713408
        %v1135 = vunpack.c.0.s8 %v1134
        %v1136 = vlaneseq
        %v1137 = vshrl.u32 %v1136, 7
        %v1138 = vsub.s32 %v1135, %v1137
        %v1139 = vrot.slane %v1131, %v1138
        %v1141 = vunpack.c.l.s4 1934713408
        %v1142 = vunpack.c.0.s8 %v1141
        %v1143 = vlaneseq
        %v1144 = vshrl.u32 %v1143, 7
        %v1145 = vsub.s32 %v1142, %v1144
        %v1146 = vrot.slane %v1132, %v1145
        %v1147 = vcombine.low %v1123, %v1139
        %v1148 = vcombine.high %v1123, %v1139
        %v1149 = vcombine.low %v1130, %v1146
        %v1150 = vcombine.high %v1130, %v1146
        %v1151 = vcombine.low %v1055, %v1062
        %v1153 = vunpack.c.l.s4 1983009808
        %v1154 = vunpack.c.0.s8 %v1153
        %v1155 = vlaneseq
        %v1156 = vshrl.u32 %v1155, 7
        %v1157 = vsub.s32 %v1154, %v1156
        %v1158 = vrot.slane %v1151, %v1157
        %v1159 = vcombine.low %v1079, %v1080
        %v1161 = vunpack.c.l.s4 1983009808
        %v1162 = vunpack.c.0.s8 %v1161
        %v1163 = vlaneseq
        %v1164 = vshrl.u32 %v1163, 7
        %v1165 = vsub.s32 %v1162, %v1164
        %v1166 = vrot.slane %v1159, %v1165
        %v1167 = vcombine.low %v1071, %v1078
        %v1169 = vunpack.c.l.s4 1983009808
        %v1170 = vunpack.c.0.s8 %v1169
        %v1171 = vlaneseq
        %v1172 = vshrl.u32 %v1171, 7
        %v1173 = vsub.s32 %v1170, %v1172
        %v1174 = vrot.slane %v1167, %v1173
        %v1175 = vcombine.low %v1081, %v1082
        %v1177 = vunpack.c.l.s4 1983009808
        %v1178 = vunpack.c.0.s8 %v1177
        %v1179 = vlaneseq
        %v1180 = vshrl.u32 %v1179, 7
        %v1181 = vsub.s32 %v1178, %v1180
        %v1182 = vrot.slane %v1175, %v1181
        %v1183 = vcombine.low %v1158, %v1166
        %v1184 = vcombine.high %v1158, %v1166
        %v1186 = vunpack.c.l.s4 1934713408
        %v1187 = vunpack.c.0.s8 %v1186
        %v1188 = vlaneseq
        %v1189 = vshrl.u32 %v1188, 7
        %v1190 = vsub.s32 %v1187, %v1189
        %v1191 = vrot.slane %v1183, %v1190
        %v1193 = vunpack.c.l.s4 1934713408
        %v1194 = vunpack.c.0.s8 %v1193
        %v1195 = vlaneseq
        %v1196 = vshrl.u32 %v1195, 7
        %v1197 = vsub.s32 %v1194, %v1196
        %v1198 = vrot.slane %v1184, %v1197
        %v1199 = vcombine.low %v1174, %v1182
        %v1200 = vcombine.high %v1174, %v1182
        %v1202 = vunpack.c.l.s4 1934713408
        %v1203 = vunpack.c.0.s8 %v1202
        %v1204 = vlaneseq
        %v1205 = vshrl.u32 %v1204, 7
        %v1206 = vsub.s32 %v1203, %v1205
        %v1207 = vrot.slane %v1199, %v1206
        %v1209 = vunpack.c.l.s4 1934713408
        %v1210 = vunpack.c.0.s8 %v1209
        %v1211 = vlaneseq
        %v1212 = vshrl.u32 %v1211, 7
        %v1213 = vsub.s32 %v1210, %v1212
        %v1214 = vrot.slane %v1200, %v1213
        %v1215 = vcombine.low %v1191, %v1207
        %v1216 = vcombine.high %v1191, %v1207
        %v1217 = vcombine.low %v1198, %v1214
        %v1218 = vcombine.high %v1198, %v1214
        %v1219 = vpack.c.bf16 %v1215, %v1147
        %v1220 = vpack.c.bf16 %v1216, %v1148
        %v1221 = vpack.c.bf16 %v1217, %v1149
        %v1222 = vpack.c.bf16 %v1218, %v1150
        %1225 = vrot.lane.b32.xlu0 %v759, 120
        %v1226 = vpop.permute.xlu0 %1225
        %1227 = vrot.lane.b32.xlu0 %v760, 120
        %v1228 = vpop.permute.xlu0 %1227
        %1231 = vrot.lane.b32.xlu0 %v759, 112
        %v1232 = vpop.permute.xlu0 %1231
        %1233 = vrot.lane.b32.xlu0 %v760, 112
        %v1234 = vpop.permute.xlu0 %1233
        %1237 = vrot.lane.b32.xlu0 %v759, 104
        %v1238 = vpop.permute.xlu0 %1237
        %1239 = vrot.lane.b32.xlu0 %v760, 104
        %v1240 = vpop.permute.xlu0 %1239
        %v1243 = vcombine.low %v759, %v1232
        %v1244 = vcombine.high %v759, %v1232
        %v1246 = vunpack.c.l.s4 1983009808
        %v1247 = vunpack.c.0.s8 %v1246
        %v1248 = vlaneseq
        %v1249 = vshrl.u32 %v1248, 7
        %v1250 = vsub.s32 %v1247, %v1249
        %v1251 = vrot.slane %v1243, %v1250
        %v1253 = vunpack.c.l.s4 1983009808
        %v1254 = vunpack.c.0.s8 %v1253
        %v1255 = vlaneseq
        %v1256 = vshrl.u32 %v1255, 7
        %v1257 = vsub.s32 %v1254, %v1256
        %v1258 = vrot.slane %v1244, %v1257
        %v1259 = vcombine.low %v1226, %v1238
        %v1260 = vcombine.high %v1226, %v1238
        %v1262 = vunpack.c.l.s4 1983009808
        %v1263 = vunpack.c.0.s8 %v1262
        %v1264 = vlaneseq
        %v1265 = vshrl.u32 %v1264, 7
        %v1266 = vsub.s32 %v1263, %v1265
        %v1267 = vrot.slane %v1259, %v1266
        %v1269 = vunpack.c.l.s4 1983009808
        %v1270 = vunpack.c.0.s8 %v1269
        %v1271 = vlaneseq
        %v1272 = vshrl.u32 %v1271, 7
        %v1273 = vsub.s32 %v1270, %v1272
        %v1274 = vrot.slane %v1260, %v1273
        %v1275 = vcombine.low %v1251, %v1267
        %v1276 = vcombine.high %v1251, %v1267
        %v1278 = vunpack.c.l.s4 1934713408
        %v1279 = vunpack.c.0.s8 %v1278
        %v1280 = vlaneseq
        %v1281 = vshrl.u32 %v1280, 7
        %v1282 = vsub.s32 %v1279, %v1281
        %v1283 = vrot.slane %v1275, %v1282
        %v1285 = vunpack.c.l.s4 1934713408
        %v1286 = vunpack.c.0.s8 %v1285
        %v1287 = vlaneseq
        %v1288 = vshrl.u32 %v1287, 7
        %v1289 = vsub.s32 %v1286, %v1288
        %v1290 = vrot.slane %v1276, %v1289
        %v1291 = vcombine.low %v1258, %v1274
        %v1292 = vcombine.high %v1258, %v1274
        %v1294 = vunpack.c.l.s4 1934713408
        %v1295 = vunpack.c.0.s8 %v1294
        %v1296 = vlaneseq
        %v1297 = vshrl.u32 %v1296, 7
        %v1298 = vsub.s32 %v1295, %v1297
        %v1299 = vrot.slane %v1291, %v1298
        %v1301 = vunpack.c.l.s4 1934713408
        %v1302 = vunpack.c.0.s8 %v1301
        %v1303 = vlaneseq
        %v1304 = vshrl.u32 %v1303, 7
        %v1305 = vsub.s32 %v1302, %v1304
        %v1306 = vrot.slane %v1292, %v1305
        %v1307 = vcombine.high %v1283, 0.0
        %v1308 = vcombine.high %v1290, 0.0
        %v1309 = vcombine.high %v1299, 0.0
        %v1310 = vcombine.high %v1306, 0.0
        %v1311 = vcombine.low %v760, %v1234
        %v1312 = vcombine.high %v760, %v1234
        %v1314 = vunpack.c.l.s4 1983009808
        %v1315 = vunpack.c.0.s8 %v1314
        %v1316 = vlaneseq
        %v1317 = vshrl.u32 %v1316, 7
        %v1318 = vsub.s32 %v1315, %v1317
        %v1319 = vrot.slane %v1311, %v1318
        %v1321 = vunpack.c.l.s4 1983009808
        %v1322 = vunpack.c.0.s8 %v1321
        %v1323 = vlaneseq
        %v1324 = vshrl.u32 %v1323, 7
        %v1325 = vsub.s32 %v1322, %v1324
        %v1326 = vrot.slane %v1312, %v1325
        %v1327 = vcombine.low %v1228, %v1240
        %v1328 = vcombine.high %v1228, %v1240
        %v1330 = vunpack.c.l.s4 1983009808
        %v1331 = vunpack.c.0.s8 %v1330
        %v1332 = vlaneseq
        %v1333 = vshrl.u32 %v1332, 7
        %v1334 = vsub.s32 %v1331, %v1333
        %v1335 = vrot.slane %v1327, %v1334
        %v1337 = vunpack.c.l.s4 1983009808
        %v1338 = vunpack.c.0.s8 %v1337
        %v1339 = vlaneseq
        %v1340 = vshrl.u32 %v1339, 7
        %v1341 = vsub.s32 %v1338, %v1340
        %v1342 = vrot.slane %v1328, %v1341
        %v1343 = vcombine.low %v1319, %v1335
        %v1344 = vcombine.high %v1319, %v1335
        %v1346 = vunpack.c.l.s4 1934713408
        %v1347 = vunpack.c.0.s8 %v1346
        %v1348 = vlaneseq
        %v1349 = vshrl.u32 %v1348, 7
        %v1350 = vsub.s32 %v1347, %v1349
        %v1351 = vrot.slane %v1343, %v1350
        %v1353 = vunpack.c.l.s4 1934713408
        %v1354 = vunpack.c.0.s8 %v1353
        %v1355 = vlaneseq
        %v1356 = vshrl.u32 %v1355, 7
        %v1357 = vsub.s32 %v1354, %v1356
        %v1358 = vrot.slane %v1344, %v1357
        %v1359 = vcombine.low %v1326, %v1342
        %v1360 = vcombine.high %v1326, %v1342
        %v1362 = vunpack.c.l.s4 1934713408
        %v1363 = vunpack.c.0.s8 %v1362
        %v1364 = vlaneseq
        %v1365 = vshrl.u32 %v1364, 7
        %v1366 = vsub.s32 %v1363, %v1365
        %v1367 = vrot.slane %v1359, %v1366
        %v1369 = vunpack.c.l.s4 1934713408
        %v1370 = vunpack.c.0.s8 %v1369
        %v1371 = vlaneseq
        %v1372 = vshrl.u32 %v1371, 7
        %v1373 = vsub.s32 %v1370, %v1372
        %v1374 = vrot.slane %v1360, %v1373
        %v1375 = vcombine.high %v1351, 0.0
        %v1376 = vcombine.high %v1358, 0.0
        %v1377 = vcombine.high %v1367, 0.0
        %v1378 = vcombine.high %v1374, 0.0
        %v1379 = vcombine.low %v1283, %v1290
        %v1381 = vunpack.c.l.s4 1983009808
        %v1382 = vunpack.c.0.s8 %v1381
        %v1383 = vlaneseq
        %v1384 = vshrl.u32 %v1383, 7
        %v1385 = vsub.s32 %v1382, %v1384
        %v1386 = vrot.slane %v1379, %v1385
        %v1387 = vcombine.low %v1307, %v1308
        %v1389 = vunpack.c.l.s4 1983009808
        %v1390 = vunpack.c.0.s8 %v1389
        %v1391 = vlaneseq
        %v1392 = vshrl.u32 %v1391, 7
        %v1393 = vsub.s32 %v1390, %v1392
        %v1394 = vrot.slane %v1387, %v1393
        %v1395 = vcombine.low %v1299, %v1306
        %v1397 = vunpack.c.l.s4 1983009808
        %v1398 = vunpack.c.0.s8 %v1397
        %v1399 = vlaneseq
        %v1400 = vshrl.u32 %v1399, 7
        %v1401 = vsub.s32 %v1398, %v1400
        %v1402 = vrot.slane %v1395, %v1401
        %v1403 = vcombine.low %v1309, %v1310
        %v1405 = vunpack.c.l.s4 1983009808
        %v1406 = vunpack.c.0.s8 %v1405
        %v1407 = vlaneseq
        %v1408 = vshrl.u32 %v1407, 7
        %v1409 = vsub.s32 %v1406, %v1408
        %v1410 = vrot.slane %v1403, %v1409
        %v1411 = vcombine.low %v1386, %v1394
        %v1412 = vcombine.high %v1386, %v1394
        %v1414 = vunpack.c.l.s4 1934713408
        %v1415 = vunpack.c.0.s8 %v1414
        %v1416 = vlaneseq
        %v1417 = vshrl.u32 %v1416, 7
        %v1418 = vsub.s32 %v1415, %v1417
        %v1419 = vrot.slane %v1411, %v1418
        %v1421 = vunpack.c.l.s4 1934713408
        %v1422 = vunpack.c.0.s8 %v1421
        %v1423 = vlaneseq
        %v1424 = vshrl.u32 %v1423, 7
        %v1425 = vsub.s32 %v1422, %v1424
        %v1426 = vrot.slane %v1412, %v1425
        %v1427 = vcombine.low %v1402, %v1410
        %v1428 = vcombine.high %v1402, %v1410
        %v1430 = vunpack.c.l.s4 1934713408
        %v1431 = vunpack.c.0.s8 %v1430
        %v1432 = vlaneseq
        %v1433 = vshrl.u32 %v1432, 7
        %v1434 = vsub.s32 %v1431, %v1433
        %v1435 = vrot.slane %v1427, %v1434
        %v1437 = vunpack.c.l.s4 1934713408
        %v1438 = vunpack.c.0.s8 %v1437
        %v1439 = vlaneseq
        %v1440 = vshrl.u32 %v1439, 7
        %v1441 = vsub.s32 %v1438, %v1440
        %v1442 = vrot.slane %v1428, %v1441
        %v1443 = vcombine.low %v1419, %v1435
        %v1444 = vcombine.high %v1419, %v1435
        %v1445 = vcombine.low %v1426, %v1442
        %v1446 = vcombine.high %v1426, %v1442
        %v1447 = vcombine.low %v1351, %v1358
        %v1449 = vunpack.c.l.s4 1983009808
        %v1450 = vunpack.c.0.s8 %v1449
        %v1451 = vlaneseq
        %v1452 = vshrl.u32 %v1451, 7
        %v1453 = vsub.s32 %v1450, %v1452
        %v1454 = vrot.slane %v1447, %v1453
        %v1455 = vcombine.low %v1375, %v1376
        %v1457 = vunpack.c.l.s4 1983009808
        %v1458 = vunpack.c.0.s8 %v1457
        %v1459 = vlaneseq
        %v1460 = vshrl.u32 %v1459, 7
        %v1461 = vsub.s32 %v1458, %v1460
        %v1462 = vrot.slane %v1455, %v1461
        %v1463 = vcombine.low %v1367, %v1374
        %v1465 = vunpack.c.l.s4 1983009808
        %v1466 = vunpack.c.0.s8 %v1465
        %v1467 = vlaneseq
        %v1468 = vshrl.u32 %v1467, 7
        %v1469 = vsub.s32 %v1466, %v1468
        %v1470 = vrot.slane %v1463, %v1469
        %v1471 = vcombine.low %v1377, %v1378
        %v1473 = vunpack.c.l.s4 1983009808
        %v1474 = vunpack.c.0.s8 %v1473
        %v1475 = vlaneseq
        %v1476 = vshrl.u32 %v1475, 7
        %v1477 = vsub.s32 %v1474, %v1476
        %v1478 = vrot.slane %v1471, %v1477
        %v1479 = vcombine.low %v1454, %v1462
        %v1480 = vcombine.high %v1454, %v1462
        %v1482 = vunpack.c.l.s4 1934713408
        %v1483 = vunpack.c.0.s8 %v1482
        %v1484 = vlaneseq
        %v1485 = vshrl.u32 %v1484, 7
        %v1486 = vsub.s32 %v1483, %v1485
        %v1487 = vrot.slane %v1479, %v1486
        %v1489 = vunpack.c.l.s4 1934713408
        %v1490 = vunpack.c.0.s8 %v1489
        %v1491 = vlaneseq
        %v1492 = vshrl.u32 %v1491, 7
        %v1493 = vsub.s32 %v1490, %v1492
        %v1494 = vrot.slane %v1480, %v1493
        %v1495 = vcombine.low %v1470, %v1478
        %v1496 = vcombine.high %v1470, %v1478
        %v1498 = vunpack.c.l.s4 1934713408
        %v1499 = vunpack.c.0.s8 %v1498
        %v1500 = vlaneseq
        %v1501 = vshrl.u32 %v1500, 7
        %v1502 = vsub.s32 %v1499, %v1501
        %v1503 = vrot.slane %v1495, %v1502
        %v1505 = vunpack.c.l.s4 1934713408
        %v1506 = vunpack.c.0.s8 %v1505
        %v1507 = vlaneseq
        %v1508 = vshrl.u32 %v1507, 7
        %v1509 = vsub.s32 %v1506, %v1508
        %v1510 = vrot.slane %v1496, %v1509
        %v1511 = vcombine.low %v1487, %v1503
        %v1512 = vcombine.high %v1487, %v1503
        %v1513 = vcombine.low %v1494, %v1510
        %v1514 = vcombine.high %v1494, %v1510
        %v1515 = vpack.c.bf16 %v1511, %v1443
        %v1516 = vpack.c.bf16 %v1512, %v1444
        %v1517 = vpack.c.bf16 %v1513, %v1445
        %v1518 = vpack.c.bf16 %v1514, %v1446
        %vm1519 = vcmask 64512
        %v1521 = vsel %vm1519, %v923, 0
        %v1524 = vsel %vm1519, %v1219, 0
        %1526 = vmatprep.subr.bf16.mxu0 0
        %1527 = vmatpush1.bf16.xpose.msra.mxu0 0
        %1528 = vmatprep.subr.bf16.mxu0 0
        %1529 = vmatpush1.bf16.xpose.msra.mxu0 0
        %1530 = vmatprep.subr.bf16.mxu0 0
        %1531 = vmatpush1.bf16.xpose.msra.mxu0 0
        %1532 = vmatprep.subr.bf16.mxu0 0
        %1533 = vmatpush1.bf16.xpose.msra.mxu0 0
        %1534 = vmatprep.subr.bf16.mxu0 0
        %1535 = vmatpush1.bf16.xpose.msra.mxu0 0
        %1536 = vmatprep.subr.bf16.mxu0 0
        %1537 = vmatpush1.bf16.xpose.msra.mxu0 0
        %1538 = vmatprep.subr.bf16.mxu0 0
        %1539 = vmatpush1.bf16.xpose.msra.mxu0 0
        %1540 = vmatprep.subr.bf16.mxu0 0
        %1541 = vmatpush1.bf16.xpose.msra.mxu0 %v1524
        %1542 = vmatprep.subr.bf16.mxu0 0
        %1543 = vmatpush2.bf16.xpose.msra.mxu0 0
        %1544 = vmatprep.subr.bf16.mxu0 0
        %1545 = vmatpush2.bf16.xpose.msra.mxu0 0
        %1546 = vmatprep.subr.bf16.mxu0 0
        %1547 = vmatpush2.bf16.xpose.msra.mxu0 0
        %1548 = vmatprep.subr.bf16.mxu0 0
        %1549 = vmatpush2.bf16.xpose.msra.mxu0 0
        %1550 = vmatprep.subr.bf16.mxu0 0
        %1551 = vmatpush2.bf16.xpose.msra.mxu0 0
        %1552 = vmatprep.subr.bf16.mxu0 0
        %1553 = vmatpush2.bf16.xpose.msra.mxu0 0
        %1554 = vmatprep.subr.bf16.mxu0 0
        %1555 = vmatpush2.bf16.xpose.msra.mxu0 0
        %1556 = vmatprep.subr.bf16.mxu0 0
        %1557 = vmatpush2.bf16.xpose.msra.mxu0 0
        %1558 = vmatprep.mubr.bf16.mxu0 0
        %1559 = vmatmul.mubr.bf16.gmra.mxu0 %v1521
        %v1560 = vpop.f32.mrf.mxu0
        %v1561 = vadd.f32 0.0, %v1560
        %v1562 = vpop.f32.mrf.mxu0
        %v1563 = vpop.f32.mrf.mxu0
        %v1564 = vpop.f32.mrf.mxu0
        %1565 = vdwg.mxu0
        %v1567 = vsel %vm1519, %v924, 0
        %v1570 = vsel %vm1519, %v1220, 0
        %1572 = vmatprep.subr.bf16.mxu0 0
        %1573 = vmatpush1.bf16.xpose.msra.mxu0 0
        %1574 = vmatprep.subr.bf16.mxu0 0
        %1575 = vmatpush1.bf16.xpose.msra.mxu0 0
        %1576 = vmatprep.subr.bf16.mxu0 0
        %1577 = vmatpush1.bf16.xpose.msra.mxu0 0
        %1578 = vmatprep.subr.bf16.mxu0 0
        %1579 = vmatpush1.bf16.xpose.msra.mxu0 0
        %1580 = vmatprep.subr.bf16.mxu0 0
        %1581 = vmatpush1.bf16.xpose.msra.mxu0 0
        %1582 = vmatprep.subr.bf16.mxu0 0
        %1583 = vmatpush1.bf16.xpose.msra.mxu0 0
        %1584 = vmatprep.subr.bf16.mxu0 0
        %1585 = vmatpush1.bf16.xpose.msra.mxu0 0
        %1586 = vmatprep.subr.bf16.mxu0 0
        %1587 = vmatpush1.bf16.xpose.msra.mxu0 %v1570
        %1588 = vmatprep.subr.bf16.mxu0 0
        %1589 = vmatpush2.bf16.xpose.msra.mxu0 0
        %1590 = vmatprep.subr.bf16.mxu0 0
        %1591 = vmatpush2.bf16.xpose.msra.mxu0 0
        %1592 = vmatprep.subr.bf16.mxu0 0
        %1593 = vmatpush2.bf16.xpose.msra.mxu0 0
        %1594 = vmatprep.subr.bf16.mxu0 0
        %1595 = vmatpush2.bf16.xpose.msra.mxu0 0
        %1596 = vmatprep.subr.bf16.mxu0 0
        %1597 = vmatpush2.bf16.xpose.msra.mxu0 0
        %1598 = vmatprep.subr.bf16.mxu0 0
        %1599 = vmatpush2.bf16.xpose.msra.mxu0 0
        %1600 = vmatprep.subr.bf16.mxu0 0
        %1601 = vmatpush2.bf16.xpose.msra.mxu0 0
        %1602 = vmatprep.subr.bf16.mxu0 0
        %1603 = vmatpush2.bf16.xpose.msra.mxu0 0
        %1604 = vmatprep.mubr.bf16.mxu0 0
        %1605 = vmatmul.mubr.bf16.gmra.mxu0 %v1567
        %v1606 = vpop.f32.mrf.mxu0
        %v1607 = vadd.f32 0.0, %v1606
        %v1608 = vpop.f32.mrf.mxu0
        %v1609 = vpop.f32.mrf.mxu0
        %v1610 = vpop.f32.mrf.mxu0
        %1611 = vdwg.mxu0
        %v1613 = vsel %vm1519, %v925, 0
        %v1616 = vsel %vm1519, %v1221, 0
        %1618 = vmatprep.subr.bf16.mxu0 0
        %1619 = vmatpush1.bf16.xpose.msra.mxu0 0
        %1620 = vmatprep.subr.bf16.mxu0 0
        %1621 = vmatpush1.bf16.xpose.msra.mxu0 0
        %1622 = vmatprep.subr.bf16.mxu0 0
        %1623 = vmatpush1.bf16.xpose.msra.mxu0 0
        %1624 = vmatprep.subr.bf16.mxu0 0
        %1625 = vmatpush1.bf16.xpose.msra.mxu0 0
        %1626 = vmatprep.subr.bf16.mxu0 0
        %1627 = vmatpush1.bf16.xpose.msra.mxu0 0
        %1628 = vmatprep.subr.bf16.mxu0 0
        %1629 = vmatpush1.bf16.xpose.msra.mxu0 0
        %1630 = vmatprep.subr.bf16.mxu0 0
        %1631 = vmatpush1.bf16.xpose.msra.mxu0 0
        %1632 = vmatprep.subr.bf16.mxu0 0
        %1633 = vmatpush1.bf16.xpose.msra.mxu0 %v1616
        %1634 = vmatprep.subr.bf16.mxu0 0
        %1635 = vmatpush2.bf16.xpose.msra.mxu0 0
        %1636 = vmatprep.subr.bf16.mxu0 0
        %1637 = vmatpush2.bf16.xpose.msra.mxu0 0
        %1638 = vmatprep.subr.bf16.mxu0 0
        %1639 = vmatpush2.bf16.xpose.msra.mxu0 0
        %1640 = vmatprep.subr.bf16.mxu0 0
        %1641 = vmatpush2.bf16.xpose.msra.mxu0 0
        %1642 = vmatprep.subr.bf16.mxu0 0
        %1643 = vmatpush2.bf16.xpose.msra.mxu0 0
        %1644 = vmatprep.subr.bf16.mxu0 0
        %1645 = vmatpush2.bf16.xpose.msra.mxu0 0
        %1646 = vmatprep.subr.bf16.mxu0 0
        %1647 = vmatpush2.bf16.xpose.msra.mxu0 0
        %1648 = vmatprep.subr.bf16.mxu0 0
        %1649 = vmatpush2.bf16.xpose.msra.mxu0 0
        %1650 = vmatprep.mubr.bf16.mxu0 0
        %1651 = vmatmul.mubr.bf16.gmra.mxu0 %v1613
        %v1652 = vpop.f32.mrf.mxu0
        %v1653 = vadd.f32 0.0, %v1652
        %v1654 = vpop.f32.mrf.mxu0
        %v1655 = vpop.f32.mrf.mxu0
        %v1656 = vpop.f32.mrf.mxu0
        %1657 = vdwg.mxu0
        %v1659 = vsel %vm1519, %v926, 0
        %v1662 = vsel %vm1519, %v1222, 0
        %1664 = vmatprep.subr.bf16.mxu0 0
        %1665 = vmatpush1.bf16.xpose.msra.mxu0 0
        %1666 = vmatprep.subr.bf16.mxu0 0
        %1667 = vmatpush1.bf16.xpose.msra.mxu0 0
        %1668 = vmatprep.subr.bf16.mxu0 0
        %1669 = vmatpush1.bf16.xpose.msra.mxu0 0
        %1670 = vmatprep.subr.bf16.mxu0 0
        %1671 = vmatpush1.bf16.xpose.msra.mxu0 0
        %1672 = vmatprep.subr.bf16.mxu0 0
        %1673 = vmatpush1.bf16.xpose.msra.mxu0 0
        %1674 = vmatprep.subr.bf16.mxu0 0
        %1675 = vmatpush1.bf16.xpose.msra.mxu0 0
        %1676 = vmatprep.subr.bf16.mxu0 0
        %1677 = vmatpush1.bf16.xpose.msra.mxu0 0
        %1678 = vmatprep.subr.bf16.mxu0 0
        %1679 = vmatpush1.bf16.xpose.msra.mxu0 %v1662
        %1680 = vmatprep.subr.bf16.mxu0 0
        %1681 = vmatpush2.bf16.xpose.msra.mxu0 0
        %1682 = vmatprep.subr.bf16.mxu0 0
        %1683 = vmatpush2.bf16.xpose.msra.mxu0 0
        %1684 = vmatprep.subr.bf16.mxu0 0
        %1685 = vmatpush2.bf16.xpose.msra.mxu0 0
        %1686 = vmatprep.subr.bf16.mxu0 0
        %1687 = vmatpush2.bf16.xpose.msra.mxu0 0
        %1688 = vmatprep.subr.bf16.mxu0 0
        %1689 = vmatpush2.bf16.xpose.msra.mxu0 0
        %1690 = vmatprep.subr.bf16.mxu0 0
        %1691 = vmatpush2.bf16.xpose.msra.mxu0 0
        %1692 = vmatprep.subr.bf16.mxu0 0
        %1693 = vmatpush2.bf16.xpose.msra.mxu0 0
        %1694 = vmatprep.subr.bf16.mxu0 0
        %1695 = vmatpush2.bf16.xpose.msra.mxu0 0
        %1696 = vmatprep.mubr.bf16.mxu0 0
        %1697 = vmatmul.mubr.bf16.gmra.mxu0 %v1659
        %v1698 = vpop.f32.mrf.mxu0
        %v1699 = vadd.f32 0.0, %v1698
        %v1700 = vpop.f32.mrf.mxu0
        %v1701 = vpop.f32.mrf.mxu0
        %v1702 = vpop.f32.mrf.mxu0
        %1703 = vdwg.mxu0
        %v1704 = vcombine.low %v1561, %v1653
        %v1705 = vcombine.high %v1561, %v1653
        %v1707 = vunpack.c.l.s4 1983009808
        %v1708 = vunpack.c.0.s8 %v1707
        %v1709 = vlaneseq
        %v1710 = vshrl.u32 %v1709, 7
        %v1711 = vsub.s32 %v1708, %v1710
        %v1712 = vrot.slane %v1704, %v1711
        %v1714 = vunpack.c.l.s4 1983009808
        %v1715 = vunpack.c.0.s8 %v1714
        %v1716 = vlaneseq
        %v1717 = vshrl.u32 %v1716, 7
        %v1718 = vsub.s32 %v1715, %v1717
        %v1719 = vrot.slane %v1705, %v1718
        %v1720 = vcombine.low %v1607, %v1699
        %v1721 = vcombine.high %v1607, %v1699
        %v1723 = vunpack.c.l.s4 1983009808
        %v1724 = vunpack.c.0.s8 %v1723
        %v1725 = vlaneseq
        %v1726 = vshrl.u32 %v1725, 7
        %v1727 = vsub.s32 %v1724, %v1726
        %v1728 = vrot.slane %v1720, %v1727
        %v1730 = vunpack.c.l.s4 1983009808
        %v1731 = vunpack.c.0.s8 %v1730
        %v1732 = vlaneseq
        %v1733 = vshrl.u32 %v1732, 7
        %v1734 = vsub.s32 %v1731, %v1733
        %v1735 = vrot.slane %v1721, %v1734
        %v1736 = vcombine.low %v1712, %v1728
        %v1737 = vcombine.high %v1712, %v1728
        %v1739 = vunpack.c.l.s4 1934713408
        %v1740 = vunpack.c.0.s8 %v1739
        %v1741 = vlaneseq
        %v1742 = vshrl.u32 %v1741, 7
        %v1743 = vsub.s32 %v1740, %v1742
        %v1744 = vrot.slane %v1736, %v1743
        %v1746 = vunpack.c.l.s4 1934713408
        %v1747 = vunpack.c.0.s8 %v1746
        %v1748 = vlaneseq
        %v1749 = vshrl.u32 %v1748, 7
        %v1750 = vsub.s32 %v1747, %v1749
        %v1751 = vrot.slane %v1737, %v1750
        %v1752 = vcombine.low %v1719, %v1735
        %v1753 = vcombine.high %v1719, %v1735
        %v1755 = vunpack.c.l.s4 1934713408
        %v1756 = vunpack.c.0.s8 %v1755
        %v1757 = vlaneseq
        %v1758 = vshrl.u32 %v1757, 7
        %v1759 = vsub.s32 %v1756, %v1758
        %v1760 = vrot.slane %v1752, %v1759
        %v1762 = vunpack.c.l.s4 1934713408
        %v1763 = vunpack.c.0.s8 %v1762
        %v1764 = vlaneseq
        %v1765 = vshrl.u32 %v1764, 7
        %v1766 = vsub.s32 %v1763, %v1765
        %v1767 = vrot.slane %v1753, %v1766
        %v1768 = vcombine.high %v1744, 0.0
        %v1769 = vcombine.high %v1751, 0.0
        %v1770 = vcombine.high %v1760, 0.0
        %v1771 = vcombine.high %v1767, 0.0
        %v1773 = vsel %vm1519, %v847, 0
        %vm1775 = vcmask 1043456
        %v1777 = vsel %vm1775, %v761, 0
        %1779 = vmatprep.subr.bf16.mxu0 0
        %1780 = vmatpush1.bf16.msra.mxu0 0
        %1781 = vmatprep.subr.bf16.mxu0 0
        %1782 = vmatpush1.bf16.msra.mxu0 0
        %1783 = vmatprep.subr.bf16.mxu0 0
        %1784 = vmatpush1.bf16.msra.mxu0 0
        %1785 = vmatprep.subr.bf16.mxu0 0
        %1786 = vmatpush1.bf16.msra.mxu0 0
        %1787 = vmatprep.subr.bf16.mxu0 0
        %1788 = vmatpush1.bf16.msra.mxu0 0
        %1789 = vmatprep.subr.bf16.mxu0 0
        %1790 = vmatpush1.bf16.msra.mxu0 0
        %1791 = vmatprep.subr.bf16.mxu0 0
        %1792 = vmatpush1.bf16.msra.mxu0 0
        %1793 = vmatprep.subr.bf16.mxu0 0
        %1794 = vmatpush1.bf16.msra.mxu0 %v1777
        %1795 = vmatprep.subr.bf16.mxu0 0
        %1796 = vmatpush2.bf16.msra.mxu0 0
        %1797 = vmatprep.subr.bf16.mxu0 0
        %1798 = vmatpush2.bf16.msra.mxu0 0
        %1799 = vmatprep.subr.bf16.mxu0 0
        %1800 = vmatpush2.bf16.msra.mxu0 0
        %1801 = vmatprep.subr.bf16.mxu0 0
        %1802 = vmatpush2.bf16.msra.mxu0 0
        %1803 = vmatprep.subr.bf16.mxu0 0
        %1804 = vmatpush2.bf16.msra.mxu0 0
        %1805 = vmatprep.subr.bf16.mxu0 0
        %1806 = vmatpush2.bf16.msra.mxu0 0
        %1807 = vmatprep.subr.bf16.mxu0 0
        %1808 = vmatpush2.bf16.msra.mxu0 0
        %1809 = vmatprep.subr.bf16.mxu0 0
        %1810 = vmatpush2.bf16.msra.mxu0 0
        %1811 = vmatprep.mubr.bf16.mxu0 0
        %1812 = vmatmul.mubr.bf16.gmra.mxu0 %v1773
        %v1813 = vpop.f32.mrf.mxu0
        %v1814 = vadd.f32 %v1744, %v1813
        %v1815 = vpop.f32.mrf.mxu0
        %v1816 = vpop.f32.mrf.mxu0
        %v1817 = vpop.f32.mrf.mxu0
        %1818 = vdwg.mxu0
        %v1820 = vsel %vm1519, %v848, 0
        %v1823 = vsel %vm1775, %v762, 0
        %1825 = vmatprep.subr.bf16.mxu0 0
        %1826 = vmatpush1.bf16.msra.mxu0 0
        %1827 = vmatprep.subr.bf16.mxu0 0
        %1828 = vmatpush1.bf16.msra.mxu0 0
        %1829 = vmatprep.subr.bf16.mxu0 0
        %1830 = vmatpush1.bf16.msra.mxu0 0
        %1831 = vmatprep.subr.bf16.mxu0 0
        %1832 = vmatpush1.bf16.msra.mxu0 0
        %1833 = vmatprep.subr.bf16.mxu0 0
        %1834 = vmatpush1.bf16.msra.mxu0 0
        %1835 = vmatprep.subr.bf16.mxu0 0
        %1836 = vmatpush1.bf16.msra.mxu0 0
        %1837 = vmatprep.subr.bf16.mxu0 0
        %1838 = vmatpush1.bf16.msra.mxu0 0
        %1839 = vmatprep.subr.bf16.mxu0 0
        %1840 = vmatpush1.bf16.msra.mxu0 %v1823
        %1841 = vmatprep.subr.bf16.mxu0 0
        %1842 = vmatpush2.bf16.msra.mxu0 0
        %1843 = vmatprep.subr.bf16.mxu0 0
        %1844 = vmatpush2.bf16.msra.mxu0 0
        %1845 = vmatprep.subr.bf16.mxu0 0
        %1846 = vmatpush2.bf16.msra.mxu0 0
        %1847 = vmatprep.subr.bf16.mxu0 0
        %1848 = vmatpush2.bf16.msra.mxu0 0
        %1849 = vmatprep.subr.bf16.mxu0 0
        %1850 = vmatpush2.bf16.msra.mxu0 0
        %1851 = vmatprep.subr.bf16.mxu0 0
        %1852 = vmatpush2.bf16.msra.mxu0 0
        %1853 = vmatprep.subr.bf16.mxu0 0
        %1854 = vmatpush2.bf16.msra.mxu0 0
        %1855 = vmatprep.subr.bf16.mxu0 0
        %1856 = vmatpush2.bf16.msra.mxu0 0
        %1857 = vmatprep.mubr.bf16.mxu0 0
        %1858 = vmatmul.mubr.bf16.gmra.mxu0 %v1820
        %v1859 = vpop.f32.mrf.mxu0
        %v1860 = vadd.f32 %v1768, %v1859
        %v1861 = vpop.f32.mrf.mxu0
        %v1862 = vpop.f32.mrf.mxu0
        %v1863 = vpop.f32.mrf.mxu0
        %1864 = vdwg.mxu0
        %v1866 = vsel %vm1519, %v849, 0
        %v1869 = vsel %vm1775, %v763, 0
        %1871 = vmatprep.subr.bf16.mxu0 0
        %1872 = vmatpush1.bf16.msra.mxu0 0
        %1873 = vmatprep.subr.bf16.mxu0 0
        %1874 = vmatpush1.bf16.msra.mxu0 0
        %1875 = vmatprep.subr.bf16.mxu0 0
        %1876 = vmatpush1.bf16.msra.mxu0 0
        %1877 = vmatprep.subr.bf16.mxu0 0
        %1878 = vmatpush1.bf16.msra.mxu0 0
        %1879 = vmatprep.subr.bf16.mxu0 0
        %1880 = vmatpush1.bf16.msra.mxu0 0
        %1881 = vmatprep.subr.bf16.mxu0 0
        %1882 = vmatpush1.bf16.msra.mxu0 0
        %1883 = vmatprep.subr.bf16.mxu0 0
        %1884 = vmatpush1.bf16.msra.mxu0 0
        %1885 = vmatprep.subr.bf16.mxu0 0
        %1886 = vmatpush1.bf16.msra.mxu0 %v1869
        %1887 = vmatprep.subr.bf16.mxu0 0
        %1888 = vmatpush2.bf16.msra.mxu0 0
        %1889 = vmatprep.subr.bf16.mxu0 0
        %1890 = vmatpush2.bf16.msra.mxu0 0
        %1891 = vmatprep.subr.bf16.mxu0 0
        %1892 = vmatpush2.bf16.msra.mxu0 0
        %1893 = vmatprep.subr.bf16.mxu0 0
        %1894 = vmatpush2.bf16.msra.mxu0 0
        %1895 = vmatprep.subr.bf16.mxu0 0
        %1896 = vmatpush2.bf16.msra.mxu0 0
        %1897 = vmatprep.subr.bf16.mxu0 0
        %1898 = vmatpush2.bf16.msra.mxu0 0
        %1899 = vmatprep.subr.bf16.mxu0 0
        %1900 = vmatpush2.bf16.msra.mxu0 0
        %1901 = vmatprep.subr.bf16.mxu0 0
        %1902 = vmatpush2.bf16.msra.mxu0 0
        %1903 = vmatprep.mubr.bf16.mxu0 0
        %1904 = vmatmul.mubr.bf16.gmra.mxu0 %v1866
        %v1905 = vpop.f32.mrf.mxu0
        %v1906 = vadd.f32 %v1751, %v1905
        %v1907 = vpop.f32.mrf.mxu0
        %v1908 = vpop.f32.mrf.mxu0
        %v1909 = vpop.f32.mrf.mxu0
        %1910 = vdwg.mxu0
        %v1912 = vsel %vm1519, %v850, 0
        %v1915 = vsel %vm1775, %v764, 0
        %1917 = vmatprep.subr.bf16.mxu0 0
        %1918 = vmatpush1.bf16.msra.mxu0 0
        %1919 = vmatprep.subr.bf16.mxu0 0
        %1920 = vmatpush1.bf16.msra.mxu0 0
        %1921 = vmatprep.subr.bf16.mxu0 0
        %1922 = vmatpush1.bf16.msra.mxu0 0
        %1923 = vmatprep.subr.bf16.mxu0 0
        %1924 = vmatpush1.bf16.msra.mxu0 0
        %1925 = vmatprep.subr.bf16.mxu0 0
        %1926 = vmatpush1.bf16.msra.mxu0 0
        %1927 = vmatprep.subr.bf16.mxu0 0
        %1928 = vmatpush1.bf16.msra.mxu0 0
        %1929 = vmatprep.subr.bf16.mxu0 0
        %1930 = vmatpush1.bf16.msra.mxu0 0
        %1931 = vmatprep.subr.bf16.mxu0 0
        %1932 = vmatpush1.bf16.msra.mxu0 %v1915
        %1933 = vmatprep.subr.bf16.mxu0 0
        %1934 = vmatpush2.bf16.msra.mxu0 0
        %1935 = vmatprep.subr.bf16.mxu0 0
        %1936 = vmatpush2.bf16.msra.mxu0 0
        %1937 = vmatprep.subr.bf16.mxu0 0
        %1938 = vmatpush2.bf16.msra.mxu0 0
        %1939 = vmatprep.subr.bf16.mxu0 0
        %1940 = vmatpush2.bf16.msra.mxu0 0
        %1941 = vmatprep.subr.bf16.mxu0 0
        %1942 = vmatpush2.bf16.msra.mxu0 0
        %1943 = vmatprep.subr.bf16.mxu0 0
        %1944 = vmatpush2.bf16.msra.mxu0 0
        %1945 = vmatprep.subr.bf16.mxu0 0
        %1946 = vmatpush2.bf16.msra.mxu0 0
        %1947 = vmatprep.subr.bf16.mxu0 0
        %1948 = vmatpush2.bf16.msra.mxu0 0
        %1949 = vmatprep.mubr.bf16.mxu0 0
        %1950 = vmatmul.mubr.bf16.gmra.mxu0 %v1912
        %v1951 = vpop.f32.mrf.mxu0
        %v1952 = vadd.f32 %v1769, %v1951
        %v1953 = vpop.f32.mrf.mxu0
        %v1954 = vpop.f32.mrf.mxu0
        %v1955 = vpop.f32.mrf.mxu0
        %1956 = vdwg.mxu0
        %v1958 = vsel %vm1519, %v851, 0
        %v1961 = vsel %vm1775, %v765, 0
        %1963 = vmatprep.subr.bf16.mxu0 0
        %1964 = vmatpush1.bf16.msra.mxu0 0
        %1965 = vmatprep.subr.bf16.mxu0 0
        %1966 = vmatpush1.bf16.msra.mxu0 0
        %1967 = vmatprep.subr.bf16.mxu0 0
        %1968 = vmatpush1.bf16.msra.mxu0 0
        %1969 = vmatprep.subr.bf16.mxu0 0
        %1970 = vmatpush1.bf16.msra.mxu0 0
        %1971 = vmatprep.subr.bf16.mxu0 0
        %1972 = vmatpush1.bf16.msra.mxu0 0
        %1973 = vmatprep.subr.bf16.mxu0 0
        %1974 = vmatpush1.bf16.msra.mxu0 0
        %1975 = vmatprep.subr.bf16.mxu0 0
        %1976 = vmatpush1.bf16.msra.mxu0 0
        %1977 = vmatprep.subr.bf16.mxu0 0
        %1978 = vmatpush1.bf16.msra.mxu0 %v1961
        %1979 = vmatprep.subr.bf16.mxu0 0
        %1980 = vmatpush2.bf16.msra.mxu0 0
        %1981 = vmatprep.subr.bf16.mxu0 0
        %1982 = vmatpush2.bf16.msra.mxu0 0
        %1983 = vmatprep.subr.bf16.mxu0 0
        %1984 = vmatpush2.bf16.msra.mxu0 0
        %1985 = vmatprep.subr.bf16.mxu0 0
        %1986 = vmatpush2.bf16.msra.mxu0 0
        %1987 = vmatprep.subr.bf16.mxu0 0
        %1988 = vmatpush2.bf16.msra.mxu0 0
        %1989 = vmatprep.subr.bf16.mxu0 0
        %1990 = vmatpush2.bf16.msra.mxu0 0
        %1991 = vmatprep.subr.bf16.mxu0 0
        %1992 = vmatpush2.bf16.msra.mxu0 0
        %1993 = vmatprep.subr.bf16.mxu0 0
        %1994 = vmatpush2.bf16.msra.mxu0 0
        %1995 = vmatprep.mubr.bf16.mxu0 0
        %1996 = vmatmul.mubr.bf16.gmra.mxu0 %v1958
        %v1997 = vpop.f32.mrf.mxu0
        %v1998 = vadd.f32 %v1760, %v1997
        %v1999 = vpop.f32.mrf.mxu0
        %v2000 = vpop.f32.mrf.mxu0
        %v2001 = vpop.f32.mrf.mxu0
        %2002 = vdwg.mxu0
        %v2004 = vsel %vm1519, %v852, 0
        %v2007 = vsel %vm1775, %v766, 0
        %2009 = vmatprep.subr.bf16.mxu0 0
        %2010 = vmatpush1.bf16.msra.mxu0 0
        %2011 = vmatprep.subr.bf16.mxu0 0
        %2012 = vmatpush1.bf16.msra.mxu0 0
        %2013 = vmatprep.subr.bf16.mxu0 0
        %2014 = vmatpush1.bf16.msra.mxu0 0
        %2015 = vmatprep.subr.bf16.mxu0 0
        %2016 = vmatpush1.bf16.msra.mxu0 0
        %2017 = vmatprep.subr.bf16.mxu0 0
        %2018 = vmatpush1.bf16.msra.mxu0 0
        %2019 = vmatprep.subr.bf16.mxu0 0
        %2020 = vmatpush1.bf16.msra.mxu0 0
        %2021 = vmatprep.subr.bf16.mxu0 0
        %2022 = vmatpush1.bf16.msra.mxu0 0
        %2023 = vmatprep.subr.bf16.mxu0 0
        %2024 = vmatpush1.bf16.msra.mxu0 %v2007
        %2025 = vmatprep.subr.bf16.mxu0 0
        %2026 = vmatpush2.bf16.msra.mxu0 0
        %2027 = vmatprep.subr.bf16.mxu0 0
        %2028 = vmatpush2.bf16.msra.mxu0 0
        %2029 = vmatprep.subr.bf16.mxu0 0
        %2030 = vmatpush2.bf16.msra.mxu0 0
        %2031 = vmatprep.subr.bf16.mxu0 0
        %2032 = vmatpush2.bf16.msra.mxu0 0
        %2033 = vmatprep.subr.bf16.mxu0 0
        %2034 = vmatpush2.bf16.msra.mxu0 0
        %2035 = vmatprep.subr.bf16.mxu0 0
        %2036 = vmatpush2.bf16.msra.mxu0 0
        %2037 = vmatprep.subr.bf16.mxu0 0
        %2038 = vmatpush2.bf16.msra.mxu0 0
        %2039 = vmatprep.subr.bf16.mxu0 0
        %2040 = vmatpush2.bf16.msra.mxu0 0
        %2041 = vmatprep.mubr.bf16.mxu0 0
        %2042 = vmatmul.mubr.bf16.gmra.mxu0 %v2004
        %v2043 = vpop.f32.mrf.mxu0
        %v2044 = vadd.f32 %v1770, %v2043
        %v2045 = vpop.f32.mrf.mxu0
        %v2046 = vpop.f32.mrf.mxu0
        %v2047 = vpop.f32.mrf.mxu0
        %2048 = vdwg.mxu0
        %v2050 = vsel %vm1519, %v853, 0
        %v2053 = vsel %vm1775, %v767, 0
        %2055 = vmatprep.subr.bf16.mxu0 0
        %2056 = vmatpush1.bf16.msra.mxu0 0
        %2057 = vmatprep.subr.bf16.mxu0 0
        %2058 = vmatpush1.bf16.msra.mxu0 0
        %2059 = vmatprep.subr.bf16.mxu0 0
        %2060 = vmatpush1.bf16.msra.mxu0 0
        %2061 = vmatprep.subr.bf16.mxu0 0
        %2062 = vmatpush1.bf16.msra.mxu0 0
        %2063 = vmatprep.subr.bf16.mxu0 0
        %2064 = vmatpush1.bf16.msra.mxu0 0
        %2065 = vmatprep.subr.bf16.mxu0 0
        %2066 = vmatpush1.bf16.msra.mxu0 0
        %2067 = vmatprep.subr.bf16.mxu0 0
        %2068 = vmatpush1.bf16.msra.mxu0 0
        %2069 = vmatprep.subr.bf16.mxu0 0
        %2070 = vmatpush1.bf16.msra.mxu0 %v2053
        %2071 = vmatprep.subr.bf16.mxu0 0
        %2072 = vmatpush2.bf16.msra.mxu0 0
        %2073 = vmatprep.subr.bf16.mxu0 0
        %2074 = vmatpush2.bf16.msra.mxu0 0
        %2075 = vmatprep.subr.bf16.mxu0 0
        %2076 = vmatpush2.bf16.msra.mxu0 0
        %2077 = vmatprep.subr.bf16.mxu0 0
        %2078 = vmatpush2.bf16.msra.mxu0 0
        %2079 = vmatprep.subr.bf16.mxu0 0
        %2080 = vmatpush2.bf16.msra.mxu0 0
        %2081 = vmatprep.subr.bf16.mxu0 0
        %2082 = vmatpush2.bf16.msra.mxu0 0
        %2083 = vmatprep.subr.bf16.mxu0 0
        %2084 = vmatpush2.bf16.msra.mxu0 0
        %2085 = vmatprep.subr.bf16.mxu0 0
        %2086 = vmatpush2.bf16.msra.mxu0 0
        %2087 = vmatprep.mubr.bf16.mxu0 0
        %2088 = vmatmul.mubr.bf16.gmra.mxu0 %v2050
        %v2089 = vpop.f32.mrf.mxu0
        %v2090 = vadd.f32 %v1767, %v2089
        %v2091 = vpop.f32.mrf.mxu0
        %v2092 = vpop.f32.mrf.mxu0
        %v2093 = vpop.f32.mrf.mxu0
        %2094 = vdwg.mxu0
        %v2096 = vsel %vm1519, %v854, 0
        %v2099 = vsel %vm1775, %v768, 0
        %2101 = vmatprep.subr.bf16.mxu0 0
        %2102 = vmatpush1.bf16.msra.mxu0 0
        %2103 = vmatprep.subr.bf16.mxu0 0
        %2104 = vmatpush1.bf16.msra.mxu0 0
        %2105 = vmatprep.subr.bf16.mxu0 0
        %2106 = vmatpush1.bf16.msra.mxu0 0
        %2107 = vmatprep.subr.bf16.mxu0 0
        %2108 = vmatpush1.bf16.msra.mxu0 0
        %2109 = vmatprep.subr.bf16.mxu0 0
        %2110 = vmatpush1.bf16.msra.mxu0 0
        %2111 = vmatprep.subr.bf16.mxu0 0
        %2112 = vmatpush1.bf16.msra.mxu0 0
        %2113 = vmatprep.subr.bf16.mxu0 0
        %2114 = vmatpush1.bf16.msra.mxu0 0
        %2115 = vmatprep.subr.bf16.mxu0 0
        %2116 = vmatpush1.bf16.msra.mxu0 %v2099
        %2117 = vmatprep.subr.bf16.mxu0 0
        %2118 = vmatpush2.bf16.msra.mxu0 0
        %2119 = vmatprep.subr.bf16.mxu0 0
        %2120 = vmatpush2.bf16.msra.mxu0 0
        %2121 = vmatprep.subr.bf16.mxu0 0
        %2122 = vmatpush2.bf16.msra.mxu0 0
        %2123 = vmatprep.subr.bf16.mxu0 0
        %2124 = vmatpush2.bf16.msra.mxu0 0
        %2125 = vmatprep.subr.bf16.mxu0 0
        %2126 = vmatpush2.bf16.msra.mxu0 0
        %2127 = vmatprep.subr.bf16.mxu0 0
        %2128 = vmatpush2.bf16.msra.mxu0 0
        %2129 = vmatprep.subr.bf16.mxu0 0
        %2130 = vmatpush2.bf16.msra.mxu0 0
        %2131 = vmatprep.subr.bf16.mxu0 0
        %2132 = vmatpush2.bf16.msra.mxu0 0
        %2133 = vmatprep.mubr.bf16.mxu0 0
        %2134 = vmatmul.mubr.bf16.gmra.mxu0 %v2096
        %v2135 = vpop.f32.mrf.mxu0
        %v2136 = vadd.f32 %v1771, %v2135
        %v2137 = vpop.f32.mrf.mxu0
        %v2138 = vpop.f32.mrf.mxu0
        %v2139 = vpop.f32.mrf.mxu0
        %2140 = vdwg.mxu0
        %v2141 = vld [vmem:[#allocation5] sm:$0xff]
        %vm2142 = vcmask 125952
        %v2143 = vsel %vm2142, %v1814, -inf
        %2144 = vmax.xlane.f32.xlu0 %v2143
        %v2145 = vpop.xlane.xlu0 %2144
        %v2146 = vsel %vm2142, %v1860, -inf
        %2147 = vmax.xlane.f32.xlu0 %v2146
        %v2148 = vpop.xlane.xlu0 %2147
        %v2149 = vsel %vm2142, %v1906, -inf
        %2150 = vmax.xlane.f32.xlu0 %v2149
        %v2151 = vpop.xlane.xlu0 %2150
        %v2152 = vsel %vm2142, %v1952, -inf
        %2153 = vmax.xlane.f32.xlu0 %v2152
        %v2154 = vpop.xlane.xlu0 %2153
        %v2155 = vsel %vm2142, %v1998, -inf
        %2156 = vmax.xlane.f32.xlu0 %v2155
        %v2157 = vpop.xlane.xlu0 %2156
        %v2158 = vsel %vm2142, %v2044, -inf
        %2159 = vmax.xlane.f32.xlu0 %v2158
        %v2160 = vpop.xlane.xlu0 %2159
        %v2161 = vsel %vm2142, %v2090, -inf
        %2162 = vmax.xlane.f32.xlu0 %v2161
        %v2163 = vpop.xlane.xlu0 %2162
        %v2164 = vsel %vm2142, %v2136, -inf
        %2165 = vmax.xlane.f32.xlu0 %v2164
        %v2166 = vpop.xlane.xlu0 %2165
        %v2175 = vlaneseq
        %v2176 = vand.u32 %v2175, 127
        %v2177 = vlaneseq
        %v2178 = vshrl.u32 %v2177, 7
        %v2179 = vsub.s32 %v2176, %v2178
        %v2180 = vrot.slane %v2145, %v2179
        %v2181 = vlaneseq
        %v2182 = vshrl.u32 %v2181, 7
        %v2183 = vsub.s32 %v2176, %v2182
        %v2184 = vrot.slane %v2148, %v2183
        %v2185 = vlaneseq
        %v2186 = vshrl.u32 %v2185, 7
        %v2187 = vsub.s32 %v2176, %v2186
        %v2188 = vrot.slane %v2151, %v2187
        %v2189 = vlaneseq
        %v2190 = vshrl.u32 %v2189, 7
        %v2191 = vsub.s32 %v2176, %v2190
        %v2192 = vrot.slane %v2154, %v2191
        %v2193 = vlaneseq
        %v2194 = vshrl.u32 %v2193, 7
        %v2195 = vsub.s32 %v2176, %v2194
        %v2196 = vrot.slane %v2157, %v2195
        %v2197 = vlaneseq
        %v2198 = vshrl.u32 %v2197, 7
        %v2199 = vsub.s32 %v2176, %v2198
        %v2200 = vrot.slane %v2160, %v2199
        %v2201 = vlaneseq
        %v2202 = vshrl.u32 %v2201, 7
        %v2203 = vsub.s32 %v2176, %v2202
        %v2204 = vrot.slane %v2163, %v2203
        %v2205 = vlaneseq
        %v2206 = vshrl.u32 %v2205, 7
        %v2207 = vsub.s32 %v2176, %v2206
        %v2208 = vrot.slane %v2166, %v2207
        %vm2209 = vcmask 1041409
        %v2210 = vsel %vm2209, %v2184, %v2180
        %vm2211 = vcmask 1042434
        %v2212 = vsel %vm2211, %v2188, %v2210
        %vm2213 = vcmask 1043459
        %v2214 = vsel %vm2213, %v2192, %v2212
        %vm2215 = vcmask 1044484
        %v2216 = vsel %vm2215, %v2196, %v2214
        %vm2217 = vcmask 1045509
        %v2218 = vsel %vm2217, %v2200, %v2216
        %vm2219 = vcmask 1046534
        %v2220 = vsel %vm2219, %v2204, %v2218
        %vm2221 = vcmask 1047559
        %v2222 = vsel %vm2221, %v2208, %v2220
        %v2224 = vmax.f32 %v2141, %v2222
        %v2225 = vsub.f32 %v2141, %v2224
        %v2226 = vmul.f32 %v2225, 1.442695
        %v2227 = vpow.pop %v2226
        %v2228 = vlaneseq
        %v2229 = vshrl.u32 %v2228, 7
        %v2230 = vsub.s32 0, %v2229
        %v2231 = vrot.slane %v2224, %v2230
        %2233 = vbcast.lane.b32.xlu0 %v2231, 256
        %v2234 = vpop.permute.xlu0 %2233
        %v2235 = vlaneseq
        %v2236 = vshrl.u32 %v2235, 7
        %v2237 = vsub.s32 1, %v2236
        %v2238 = vrot.slane %v2224, %v2237
        %2240 = vbcast.lane.b32.xlu0 %v2238, 256
        %v2241 = vpop.permute.xlu0 %2240
        %v2242 = vlaneseq
        %v2243 = vshrl.u32 %v2242, 7
        %v2244 = vsub.s32 2, %v2243
        %v2245 = vrot.slane %v2224, %v2244
        %2247 = vbcast.lane.b32.xlu0 %v2245, 256
        %v2248 = vpop.permute.xlu0 %2247
        %v2249 = vlaneseq
        %v2250 = vshrl.u32 %v2249, 7
        %v2251 = vsub.s32 3, %v2250
        %v2252 = vrot.slane %v2224, %v2251
        %2254 = vbcast.lane.b32.xlu0 %v2252, 256
        %v2255 = vpop.permute.xlu0 %2254
        %v2256 = vlaneseq
        %v2257 = vshrl.u32 %v2256, 7
        %v2258 = vsub.s32 4, %v2257
        %v2259 = vrot.slane %v2224, %v2258
        %2261 = vbcast.lane.b32.xlu0 %v2259, 256
        %v2262 = vpop.permute.xlu0 %2261
        %v2263 = vlaneseq
        %v2264 = vshrl.u32 %v2263, 7
        %v2265 = vsub.s32 5, %v2264
        %v2266 = vrot.slane %v2224, %v2265
        %2268 = vbcast.lane.b32.xlu0 %v2266, 256
        %v2269 = vpop.permute.xlu0 %2268
        %v2270 = vlaneseq
        %v2271 = vshrl.u32 %v2270, 7
        %v2272 = vsub.s32 6, %v2271
        %v2273 = vrot.slane %v2224, %v2272
        %2275 = vbcast.lane.b32.xlu0 %v2273, 256
        %v2276 = vpop.permute.xlu0 %2275
        %v2277 = vlaneseq
        %v2278 = vshrl.u32 %v2277, 7
        %v2279 = vsub.s32 7, %v2278
        %v2280 = vrot.slane %v2224, %v2279
        %2282 = vbcast.lane.b32.xlu0 %v2280, 256
        %v2283 = vpop.permute.xlu0 %2282
        %v2284 = vsub.f32 %v1814, %v2234
        %v2285 = vsub.f32 %v1860, %v2241
        %v2286 = vsub.f32 %v1906, %v2248
        %v2287 = vsub.f32 %v1952, %v2255
        %v2288 = vsub.f32 %v1998, %v2262
        %v2289 = vsub.f32 %v2044, %v2269
        %v2290 = vsub.f32 %v2090, %v2276
        %v2291 = vsub.f32 %v2136, %v2283
        %v2292 = vmul.f32 %v2284, 1.442695
        %v2293 = vpow.pop %v2292
        %v2294 = vmul.f32 %v2285, 1.442695
        %v2295 = vpow.pop %v2294
        %v2296 = vmul.f32 %v2286, 1.442695
        %v2297 = vpow.pop %v2296
        %v2298 = vmul.f32 %v2287, 1.442695
        %v2299 = vpow.pop %v2298
        %v2300 = vmul.f32 %v2288, 1.442695
        %v2301 = vpow.pop %v2300
        %v2302 = vmul.f32 %v2289, 1.442695
        %v2303 = vpow.pop %v2302
        %v2304 = vmul.f32 %v2290, 1.442695
        %v2305 = vpow.pop %v2304
        %v2306 = vmul.f32 %v2291, 1.442695
        %v2307 = vpow.pop %v2306
        %v2308 = vld [vmem:[#allocation6] sm:$0xff]
        %v2309 = vmul.f32 %v2227, %v2308
        %v2310 = vsel %vm2142, %v2293, 0.0
        %2311 = vadd.xlane.f32.xlu0 %v2310
        %v2312 = vpop.xlane.xlu0 %2311
        %v2313 = vsel %vm2142, %v2295, 0.0
        %2314 = vadd.xlane.f32.xlu0 %v2313
        %v2315 = vpop.xlane.xlu0 %2314
        %v2316 = vsel %vm2142, %v2297, 0.0
        %2317 = vadd.xlane.f32.xlu0 %v2316
        %v2318 = vpop.xlane.xlu0 %2317
        %v2319 = vsel %vm2142, %v2299, 0.0
        %2320 = vadd.xlane.f32.xlu0 %v2319
        %v2321 = vpop.xlane.xlu0 %2320
        %v2322 = vsel %vm2142, %v2301, 0.0
        %2323 = vadd.xlane.f32.xlu0 %v2322
        %v2324 = vpop.xlane.xlu0 %2323
        %v2325 = vsel %vm2142, %v2303, 0.0
        %2326 = vadd.xlane.f32.xlu0 %v2325
        %v2327 = vpop.xlane.xlu0 %2326
        %v2328 = vsel %vm2142, %v2305, 0.0
        %2329 = vadd.xlane.f32.xlu0 %v2328
        %v2330 = vpop.xlane.xlu0 %2329
        %v2331 = vsel %vm2142, %v2307, 0.0
        %2332 = vadd.xlane.f32.xlu0 %v2331
        %v2333 = vpop.xlane.xlu0 %2332
        %v2342 = vlaneseq
        %v2343 = vshrl.u32 %v2342, 7
        %v2344 = vsub.s32 %v2176, %v2343
        %v2345 = vrot.slane %v2312, %v2344
        %v2346 = vlaneseq
        %v2347 = vshrl.u32 %v2346, 7
        %v2348 = vsub.s32 %v2176, %v2347
        %v2349 = vrot.slane %v2315, %v2348
        %v2350 = vlaneseq
        %v2351 = vshrl.u32 %v2350, 7
        %v2352 = vsub.s32 %v2176, %v2351
        %v2353 = vrot.slane %v2318, %v2352
        %v2354 = vlaneseq
        %v2355 = vshrl.u32 %v2354, 7
        %v2356 = vsub.s32 %v2176, %v2355
        %v2357 = vrot.slane %v2321, %v2356
        %v2358 = vlaneseq
        %v2359 = vshrl.u32 %v2358, 7
        %v2360 = vsub.s32 %v2176, %v2359
        %v2361 = vrot.slane %v2324, %v2360
        %v2362 = vlaneseq
        %v2363 = vshrl.u32 %v2362, 7
        %v2364 = vsub.s32 %v2176, %v2363
        %v2365 = vrot.slane %v2327, %v2364
        %v2366 = vlaneseq
        %v2367 = vshrl.u32 %v2366, 7
        %v2368 = vsub.s32 %v2176, %v2367
        %v2369 = vrot.slane %v2330, %v2368
        %v2370 = vlaneseq
        %v2371 = vshrl.u32 %v2370, 7
        %v2372 = vsub.s32 %v2176, %v2371
        %v2373 = vrot.slane %v2333, %v2372
        %v2374 = vsel %vm2209, %v2349, %v2345
        %v2375 = vsel %vm2211, %v2353, %v2374
        %v2376 = vsel %vm2213, %v2357, %v2375
        %v2377 = vsel %vm2215, %v2361, %v2376
        %v2378 = vsel %vm2217, %v2365, %v2377
        %v2379 = vsel %vm2219, %v2369, %v2378
        %v2380 = vsel %vm2221, %v2373, %v2379
        %v2382 = vadd.f32 %v2309, %v2380
        %vm2383 = vcmask 31744
        %2384 = vst.msk [vmem:[#allocation6] sm:$0xff] %vm2383, %v2382
        %2385 = vst.msk [vmem:[#allocation5] sm:$0xff] %vm2383, %v2224
        %v2386 = vpack.c.bf16 %v2293, %v2293
        %v2387 = vpack.c.bf16 %v2295, %v2295
        %v2388 = vpack.c.bf16 %v2297, %v2297
        %v2389 = vpack.c.bf16 %v2299, %v2299
        %v2390 = vpack.c.bf16 %v2301, %v2301
        %v2391 = vpack.c.bf16 %v2303, %v2303
        %v2392 = vpack.c.bf16 %v2305, %v2305
        %v2393 = vpack.c.bf16 %v2307, %v2307
        %v2394 = vcombine.low %v2293, %v2297
        %v2396 = vunpack.c.l.s4 1983009808
        %v2397 = vunpack.c.0.s8 %v2396
        %v2398 = vlaneseq
        %v2399 = vshrl.u32 %v2398, 7
        %v2400 = vsub.s32 %v2397, %v2399
        %v2401 = vrot.slane %v2394, %v2400
        %v2402 = vcombine.low %v2295, %v2299
        %v2404 = vunpack.c.l.s4 1983009808
        %v2405 = vunpack.c.0.s8 %v2404
        %v2406 = vlaneseq
        %v2407 = vshrl.u32 %v2406, 7
        %v2408 = vsub.s32 %v2405, %v2407
        %v2409 = vrot.slane %v2402, %v2408
        %v2410 = vcombine.low %v2301, %v2305
        %v2412 = vunpack.c.l.s4 1983009808
        %v2413 = vunpack.c.0.s8 %v2412
        %v2414 = vlaneseq
        %v2415 = vshrl.u32 %v2414, 7
        %v2416 = vsub.s32 %v2413, %v2415
        %v2417 = vrot.slane %v2410, %v2416
        %v2418 = vcombine.low %v2303, %v2307
        %v2420 = vunpack.c.l.s4 1983009808
        %v2421 = vunpack.c.0.s8 %v2420
        %v2422 = vlaneseq
        %v2423 = vshrl.u32 %v2422, 7
        %v2424 = vsub.s32 %v2421, %v2423
        %v2425 = vrot.slane %v2418, %v2424
        %v2426 = vcombine.low %v2401, %v2409
        %v2427 = vcombine.high %v2401, %v2409
        %v2429 = vunpack.c.l.s4 1934713408
        %v2430 = vunpack.c.0.s8 %v2429
        %v2431 = vlaneseq
        %v2432 = vshrl.u32 %v2431, 7
        %v2433 = vsub.s32 %v2430, %v2432
        %v2434 = vrot.slane %v2426, %v2433
        %v2436 = vunpack.c.l.s4 1934713408
        %v2437 = vunpack.c.0.s8 %v2436
        %v2438 = vlaneseq
        %v2439 = vshrl.u32 %v2438, 7
        %v2440 = vsub.s32 %v2437, %v2439
        %v2441 = vrot.slane %v2427, %v2440
        %v2442 = vcombine.low %v2417, %v2425
        %v2443 = vcombine.high %v2417, %v2425
        %v2445 = vunpack.c.l.s4 1934713408
        %v2446 = vunpack.c.0.s8 %v2445
        %v2447 = vlaneseq
        %v2448 = vshrl.u32 %v2447, 7
        %v2449 = vsub.s32 %v2446, %v2448
        %v2450 = vrot.slane %v2442, %v2449
        %v2452 = vunpack.c.l.s4 1934713408
        %v2453 = vunpack.c.0.s8 %v2452
        %v2454 = vlaneseq
        %v2455 = vshrl.u32 %v2454, 7
        %v2456 = vsub.s32 %v2453, %v2455
        %v2457 = vrot.slane %v2443, %v2456
        %v2458 = vcombine.low %v2434, %v2450
        %v2459 = vcombine.high %v2434, %v2450
        %v2460 = vcombine.low %v2441, %v2457
        %v2461 = vcombine.high %v2441, %v2457
        %v2462 = vpack.c.bf16 %v2458, %v2458
        %v2463 = vpack.c.bf16 %v2459, %v2459
        %v2464 = vpack.c.bf16 %v2460, %v2460
        %v2465 = vpack.c.bf16 %v2461, %v2461
        %vm2466 = vcmask 130048
        %v2468 = vsel %vm2466, %v2462, 0
        %2470 = vmatprep.subr.bf16.mxu0 0
        %2471 = vmatpush1.bf16.msra.mxu0 0
        %2472 = vmatprep.subr.bf16.mxu0 0
        %2473 = vmatpush1.bf16.msra.mxu0 0
        %2474 = vmatprep.subr.bf16.mxu0 0
        %2475 = vmatpush1.bf16.msra.mxu0 0
        %2476 = vmatprep.subr.bf16.mxu0 0
        %2477 = vmatpush1.bf16.msra.mxu0 0
        %2478 = vmatprep.subr.bf16.mxu0 0
        %2479 = vmatpush1.bf16.msra.mxu0 0
        %2480 = vmatprep.subr.bf16.mxu0 0
        %2481 = vmatpush1.bf16.msra.mxu0 0
        %2482 = vmatprep.subr.bf16.mxu0 0
        %2483 = vmatpush1.bf16.msra.mxu0 0
        %2484 = vmatprep.subr.bf16.mxu0 0
        %2485 = vmatpush1.bf16.msra.mxu0 %v1515
        %2486 = vmatprep.subr.bf16.mxu0 0
        %2487 = vmatpush2.bf16.msra.mxu0 0
        %2488 = vmatprep.subr.bf16.mxu0 0
        %2489 = vmatpush2.bf16.msra.mxu0 0
        %2490 = vmatprep.subr.bf16.mxu0 0
        %2491 = vmatpush2.bf16.msra.mxu0 0
        %2492 = vmatprep.subr.bf16.mxu0 0
        %2493 = vmatpush2.bf16.msra.mxu0 0
        %2494 = vmatprep.subr.bf16.mxu0 0
        %2495 = vmatpush2.bf16.msra.mxu0 0
        %2496 = vmatprep.subr.bf16.mxu0 0
        %2497 = vmatpush2.bf16.msra.mxu0 0
        %2498 = vmatprep.subr.bf16.mxu0 0
        %2499 = vmatpush2.bf16.msra.mxu0 0
        %2500 = vmatprep.subr.bf16.mxu0 0
        %2501 = vmatpush2.bf16.msra.mxu0 0
        %2502 = vmatprep.mubr.bf16.mxu0 0
        %2503 = vmatmul.mubr.bf16.gmra.mxu0 %v2468
        %v2504 = vpop.f32.mrf.mxu0
        %v2505 = vadd.f32 0.0, %v2504
        %v2506 = vpop.f32.mrf.mxu0
        %v2507 = vpop.f32.mrf.mxu0
        %v2508 = vpop.f32.mrf.mxu0
        %2509 = vdwg.mxu0
        %v2511 = vsel %vm2466, %v2463, 0
        %2513 = vmatprep.subr.bf16.mxu0 0
        %2514 = vmatpush1.bf16.msra.mxu0 0
        %2515 = vmatprep.subr.bf16.mxu0 0
        %2516 = vmatpush1.bf16.msra.mxu0 0
        %2517 = vmatprep.subr.bf16.mxu0 0
        %2518 = vmatpush1.bf16.msra.mxu0 0
        %2519 = vmatprep.subr.bf16.mxu0 0
        %2520 = vmatpush1.bf16.msra.mxu0 0
        %2521 = vmatprep.subr.bf16.mxu0 0
        %2522 = vmatpush1.bf16.msra.mxu0 0
        %2523 = vmatprep.subr.bf16.mxu0 0
        %2524 = vmatpush1.bf16.msra.mxu0 0
        %2525 = vmatprep.subr.bf16.mxu0 0
        %2526 = vmatpush1.bf16.msra.mxu0 0
        %2527 = vmatprep.subr.bf16.mxu0 0
        %2528 = vmatpush1.bf16.msra.mxu0 %v1516
        %2529 = vmatprep.subr.bf16.mxu0 0
        %2530 = vmatpush2.bf16.msra.mxu0 0
        %2531 = vmatprep.subr.bf16.mxu0 0
        %2532 = vmatpush2.bf16.msra.mxu0 0
        %2533 = vmatprep.subr.bf16.mxu0 0
        %2534 = vmatpush2.bf16.msra.mxu0 0
        %2535 = vmatprep.subr.bf16.mxu0 0
        %2536 = vmatpush2.bf16.msra.mxu0 0
        %2537 = vmatprep.subr.bf16.mxu0 0
        %2538 = vmatpush2.bf16.msra.mxu0 0
        %2539 = vmatprep.subr.bf16.mxu0 0
        %2540 = vmatpush2.bf16.msra.mxu0 0
        %2541 = vmatprep.subr.bf16.mxu0 0
        %2542 = vmatpush2.bf16.msra.mxu0 0
        %2543 = vmatprep.subr.bf16.mxu0 0
        %2544 = vmatpush2.bf16.msra.mxu0 0
        %2545 = vmatprep.mubr.bf16.mxu0 0
        %2546 = vmatmul.mubr.bf16.gmra.mxu0 %v2511
        %v2547 = vpop.f32.mrf.mxu0
        %v2548 = vadd.f32 0.0, %v2547
        %v2549 = vpop.f32.mrf.mxu0
        %v2550 = vpop.f32.mrf.mxu0
        %v2551 = vpop.f32.mrf.mxu0
        %2552 = vdwg.mxu0
        %v2554 = vsel %vm2466, %v2464, 0
        %2556 = vmatprep.subr.bf16.mxu0 0
        %2557 = vmatpush1.bf16.msra.mxu0 0
        %2558 = vmatprep.subr.bf16.mxu0 0
        %2559 = vmatpush1.bf16.msra.mxu0 0
        %2560 = vmatprep.subr.bf16.mxu0 0
        %2561 = vmatpush1.bf16.msra.mxu0 0
        %2562 = vmatprep.subr.bf16.mxu0 0
        %2563 = vmatpush1.bf16.msra.mxu0 0
        %2564 = vmatprep.subr.bf16.mxu0 0
        %2565 = vmatpush1.bf16.msra.mxu0 0
        %2566 = vmatprep.subr.bf16.mxu0 0
        %2567 = vmatpush1.bf16.msra.mxu0 0
        %2568 = vmatprep.subr.bf16.mxu0 0
        %2569 = vmatpush1.bf16.msra.mxu0 0
        %2570 = vmatprep.subr.bf16.mxu0 0
        %2571 = vmatpush1.bf16.msra.mxu0 %v1517
        %2572 = vmatprep.subr.bf16.mxu0 0
        %2573 = vmatpush2.bf16.msra.mxu0 0
        %2574 = vmatprep.subr.bf16.mxu0 0
        %2575 = vmatpush2.bf16.msra.mxu0 0
        %2576 = vmatprep.subr.bf16.mxu0 0
        %2577 = vmatpush2.bf16.msra.mxu0 0
        %2578 = vmatprep.subr.bf16.mxu0 0
        %2579 = vmatpush2.bf16.msra.mxu0 0
        %2580 = vmatprep.subr.bf16.mxu0 0
        %2581 = vmatpush2.bf16.msra.mxu0 0
        %2582 = vmatprep.subr.bf16.mxu0 0
        %2583 = vmatpush2.bf16.msra.mxu0 0
        %2584 = vmatprep.subr.bf16.mxu0 0
        %2585 = vmatpush2.bf16.msra.mxu0 0
        %2586 = vmatprep.subr.bf16.mxu0 0
        %2587 = vmatpush2.bf16.msra.mxu0 0
        %2588 = vmatprep.mubr.bf16.mxu0 0
        %2589 = vmatmul.mubr.bf16.gmra.mxu0 %v2554
        %v2590 = vpop.f32.mrf.mxu0
        %v2591 = vadd.f32 0.0, %v2590
        %v2592 = vpop.f32.mrf.mxu0
        %v2593 = vpop.f32.mrf.mxu0
        %v2594 = vpop.f32.mrf.mxu0
        %2595 = vdwg.mxu0
        %v2597 = vsel %vm2466, %v2465, 0
        %2599 = vmatprep.subr.bf16.mxu0 0
        %2600 = vmatpush1.bf16.msra.mxu0 0
        %2601 = vmatprep.subr.bf16.mxu0 0
        %2602 = vmatpush1.bf16.msra.mxu0 0
        %2603 = vmatprep.subr.bf16.mxu0 0
        %2604 = vmatpush1.bf16.msra.mxu0 0
        %2605 = vmatprep.subr.bf16.mxu0 0
        %2606 = vmatpush1.bf16.msra.mxu0 0
        %2607 = vmatprep.subr.bf16.mxu0 0
        %2608 = vmatpush1.bf16.msra.mxu0 0
        %2609 = vmatprep.subr.bf16.mxu0 0
        %2610 = vmatpush1.bf16.msra.mxu0 0
        %2611 = vmatprep.subr.bf16.mxu0 0
        %2612 = vmatpush1.bf16.msra.mxu0 0
        %2613 = vmatprep.subr.bf16.mxu0 0
        %2614 = vmatpush1.bf16.msra.mxu0 %v1518
        %2615 = vmatprep.subr.bf16.mxu0 0
        %2616 = vmatpush2.bf16.msra.mxu0 0
        %2617 = vmatprep.subr.bf16.mxu0 0
        %2618 = vmatpush2.bf16.msra.mxu0 0
        %2619 = vmatprep.subr.bf16.mxu0 0
        %2620 = vmatpush2.bf16.msra.mxu0 0
        %2621 = vmatprep.subr.bf16.mxu0 0
        %2622 = vmatpush2.bf16.msra.mxu0 0
        %2623 = vmatprep.subr.bf16.mxu0 0
        %2624 = vmatpush2.bf16.msra.mxu0 0
        %2625 = vmatprep.subr.bf16.mxu0 0
        %2626 = vmatpush2.bf16.msra.mxu0 0
        %2627 = vmatprep.subr.bf16.mxu0 0
        %2628 = vmatpush2.bf16.msra.mxu0 0
        %2629 = vmatprep.subr.bf16.mxu0 0
        %2630 = vmatpush2.bf16.msra.mxu0 0
        %2631 = vmatprep.mubr.bf16.mxu0 0
        %2632 = vmatmul.mubr.bf16.gmra.mxu0 %v2597
        %v2633 = vpop.f32.mrf.mxu0
        %v2634 = vadd.f32 0.0, %v2633
        %v2635 = vpop.f32.mrf.mxu0
        %v2636 = vpop.f32.mrf.mxu0
        %v2637 = vpop.f32.mrf.mxu0
        %2638 = vdwg.mxu0
        %v2640 = vsel %vm2466, %v2386, 0
        %v2642 = vsel %vm2466, %v761, 0
        %2644 = vmatprep.subr.bf16.mxu0 0
        %2645 = vmatpush1.bf16.xpose.msra.mxu0 0
        %2646 = vmatprep.subr.bf16.mxu0 0
        %2647 = vmatpush1.bf16.xpose.msra.mxu0 0
        %2648 = vmatprep.subr.bf16.mxu0 0
        %2649 = vmatpush1.bf16.xpose.msra.mxu0 0
        %2650 = vmatprep.subr.bf16.mxu0 0
        %2651 = vmatpush1.bf16.xpose.msra.mxu0 0
        %2652 = vmatprep.subr.bf16.mxu0 0
        %2653 = vmatpush1.bf16.xpose.msra.mxu0 0
        %2654 = vmatprep.subr.bf16.mxu0 0
        %2655 = vmatpush1.bf16.xpose.msra.mxu0 0
        %2656 = vmatprep.subr.bf16.mxu0 0
        %2657 = vmatpush1.bf16.xpose.msra.mxu0 0
        %2658 = vmatprep.subr.bf16.mxu0 0
        %2659 = vmatpush1.bf16.xpose.msra.mxu0 %v2642
        %2660 = vmatprep.subr.bf16.mxu0 0
        %2661 = vmatpush2.bf16.xpose.msra.mxu0 0
        %2662 = vmatprep.subr.bf16.mxu0 0
        %2663 = vmatpush2.bf16.xpose.msra.mxu0 0
        %2664 = vmatprep.subr.bf16.mxu0 0
        %2665 = vmatpush2.bf16.xpose.msra.mxu0 0
        %2666 = vmatprep.subr.bf16.mxu0 0
        %2667 = vmatpush2.bf16.xpose.msra.mxu0 0
        %2668 = vmatprep.subr.bf16.mxu0 0
        %2669 = vmatpush2.bf16.xpose.msra.mxu0 0
        %2670 = vmatprep.subr.bf16.mxu0 0
        %2671 = vmatpush2.bf16.xpose.msra.mxu0 0
        %2672 = vmatprep.subr.bf16.mxu0 0
        %2673 = vmatpush2.bf16.xpose.msra.mxu0 0
        %2674 = vmatprep.subr.bf16.mxu0 0
        %2675 = vmatpush2.bf16.xpose.msra.mxu0 0
        %2676 = vmatprep.mubr.bf16.mxu0 0
        %2677 = vmatmul.mubr.bf16.gmra.mxu0 %v2640
        %v2678 = vpop.f32.mrf.mxu0
        %v2679 = vadd.f32 0.0, %v2678
        %v2680 = vpop.f32.mrf.mxu0
        %v2681 = vpop.f32.mrf.mxu0
        %v2682 = vpop.f32.mrf.mxu0
        %2683 = vdwg.mxu0
        %v2685 = vsel %vm2466, %v2387, 0
        %v2687 = vsel %vm2466, %v762, 0
        %2689 = vmatprep.subr.bf16.mxu0 0
        %2690 = vmatpush1.bf16.xpose.msra.mxu0 0
        %2691 = vmatprep.subr.bf16.mxu0 0
        %2692 = vmatpush1.bf16.xpose.msra.mxu0 0
        %2693 = vmatprep.subr.bf16.mxu0 0
        %2694 = vmatpush1.bf16.xpose.msra.mxu0 0
        %2695 = vmatprep.subr.bf16.mxu0 0
        %2696 = vmatpush1.bf16.xpose.msra.mxu0 0
        %2697 = vmatprep.subr.bf16.mxu0 0
        %2698 = vmatpush1.bf16.xpose.msra.mxu0 0
        %2699 = vmatprep.subr.bf16.mxu0 0
        %2700 = vmatpush1.bf16.xpose.msra.mxu0 0
        %2701 = vmatprep.subr.bf16.mxu0 0
        %2702 = vmatpush1.bf16.xpose.msra.mxu0 0
        %2703 = vmatprep.subr.bf16.mxu0 0
        %2704 = vmatpush1.bf16.xpose.msra.mxu0 %v2687
        %2705 = vmatprep.subr.bf16.mxu0 0
        %2706 = vmatpush2.bf16.xpose.msra.mxu0 0
        %2707 = vmatprep.subr.bf16.mxu0 0
        %2708 = vmatpush2.bf16.xpose.msra.mxu0 0
        %2709 = vmatprep.subr.bf16.mxu0 0
        %2710 = vmatpush2.bf16.xpose.msra.mxu0 0
        %2711 = vmatprep.subr.bf16.mxu0 0
        %2712 = vmatpush2.bf16.xpose.msra.mxu0 0
        %2713 = vmatprep.subr.bf16.mxu0 0
        %2714 = vmatpush2.bf16.xpose.msra.mxu0 0
        %2715 = vmatprep.subr.bf16.mxu0 0
        %2716 = vmatpush2.bf16.xpose.msra.mxu0 0
        %2717 = vmatprep.subr.bf16.mxu0 0
        %2718 = vmatpush2.bf16.xpose.msra.mxu0 0
        %2719 = vmatprep.subr.bf16.mxu0 0
        %2720 = vmatpush2.bf16.xpose.msra.mxu0 0
        %2721 = vmatprep.mubr.bf16.mxu0 0
        %2722 = vmatmul.mubr.bf16.gmra.mxu0 %v2685
        %v2723 = vpop.f32.mrf.mxu0
        %v2724 = vadd.f32 0.0, %v2723
        %v2725 = vpop.f32.mrf.mxu0
        %v2726 = vpop.f32.mrf.mxu0
        %v2727 = vpop.f32.mrf.mxu0
        %2728 = vdwg.mxu0
        %v2730 = vsel %vm2466, %v2388, 0
        %v2732 = vsel %vm2466, %v763, 0
        %2734 = vmatprep.subr.bf16.mxu0 0
        %2735 = vmatpush1.bf16.xpose.msra.mxu0 0
        %2736 = vmatprep.subr.bf16.mxu0 0
        %2737 = vmatpush1.bf16.xpose.msra.mxu0 0
        %2738 = vmatprep.subr.bf16.mxu0 0
        %2739 = vmatpush1.bf16.xpose.msra.mxu0 0
        %2740 = vmatprep.subr.bf16.mxu0 0
        %2741 = vmatpush1.bf16.xpose.msra.mxu0 0
        %2742 = vmatprep.subr.bf16.mxu0 0
        %2743 = vmatpush1.bf16.xpose.msra.mxu0 0
        %2744 = vmatprep.subr.bf16.mxu0 0
        %2745 = vmatpush1.bf16.xpose.msra.mxu0 0
        %2746 = vmatprep.subr.bf16.mxu0 0
        %2747 = vmatpush1.bf16.xpose.msra.mxu0 0
        %2748 = vmatprep.subr.bf16.mxu0 0
        %2749 = vmatpush1.bf16.xpose.msra.mxu0 %v2732
        %2750 = vmatprep.subr.bf16.mxu0 0
        %2751 = vmatpush2.bf16.xpose.msra.mxu0 0
        %2752 = vmatprep.subr.bf16.mxu0 0
        %2753 = vmatpush2.bf16.xpose.msra.mxu0 0
        %2754 = vmatprep.subr.bf16.mxu0 0
        %2755 = vmatpush2.bf16.xpose.msra.mxu0 0
        %2756 = vmatprep.subr.bf16.mxu0 0
        %2757 = vmatpush2.bf16.xpose.msra.mxu0 0
        %2758 = vmatprep.subr.bf16.mxu0 0
        %2759 = vmatpush2.bf16.xpose.msra.mxu0 0
        %2760 = vmatprep.subr.bf16.mxu0 0
        %2761 = vmatpush2.bf16.xpose.msra.mxu0 0
        %2762 = vmatprep.subr.bf16.mxu0 0
        %2763 = vmatpush2.bf16.xpose.msra.mxu0 0
        %2764 = vmatprep.subr.bf16.mxu0 0
        %2765 = vmatpush2.bf16.xpose.msra.mxu0 0
        %2766 = vmatprep.mubr.bf16.mxu0 0
        %2767 = vmatmul.mubr.bf16.gmra.mxu0 %v2730
        %v2768 = vpop.f32.mrf.mxu0
        %v2769 = vadd.f32 0.0, %v2768
        %v2770 = vpop.f32.mrf.mxu0
        %v2771 = vpop.f32.mrf.mxu0
        %v2772 = vpop.f32.mrf.mxu0
        %2773 = vdwg.mxu0
        %v2775 = vsel %vm2466, %v2389, 0
        %v2777 = vsel %vm2466, %v764, 0
        %2779 = vmatprep.subr.bf16.mxu0 0
        %2780 = vmatpush1.bf16.xpose.msra.mxu0 0
        %2781 = vmatprep.subr.bf16.mxu0 0
        %2782 = vmatpush1.bf16.xpose.msra.mxu0 0
        %2783 = vmatprep.subr.bf16.mxu0 0
        %2784 = vmatpush1.bf16.xpose.msra.mxu0 0
        %2785 = vmatprep.subr.bf16.mxu0 0
        %2786 = vmatpush1.bf16.xpose.msra.mxu0 0
        %2787 = vmatprep.subr.bf16.mxu0 0
        %2788 = vmatpush1.bf16.xpose.msra.mxu0 0
        %2789 = vmatprep.subr.bf16.mxu0 0
        %2790 = vmatpush1.bf16.xpose.msra.mxu0 0
        %2791 = vmatprep.subr.bf16.mxu0 0
        %2792 = vmatpush1.bf16.xpose.msra.mxu0 0
        %2793 = vmatprep.subr.bf16.mxu0 0
        %2794 = vmatpush1.bf16.xpose.msra.mxu0 %v2777
        %2795 = vmatprep.subr.bf16.mxu0 0
        %2796 = vmatpush2.bf16.xpose.msra.mxu0 0
        %2797 = vmatprep.subr.bf16.mxu0 0
        %2798 = vmatpush2.bf16.xpose.msra.mxu0 0
        %2799 = vmatprep.subr.bf16.mxu0 0
        %2800 = vmatpush2.bf16.xpose.msra.mxu0 0
        %2801 = vmatprep.subr.bf16.mxu0 0
        %2802 = vmatpush2.bf16.xpose.msra.mxu0 0
        %2803 = vmatprep.subr.bf16.mxu0 0
        %2804 = vmatpush2.bf16.xpose.msra.mxu0 0
        %2805 = vmatprep.subr.bf16.mxu0 0
        %2806 = vmatpush2.bf16.xpose.msra.mxu0 0
        %2807 = vmatprep.subr.bf16.mxu0 0
        %2808 = vmatpush2.bf16.xpose.msra.mxu0 0
        %2809 = vmatprep.subr.bf16.mxu0 0
        %2810 = vmatpush2.bf16.xpose.msra.mxu0 0
        %2811 = vmatprep.mubr.bf16.mxu0 0
        %2812 = vmatmul.mubr.bf16.gmra.mxu0 %v2775
        %v2813 = vpop.f32.mrf.mxu0
        %v2814 = vadd.f32 0.0, %v2813
        %v2815 = vpop.f32.mrf.mxu0
        %v2816 = vpop.f32.mrf.mxu0
        %v2817 = vpop.f32.mrf.mxu0
        %2818 = vdwg.mxu0
        %v2820 = vsel %vm2466, %v2390, 0
        %v2822 = vsel %vm2466, %v765, 0
        %2824 = vmatprep.subr.bf16.mxu0 0
        %2825 = vmatpush1.bf16.xpose.msra.mxu0 0
        %2826 = vmatprep.subr.bf16.mxu0 0
        %2827 = vmatpush1.bf16.xpose.msra.mxu0 0
        %2828 = vmatprep.subr.bf16.mxu0 0
        %2829 = vmatpush1.bf16.xpose.msra.mxu0 0
        %2830 = vmatprep.subr.bf16.mxu0 0
        %2831 = vmatpush1.bf16.xpose.msra.mxu0 0
        %2832 = vmatprep.subr.bf16.mxu0 0
        %2833 = vmatpush1.bf16.xpose.msra.mxu0 0
        %2834 = vmatprep.subr.bf16.mxu0 0
        %2835 = vmatpush1.bf16.xpose.msra.mxu0 0
        %2836 = vmatprep.subr.bf16.mxu0 0
        %2837 = vmatpush1.bf16.xpose.msra.mxu0 0
        %2838 = vmatprep.subr.bf16.mxu0 0
        %2839 = vmatpush1.bf16.xpose.msra.mxu0 %v2822
        %2840 = vmatprep.subr.bf16.mxu0 0
        %2841 = vmatpush2.bf16.xpose.msra.mxu0 0
        %2842 = vmatprep.subr.bf16.mxu0 0
        %2843 = vmatpush2.bf16.xpose.msra.mxu0 0
        %2844 = vmatprep.subr.bf16.mxu0 0
        %2845 = vmatpush2.bf16.xpose.msra.mxu0 0
        %2846 = vmatprep.subr.bf16.mxu0 0
        %2847 = vmatpush2.bf16.xpose.msra.mxu0 0
        %2848 = vmatprep.subr.bf16.mxu0 0
        %2849 = vmatpush2.bf16.xpose.msra.mxu0 0
        %2850 = vmatprep.subr.bf16.mxu0 0
        %2851 = vmatpush2.bf16.xpose.msra.mxu0 0
        %2852 = vmatprep.subr.bf16.mxu0 0
        %2853 = vmatpush2.bf16.xpose.msra.mxu0 0
        %2854 = vmatprep.subr.bf16.mxu0 0
        %2855 = vmatpush2.bf16.xpose.msra.mxu0 0
        %2856 = vmatprep.mubr.bf16.mxu0 0
        %2857 = vmatmul.mubr.bf16.gmra.mxu0 %v2820
        %v2858 = vpop.f32.mrf.mxu0
        %v2859 = vadd.f32 0.0, %v2858
        %v2860 = vpop.f32.mrf.mxu0
        %v2861 = vpop.f32.mrf.mxu0
        %v2862 = vpop.f32.mrf.mxu0
        %2863 = vdwg.mxu0
        %v2865 = vsel %vm2466, %v2391, 0
        %v2867 = vsel %vm2466, %v766, 0
        %2869 = vmatprep.subr.bf16.mxu0 0
        %2870 = vmatpush1.bf16.xpose.msra.mxu0 0
        %2871 = vmatprep.subr.bf16.mxu0 0
        %2872 = vmatpush1.bf16.xpose.msra.mxu0 0
        %2873 = vmatprep.subr.bf16.mxu0 0
        %2874 = vmatpush1.bf16.xpose.msra.mxu0 0
        %2875 = vmatprep.subr.bf16.mxu0 0
        %2876 = vmatpush1.bf16.xpose.msra.mxu0 0
        %2877 = vmatprep.subr.bf16.mxu0 0
        %2878 = vmatpush1.bf16.xpose.msra.mxu0 0
        %2879 = vmatprep.subr.bf16.mxu0 0
        %2880 = vmatpush1.bf16.xpose.msra.mxu0 0
        %2881 = vmatprep.subr.bf16.mxu0 0
        %2882 = vmatpush1.bf16.xpose.msra.mxu0 0
        %2883 = vmatprep.subr.bf16.mxu0 0
        %2884 = vmatpush1.bf16.xpose.msra.mxu0 %v2867
        %2885 = vmatprep.subr.bf16.mxu0 0
        %2886 = vmatpush2.bf16.xpose.msra.mxu0 0
        %2887 = vmatprep.subr.bf16.mxu0 0
        %2888 = vmatpush2.bf16.xpose.msra.mxu0 0
        %2889 = vmatprep.subr.bf16.mxu0 0
        %2890 = vmatpush2.bf16.xpose.msra.mxu0 0
        %2891 = vmatprep.subr.bf16.mxu0 0
        %2892 = vmatpush2.bf16.xpose.msra.mxu0 0
        %2893 = vmatprep.subr.bf16.mxu0 0
        %2894 = vmatpush2.bf16.xpose.msra.mxu0 0
        %2895 = vmatprep.subr.bf16.mxu0 0
        %2896 = vmatpush2.bf16.xpose.msra.mxu0 0
        %2897 = vmatprep.subr.bf16.mxu0 0
        %2898 = vmatpush2.bf16.xpose.msra.mxu0 0
        %2899 = vmatprep.subr.bf16.mxu0 0
        %2900 = vmatpush2.bf16.xpose.msra.mxu0 0
        %2901 = vmatprep.mubr.bf16.mxu0 0
        %2902 = vmatmul.mubr.bf16.gmra.mxu0 %v2865
        %v2903 = vpop.f32.mrf.mxu0
        %v2904 = vadd.f32 0.0, %v2903
        %v2905 = vpop.f32.mrf.mxu0
        %v2906 = vpop.f32.mrf.mxu0
        %v2907 = vpop.f32.mrf.mxu0
        %2908 = vdwg.mxu0
        %v2910 = vsel %vm2466, %v2392, 0
        %v2912 = vsel %vm2466, %v767, 0
        %2914 = vmatprep.subr.bf16.mxu0 0
        %2915 = vmatpush1.bf16.xpose.msra.mxu0 0
        %2916 = vmatprep.subr.bf16.mxu0 0
        %2917 = vmatpush1.bf16.xpose.msra.mxu0 0
        %2918 = vmatprep.subr.bf16.mxu0 0
        %2919 = vmatpush1.bf16.xpose.msra.mxu0 0
        %2920 = vmatprep.subr.bf16.mxu0 0
        %2921 = vmatpush1.bf16.xpose.msra.mxu0 0
        %2922 = vmatprep.subr.bf16.mxu0 0
        %2923 = vmatpush1.bf16.xpose.msra.mxu0 0
        %2924 = vmatprep.subr.bf16.mxu0 0
        %2925 = vmatpush1.bf16.xpose.msra.mxu0 0
        %2926 = vmatprep.subr.bf16.mxu0 0
        %2927 = vmatpush1.bf16.xpose.msra.mxu0 0
        %2928 = vmatprep.subr.bf16.mxu0 0
        %2929 = vmatpush1.bf16.xpose.msra.mxu0 %v2912
        %2930 = vmatprep.subr.bf16.mxu0 0
        %2931 = vmatpush2.bf16.xpose.msra.mxu0 0
        %2932 = vmatprep.subr.bf16.mxu0 0
        %2933 = vmatpush2.bf16.xpose.msra.mxu0 0
        %2934 = vmatprep.subr.bf16.mxu0 0
        %2935 = vmatpush2.bf16.xpose.msra.mxu0 0
        %2936 = vmatprep.subr.bf16.mxu0 0
        %2937 = vmatpush2.bf16.xpose.msra.mxu0 0
        %2938 = vmatprep.subr.bf16.mxu0 0
        %2939 = vmatpush2.bf16.xpose.msra.mxu0 0
        %2940 = vmatprep.subr.bf16.mxu0 0
        %2941 = vmatpush2.bf16.xpose.msra.mxu0 0
        %2942 = vmatprep.subr.bf16.mxu0 0
        %2943 = vmatpush2.bf16.xpose.msra.mxu0 0
        %2944 = vmatprep.subr.bf16.mxu0 0
        %2945 = vmatpush2.bf16.xpose.msra.mxu0 0
        %2946 = vmatprep.mubr.bf16.mxu0 0
        %2947 = vmatmul.mubr.bf16.gmra.mxu0 %v2910
        %v2948 = vpop.f32.mrf.mxu0
        %v2949 = vadd.f32 0.0, %v2948
        %v2950 = vpop.f32.mrf.mxu0
        %v2951 = vpop.f32.mrf.mxu0
        %v2952 = vpop.f32.mrf.mxu0
        %2953 = vdwg.mxu0
        %v2955 = vsel %vm2466, %v2393, 0
        %v2957 = vsel %vm2466, %v768, 0
        %2959 = vmatprep.subr.bf16.mxu0 0
        %2960 = vmatpush1.bf16.xpose.msra.mxu0 0
        %2961 = vmatprep.subr.bf16.mxu0 0
        %2962 = vmatpush1.bf16.xpose.msra.mxu0 0
        %2963 = vmatprep.subr.bf16.mxu0 0
        %2964 = vmatpush1.bf16.xpose.msra.mxu0 0
        %2965 = vmatprep.subr.bf16.mxu0 0
        %2966 = vmatpush1.bf16.xpose.msra.mxu0 0
        %2967 = vmatprep.subr.bf16.mxu0 0
        %2968 = vmatpush1.bf16.xpose.msra.mxu0 0
        %2969 = vmatprep.subr.bf16.mxu0 0
        %2970 = vmatpush1.bf16.xpose.msra.mxu0 0
        %2971 = vmatprep.subr.bf16.mxu0 0
        %2972 = vmatpush1.bf16.xpose.msra.mxu0 0
        %2973 = vmatprep.subr.bf16.mxu0 0
        %2974 = vmatpush1.bf16.xpose.msra.mxu0 %v2957
        %2975 = vmatprep.subr.bf16.mxu0 0
        %2976 = vmatpush2.bf16.xpose.msra.mxu0 0
        %2977 = vmatprep.subr.bf16.mxu0 0
        %2978 = vmatpush2.bf16.xpose.msra.mxu0 0
        %2979 = vmatprep.subr.bf16.mxu0 0
        %2980 = vmatpush2.bf16.xpose.msra.mxu0 0
        %2981 = vmatprep.subr.bf16.mxu0 0
        %2982 = vmatpush2.bf16.xpose.msra.mxu0 0
        %2983 = vmatprep.subr.bf16.mxu0 0
        %2984 = vmatpush2.bf16.xpose.msra.mxu0 0
        %2985 = vmatprep.subr.bf16.mxu0 0
        %2986 = vmatpush2.bf16.xpose.msra.mxu0 0
        %2987 = vmatprep.subr.bf16.mxu0 0
        %2988 = vmatpush2.bf16.xpose.msra.mxu0 0
        %2989 = vmatprep.subr.bf16.mxu0 0
        %2990 = vmatpush2.bf16.xpose.msra.mxu0 0
        %2991 = vmatprep.mubr.bf16.mxu0 0
        %2992 = vmatmul.mubr.bf16.gmra.mxu0 %v2955
        %v2993 = vpop.f32.mrf.mxu0
        %v2994 = vadd.f32 0.0, %v2993
        %v2995 = vpop.f32.mrf.mxu0
        %v2996 = vpop.f32.mrf.mxu0
        %v2997 = vpop.f32.mrf.mxu0
        %2998 = vdwg.mxu0
        %v2999 = vlaneseq
        %v3000 = vshrl.u32 %v2999, 7
        %v3001 = vsub.s32 0, %v3000
        %v3002 = vrot.slane %v2227, %v3001
        %3004 = vbcast.lane.b32.xlu0 %v3002, 256
        %v3005 = vpop.permute.xlu0 %3004
        %v3006 = vlaneseq
        %v3007 = vshrl.u32 %v3006, 7
        %v3008 = vsub.s32 1, %v3007
        %v3009 = vrot.slane %v2227, %v3008
        %3011 = vbcast.lane.b32.xlu0 %v3009, 256
        %v3012 = vpop.permute.xlu0 %3011
        %v3013 = vlaneseq
        %v3014 = vshrl.u32 %v3013, 7
        %v3015 = vsub.s32 2, %v3014
        %v3016 = vrot.slane %v2227, %v3015
        %3018 = vbcast.lane.b32.xlu0 %v3016, 256
        %v3019 = vpop.permute.xlu0 %3018
        %v3020 = vlaneseq
        %v3021 = vshrl.u32 %v3020, 7
        %v3022 = vsub.s32 3, %v3021
        %v3023 = vrot.slane %v2227, %v3022
        %3025 = vbcast.lane.b32.xlu0 %v3023, 256
        %v3026 = vpop.permute.xlu0 %3025
        %v3027 = vlaneseq
        %v3028 = vshrl.u32 %v3027, 7
        %v3029 = vsub.s32 4, %v3028
        %v3030 = vrot.slane %v2227, %v3029
        %3032 = vbcast.lane.b32.xlu0 %v3030, 256
        %v3033 = vpop.permute.xlu0 %3032
        %v3034 = vlaneseq
        %v3035 = vshrl.u32 %v3034, 7
        %v3036 = vsub.s32 5, %v3035
        %v3037 = vrot.slane %v2227, %v3036
        %3039 = vbcast.lane.b32.xlu0 %v3037, 256
        %v3040 = vpop.permute.xlu0 %3039
        %v3041 = vlaneseq
        %v3042 = vshrl.u32 %v3041, 7
        %v3043 = vsub.s32 6, %v3042
        %v3044 = vrot.slane %v2227, %v3043
        %3046 = vbcast.lane.b32.xlu0 %v3044, 256
        %v3047 = vpop.permute.xlu0 %3046
        %v3048 = vlaneseq
        %v3049 = vshrl.u32 %v3048, 7
        %v3050 = vsub.s32 7, %v3049
        %v3051 = vrot.slane %v2227, %v3050
        %3053 = vbcast.lane.b32.xlu0 %v3051, 256
        %v3054 = vpop.permute.xlu0 %3053
        %v3055 = vld [vmem:[#allocation7] sm:$0xf]
        %v3056 = vld [vmem:[#allocation7 + $0x4] sm:$0xf]
        %v3057 = vld [vmem:[#allocation7 + $0x8] sm:$0xf]
        %v3058 = vld [vmem:[#allocation7 + $0xc] sm:$0xf]
        %v3059 = vld [vmem:[#allocation7 + $0x10] sm:$0xf]
        %v3060 = vld [vmem:[#allocation7 + $0x14] sm:$0xf]
        %v3061 = vld [vmem:[#allocation7 + $0x18] sm:$0xf]
        %v3062 = vld [vmem:[#allocation7 + $0x1c] sm:$0xf]
        %v3063 = vmul.f32 %v3005, %v3055
        %v3064 = vmul.f32 %v3012, %v3056
        %v3065 = vmul.f32 %v3019, %v3057
        %v3066 = vmul.f32 %v3026, %v3058
        %v3067 = vmul.f32 %v3033, %v3059
        %v3068 = vmul.f32 %v3040, %v3060
        %v3069 = vmul.f32 %v3047, %v3061
        %v3070 = vmul.f32 %v3054, %v3062
        %v3071 = vadd.f32 %v3063, %v2679
        %v3072 = vadd.f32 %v3064, %v2724
        %v3073 = vadd.f32 %v3065, %v2769
        %v3074 = vadd.f32 %v3066, %v2814
        %v3075 = vadd.f32 %v3067, %v2859
        %v3076 = vadd.f32 %v3068, %v2904
        %v3077 = vadd.f32 %v3069, %v2949
        %v3078 = vadd.f32 %v3070, %v2994
        %v3079 = vcombine.low %v2505, %v2591
        %v3080 = vcombine.high %v2505, %v2591
        %v3082 = vunpack.c.l.s4 1983009808
        %v3083 = vunpack.c.0.s8 %v3082
        %v3084 = vlaneseq
        %v3085 = vshrl.u32 %v3084, 7
        %v3086 = vsub.s32 %v3083, %v3085
        %v3087 = vrot.slane %v3079, %v3086
        %v3089 = vunpack.c.l.s4 1983009808
        %v3090 = vunpack.c.0.s8 %v3089
        %v3091 = vlaneseq
        %v3092 = vshrl.u32 %v3091, 7
        %v3093 = vsub.s32 %v3090, %v3092
        %v3094 = vrot.slane %v3080, %v3093
        %v3095 = vcombine.low %v2548, %v2634
        %v3096 = vcombine.high %v2548, %v2634
        %v3098 = vunpack.c.l.s4 1983009808
        %v3099 = vunpack.c.0.s8 %v3098
        %v3100 = vlaneseq
        %v3101 = vshrl.u32 %v3100, 7
        %v3102 = vsub.s32 %v3099, %v3101
        %v3103 = vrot.slane %v3095, %v3102
        %v3105 = vunpack.c.l.s4 1983009808
        %v3106 = vunpack.c.0.s8 %v3105
        %v3107 = vlaneseq
        %v3108 = vshrl.u32 %v3107, 7
        %v3109 = vsub.s32 %v3106, %v3108
        %v3110 = vrot.slane %v3096, %v3109
        %v3111 = vcombine.low %v3087, %v3103
        %v3112 = vcombine.high %v3087, %v3103
        %v3114 = vunpack.c.l.s4 1934713408
        %v3115 = vunpack.c.0.s8 %v3114
        %v3116 = vlaneseq
        %v3117 = vshrl.u32 %v3116, 7
        %v3118 = vsub.s32 %v3115, %v3117
        %v3119 = vrot.slane %v3111, %v3118
        %v3121 = vunpack.c.l.s4 1934713408
        %v3122 = vunpack.c.0.s8 %v3121
        %v3123 = vlaneseq
        %v3124 = vshrl.u32 %v3123, 7
        %v3125 = vsub.s32 %v3122, %v3124
        %v3126 = vrot.slane %v3112, %v3125
        %v3127 = vcombine.low %v3094, %v3110
        %v3128 = vcombine.high %v3094, %v3110
        %v3130 = vunpack.c.l.s4 1934713408
        %v3131 = vunpack.c.0.s8 %v3130
        %v3132 = vlaneseq
        %v3133 = vshrl.u32 %v3132, 7
        %v3134 = vsub.s32 %v3131, %v3133
        %v3135 = vrot.slane %v3127, %v3134
        %v3137 = vunpack.c.l.s4 1934713408
        %v3138 = vunpack.c.0.s8 %v3137
        %v3139 = vlaneseq
        %v3140 = vshrl.u32 %v3139, 7
        %v3141 = vsub.s32 %v3138, %v3140
        %v3142 = vrot.slane %v3128, %v3141
        %v3143 = vcombine.high %v3119, 0.0
        %v3144 = vcombine.high %v3126, 0.0
        %v3145 = vcombine.high %v3135, 0.0
        %v3146 = vcombine.high %v3142, 0.0
        %v3147 = vadd.f32 %v3071, %v3119
        %v3148 = vadd.f32 %v3072, %v3143
        %v3149 = vadd.f32 %v3073, %v3126
        %v3150 = vadd.f32 %v3074, %v3144
        %v3151 = vadd.f32 %v3075, %v3135
        %v3152 = vadd.f32 %v3076, %v3145
        %v3153 = vadd.f32 %v3077, %v3142
        %v3154 = vadd.f32 %v3078, %v3146
        %vm3155 = vcmask 60416
        %3156 = vst.msk [vmem:[#allocation7] sm:$0xf] %vm3155, %v3147
        %3157 = vst.msk [vmem:[#allocation7 + $0x4] sm:$0xf] %vm3155, %v3148
        %3158 = vst.msk [vmem:[#allocation7 + $0x8] sm:$0xf] %vm3155, %v3149
        %3159 = vst.msk [vmem:[#allocation7 + $0xc] sm:$0xf] %vm3155, %v3150
        %3160 = vst.msk [vmem:[#allocation7 + $0x10] sm:$0xf] %vm3155, %v3151
        %3161 = vst.msk [vmem:[#allocation7 + $0x14] sm:$0xf] %vm3155, %v3152
        %3162 = vst.msk [vmem:[#allocation7 + $0x18] sm:$0xf] %vm3155, %v3153
        %3163 = vst.msk [vmem:[#allocation7 + $0x1c] sm:$0xf] %vm3155, %v3154
        // Predicated region
        $region113: #{tpu_custom_call.1} parent=67 // pred_check
          %p3164 = pneg %p596
        $region114: #{tpu_custom_call.1} parent=67 // pred_check_branch
          %3166 = sbr.rel (%p3164) target = $region116
        $region115: #{tpu_custom_call.1} parent=67 // pred_region
          %v3167 = vld [vmem:[#allocation6] sm:$0xff]
          %v3168 = vrcp.pop %v3167
          %v3169 = vmul.f32 1.0, %v3168
          %v3170 = vld [vmem:[#allocation7] sm:$0xf]
          %v3171 = vld [vmem:[#allocation7 + $0x4] sm:$0xf]
          %v3172 = vld [vmem:[#allocation7 + $0x8] sm:$0xf]
          %v3173 = vld [vmem:[#allocation7 + $0xc] sm:$0xf]
          %v3174 = vld [vmem:[#allocation7 + $0x10] sm:$0xf]
          %v3175 = vld [vmem:[#allocation7 + $0x14] sm:$0xf]
          %v3176 = vld [vmem:[#allocation7 + $0x18] sm:$0xf]
          %v3177 = vld [vmem:[#allocation7 + $0x1c] sm:$0xf]
          %v3178 = vlaneseq
          %v3179 = vshrl.u32 %v3178, 7
          %v3180 = vsub.s32 0, %v3179
          %v3181 = vrot.slane %v3169, %v3180
          %3183 = vbcast.lane.b32.xlu0 %v3181, 256
          %v3184 = vpop.permute.xlu0 %3183
          %v3185 = vlaneseq
          %v3186 = vshrl.u32 %v3185, 7
          %v3187 = vsub.s32 1, %v3186
          %v3188 = vrot.slane %v3169, %v3187
          %3190 = vbcast.lane.b32.xlu0 %v3188, 256
          %v3191 = vpop.permute.xlu0 %3190
          %v3192 = vlaneseq
          %v3193 = vshrl.u32 %v3192, 7
          %v3194 = vsub.s32 2, %v3193
          %v3195 = vrot.slane %v3169, %v3194
          %3197 = vbcast.lane.b32.xlu0 %v3195, 256
          %v3198 = vpop.permute.xlu0 %3197
          %v3199 = vlaneseq
          %v3200 = vshrl.u32 %v3199, 7
          %v3201 = vsub.s32 3, %v3200
          %v3202 = vrot.slane %v3169, %v3201
          %3204 = vbcast.lane.b32.xlu0 %v3202, 256
          %v3205 = vpop.permute.xlu0 %3204
          %v3206 = vlaneseq
          %v3207 = vshrl.u32 %v3206, 7
          %v3208 = vsub.s32 4, %v3207
          %v3209 = vrot.slane %v3169, %v3208
          %3211 = vbcast.lane.b32.xlu0 %v3209, 256
          %v3212 = vpop.permute.xlu0 %3211
          %v3213 = vlaneseq
          %v3214 = vshrl.u32 %v3213, 7
          %v3215 = vsub.s32 5, %v3214
          %v3216 = vrot.slane %v3169, %v3215
          %3218 = vbcast.lane.b32.xlu0 %v3216, 256
          %v3219 = vpop.permute.xlu0 %3218
          %v3220 = vlaneseq
          %v3221 = vshrl.u32 %v3220, 7
          %v3222 = vsub.s32 6, %v3221
          %v3223 = vrot.slane %v3169, %v3222
          %3225 = vbcast.lane.b32.xlu0 %v3223, 256
          %v3226 = vpop.permute.xlu0 %3225
          %v3227 = vlaneseq
          %v3228 = vshrl.u32 %v3227, 7
          %v3229 = vsub.s32 7, %v3228
          %v3230 = vrot.slane %v3169, %v3229
          %3232 = vbcast.lane.b32.xlu0 %v3230, 256
          %v3233 = vpop.permute.xlu0 %3232
          %v3234 = vmul.f32 %v3170, %v3184
          %v3235 = vmul.f32 %v3171, %v3191
          %v3236 = vmul.f32 %v3172, %v3198
          %v3237 = vmul.f32 %v3173, %v3205
          %v3238 = vmul.f32 %v3174, %v3212
          %v3239 = vmul.f32 %v3175, %v3219
          %v3240 = vmul.f32 %v3176, %v3226
          %v3241 = vmul.f32 %v3177, %v3233
          %v3242 = vcombine.low %v3234, %v3236
          %v3244 = vunpack.c.l.s4 1983009808
          %v3245 = vunpack.c.0.s8 %v3244
          %v3246 = vlaneseq
          %v3247 = vshrl.u32 %v3246, 7
          %v3248 = vsub.s32 %v3245, %v3247
          %v3249 = vrot.slane %v3242, %v3248
          %v3250 = vcombine.low %v3235, %v3237
          %v3252 = vunpack.c.l.s4 1983009808
          %v3253 = vunpack.c.0.s8 %v3252
          %v3254 = vlaneseq
          %v3255 = vshrl.u32 %v3254, 7
          %v3256 = vsub.s32 %v3253, %v3255
          %v3257 = vrot.slane %v3250, %v3256
          %v3258 = vcombine.low %v3238, %v3240
          %v3260 = vunpack.c.l.s4 1983009808
          %v3261 = vunpack.c.0.s8 %v3260
          %v3262 = vlaneseq
          %v3263 = vshrl.u32 %v3262, 7
          %v3264 = vsub.s32 %v3261, %v3263
          %v3265 = vrot.slane %v3258, %v3264
          %v3266 = vcombine.low %v3239, %v3241
          %v3268 = vunpack.c.l.s4 1983009808
          %v3269 = vunpack.c.0.s8 %v3268
          %v3270 = vlaneseq
          %v3271 = vshrl.u32 %v3270, 7
          %v3272 = vsub.s32 %v3269, %v3271
          %v3273 = vrot.slane %v3266, %v3272
          %v3274 = vcombine.low %v3249, %v3257
          %v3275 = vcombine.high %v3249, %v3257
          %v3277 = vunpack.c.l.s4 1934713408
          %v3278 = vunpack.c.0.s8 %v3277
          %v3279 = vlaneseq
          %v3280 = vshrl.u32 %v3279, 7
          %v3281 = vsub.s32 %v3278, %v3280
          %v3282 = vrot.slane %v3274, %v3281
          %v3284 = vunpack.c.l.s4 1934713408
          %v3285 = vunpack.c.0.s8 %v3284
          %v3286 = vlaneseq
          %v3287 = vshrl.u32 %v3286, 7
          %v3288 = vsub.s32 %v3285, %v3287
          %v3289 = vrot.slane %v3275, %v3288
          %v3290 = vcombine.low %v3265, %v3273
          %v3291 = vcombine.high %v3265, %v3273
          %v3293 = vunpack.c.l.s4 1934713408
          %v3294 = vunpack.c.0.s8 %v3293
          %v3295 = vlaneseq
          %v3296 = vshrl.u32 %v3295, 7
          %v3297 = vsub.s32 %v3294, %v3296
          %v3298 = vrot.slane %v3290, %v3297
          %v3300 = vunpack.c.l.s4 1934713408
          %v3301 = vunpack.c.0.s8 %v3300
          %v3302 = vlaneseq
          %v3303 = vshrl.u32 %v3302, 7
          %v3304 = vsub.s32 %v3301, %v3303
          %v3305 = vrot.slane %v3291, %v3304
          %v3306 = vcombine.low %v3282, %v3298
          %v3307 = vcombine.high %v3282, %v3298
          %v3308 = vcombine.low %v3289, %v3305
          %v3309 = vcombine.high %v3289, %v3305
          %3311 = vrot.lane.b32.xlu0 %v3307, 8
          %v3312 = vpop.permute.xlu0 %3311
          %3315 = vrot.lane.b32.xlu0 %v3308, 16
          %v3316 = vpop.permute.xlu0 %3315
          %3319 = vrot.lane.b32.xlu0 %v3309, 24
          %v3320 = vpop.permute.xlu0 %3319
          %v3322 = vsel %vm1519, %v3306, %v3312
          %v3323 = vsel %vm2466, %v3322, %v3316
          %vm3324 = vcmask 195584
          %v3325 = vsel %vm3324, %v3323, %v3320
          %v3326 = vpack.c.bf16 %v3325, %v3325
          %v3327 = vld [vmem:[#allocation16] sm:$0xf]
          %v3328 = vld [vmem:[#allocation16 + $0x4] sm:$0xf]
          %v3329 = vld [vmem:[#allocation16 + $0x8] sm:$0xf]
          %v3330 = vld [vmem:[#allocation16 + $0xc] sm:$0xf]
          %v3331 = vld [vmem:[#allocation17] sm:$0x1]
          %v3333 = vlaneseq
          %v3334 = vshrl.u32 %v3333, 7
          %v3335 = vsub.s32 0, %v3334
          %v3336 = vrot.slane %v3331, %v3335
          %v3342 = vunpack.c.l.b16 %v3327
          %v3343 = vunpack.c.l.b16 %v3328
          %v3344 = vunpack.c.l.b16 %v3329
          %v3345 = vunpack.c.l.b16 %v3330
          %v3346 = vpack.c.b16 %v3343, %v3342
          %v3347 = vpack.c.b16 %v3345, %v3344
          %vm3350 = vcmask 261120
          %v3352 = vsel %vm3350, %v3326, 0
          %3354 = vmatprep.subr.bf16.mxu0 0
          %3355 = vmatpush1.bf16.msra.mxu0 0
          %3356 = vmatprep.subr.bf16.mxu0 0
          %3357 = vmatpush1.bf16.msra.mxu0 0
          %3358 = vmatprep.subr.bf16.mxu0 0
          %3359 = vmatpush1.bf16.msra.mxu0 0
          %3360 = vmatprep.subr.bf16.mxu0 0
          %3361 = vmatpush1.bf16.msra.mxu0 0
          %3362 = vmatprep.subr.bf16.mxu0 0
          %3363 = vmatpush1.bf16.msra.mxu0 0
          %3364 = vmatprep.subr.bf16.mxu0 0
          %3365 = vmatpush1.bf16.msra.mxu0 0
          %3366 = vmatprep.subr.bf16.mxu0 0
          %3367 = vmatpush1.bf16.msra.mxu0 %v3347
          %3368 = vmatprep.subr.bf16.mxu0 0
          %3369 = vmatpush1.bf16.msra.mxu0 %v3346
          %3370 = vmatprep.subr.bf16.mxu0 0
          %3371 = vmatpush2.bf16.msra.mxu0 0
          %3372 = vmatprep.subr.bf16.mxu0 0
          %3373 = vmatpush2.bf16.msra.mxu0 0
          %3374 = vmatprep.subr.bf16.mxu0 0
          %3375 = vmatpush2.bf16.msra.mxu0 0
          %3376 = vmatprep.subr.bf16.mxu0 0
          %3377 = vmatpush2.bf16.msra.mxu0 0
          %3378 = vmatprep.subr.bf16.mxu0 0
          %3379 = vmatpush2.bf16.msra.mxu0 0
          %3380 = vmatprep.subr.bf16.mxu0 0
          %3381 = vmatpush2.bf16.msra.mxu0 0
          %3382 = vmatprep.subr.bf16.mxu0 0
          %3383 = vmatpush2.bf16.msra.mxu0 0
          %3384 = vmatprep.subr.bf16.mxu0 0
          %3385 = vmatpush2.bf16.msra.mxu0 0
          %3386 = vmatprep.mubr.bf16.mxu0 0
          %3387 = vmatmul.mubr.bf16.gmra.mxu0 %v3352
          %v3388 = vpop.f32.mrf.mxu0
          %v3389 = vadd.f32 %v3336, %v3388
          %v3390 = vpop.f32.mrf.mxu0
          %v3391 = vpop.f32.mrf.mxu0
          %v3392 = vpop.f32.mrf.mxu0
          %3393 = vdwg.mxu0
          %s3394 = scalar_lea.vmem %s510, %s751 [#allocation8]
          %v3395 = vld [vmem:[%s3394] sm:$0xff]
          %v3396 = vadd.f32 %v3389, %v3395
          %v3397 = vsel %vm3350, %v3396, 0.0
          %3398 = vadd.xlane.f32.xlu0 %v3397
          %v3399 = vpop.xlane.xlu0 %3398
          %v3400 = vrcp.pop 32.0
          %v3401 = vmul.f32 %v3399, %v3400
          %v3402 = vsub.f32 %v3396, %v3401
          %v3403 = vmul.f32 %v3402, %v3402
          %v3404 = vsel %vm3350, %v3403, 0.0
          %3405 = vadd.xlane.f32.xlu0 %v3404
          %v3406 = vpop.xlane.xlu0 %3405
          %v3407 = vmul.f32 %v3406, %v3400
          %v3408 = vld [vmem:[#allocation19] sm:$0x3]
          %v3409 = vadd.f32 %v3407, 1e-05
          %v3410 = vrsqrt.pop %v3409
          %v3411 = vmul.f32 %v3402, %v3410
          %v3412 = vlaneseq
          %v3413 = vshrl.u32 %v3412, 7
          %v3414 = vsub.s32 0, %v3413
          %v3415 = vrot.slane %v3408, %v3414
          %v3416 = vmul.f32 %v3411, %v3415
          %v3417 = vlaneseq
          %v3418 = vshrl.u32 %v3417, 7
          %v3419 = vsub.s32 1, %v3418
          %v3420 = vrot.slane %v3408, %v3419
          %v3421 = vadd.f32 %v3416, %v3420
          %v3422 = vpack.c.bf16 %v3421, %v3421
          %v3423 = vld [vmem:[#allocation20] sm:$0xf]
          %v3424 = vld [vmem:[#allocation20 + $0x4] sm:$0xf]
          %v3425 = vld [vmem:[#allocation20 + $0x8] sm:$0xf]
          %v3426 = vld [vmem:[#allocation20 + $0xc] sm:$0xf]
          %v3427 = vld [vmem:[#allocation22] sm:$0x1]
          %v3429 = vlaneseq
          %v3430 = vshrl.u32 %v3429, 7
          %v3431 = vsub.s32 0, %v3430
          %v3432 = vrot.slane %v3427, %v3431
          %v3438 = vunpack.c.l.b16 %v3423
          %v3439 = vunpack.c.l.b16 %v3424
          %v3440 = vunpack.c.l.b16 %v3425
          %v3441 = vunpack.c.l.b16 %v3426
          %v3442 = vpack.c.b16 %v3439, %v3438
          %v3443 = vpack.c.b16 %v3441, %v3440
          %v3447 = vsel %vm3350, %v3422, 0
          %3449 = vmatprep.subr.bf16.mxu0 0
          %3450 = vmatpush1.bf16.msra.mxu0 0
          %3451 = vmatprep.subr.bf16.mxu0 0
          %3452 = vmatpush1.bf16.msra.mxu0 0
          %3453 = vmatprep.subr.bf16.mxu0 0
          %3454 = vmatpush1.bf16.msra.mxu0 0
          %3455 = vmatprep.subr.bf16.mxu0 0
          %3456 = vmatpush1.bf16.msra.mxu0 0
          %3457 = vmatprep.subr.bf16.mxu0 0
          %3458 = vmatpush1.bf16.msra.mxu0 0
          %3459 = vmatprep.subr.bf16.mxu0 0
          %3460 = vmatpush1.bf16.msra.mxu0 0
          %3461 = vmatprep.subr.bf16.mxu0 0
          %3462 = vmatpush1.bf16.msra.mxu0 %v3443
          %3463 = vmatprep.subr.bf16.mxu0 0
          %3464 = vmatpush1.bf16.msra.mxu0 %v3442
          %3465 = vmatprep.subr.bf16.mxu0 0
          %3466 = vmatpush2.bf16.msra.mxu0 0
          %3467 = vmatprep.subr.bf16.mxu0 0
          %3468 = vmatpush2.bf16.msra.mxu0 0
          %3469 = vmatprep.subr.bf16.mxu0 0
          %3470 = vmatpush2.bf16.msra.mxu0 0
          %3471 = vmatprep.subr.bf16.mxu0 0
          %3472 = vmatpush2.bf16.msra.mxu0 0
          %3473 = vmatprep.subr.bf16.mxu0 0
          %3474 = vmatpush2.bf16.msra.mxu0 0
          %3475 = vmatprep.subr.bf16.mxu0 0
          %3476 = vmatpush2.bf16.msra.mxu0 0
          %3477 = vmatprep.subr.bf16.mxu0 0
          %3478 = vmatpush2.bf16.msra.mxu0 0
          %3479 = vmatprep.subr.bf16.mxu0 0
          %3480 = vmatpush2.bf16.msra.mxu0 0
          %3481 = vmatprep.mubr.bf16.mxu0 0
          %3482 = vmatmul.mubr.bf16.gmra.mxu0 %v3447
          %v3483 = vpop.f32.mrf.mxu0
          %v3484 = vadd.f32 %v3432, %v3483
          %v3485 = vpop.f32.mrf.mxu0
          %v3486 = vpop.f32.mrf.mxu0
          %v3487 = vpop.f32.mrf.mxu0
          %3488 = vdwg.mxu0
          %v3489 = vmax.f32 %v3484, 0.0
          %v3490 = vpack.c.bf16 %v3489, %v3489
          %v3491 = vld [vmem:[%s10] sm:$0xf]
          %v3492 = vld [vmem:[%s10 + $0x4] sm:$0xf]
          %v3493 = vld [vmem:[%s10 + $0x8] sm:$0xf]
          %v3494 = vld [vmem:[%s10 + $0xc] sm:$0xf]
          %v3495 = vld [vmem:[%s11] sm:$0x1]
          %v3497 = vlaneseq
          %v3498 = vshrl.u32 %v3497, 7
          %v3499 = vsub.s32 0, %v3498
          %v3500 = vrot.slane %v3495, %v3499
          %v3506 = vunpack.c.l.b16 %v3491
          %v3507 = vunpack.c.l.b16 %v3492
          %v3508 = vunpack.c.l.b16 %v3493
          %v3509 = vunpack.c.l.b16 %v3494
          %v3510 = vpack.c.b16 %v3507, %v3506
          %v3511 = vpack.c.b16 %v3509, %v3508
          %v3515 = vsel %vm3350, %v3490, 0
          %3517 = vmatprep.subr.bf16.mxu0 0
          %3518 = vmatpush1.bf16.msra.mxu0 0
          %3519 = vmatprep.subr.bf16.mxu0 0
          %3520 = vmatpush1.bf16.msra.mxu0 0
          %3521 = vmatprep.subr.bf16.mxu0 0
          %3522 = vmatpush1.bf16.msra.mxu0 0
          %3523 = vmatprep.subr.bf16.mxu0 0
          %3524 = vmatpush1.bf16.msra.mxu0 0
          %3525 = vmatprep.subr.bf16.mxu0 0
          %3526 = vmatpush1.bf16.msra.mxu0 0
          %3527 = vmatprep.subr.bf16.mxu0 0
          %3528 = vmatpush1.bf16.msra.mxu0 0
          %3529 = vmatprep.subr.bf16.mxu0 0
          %3530 = vmatpush1.bf16.msra.mxu0 %v3511
          %3531 = vmatprep.subr.bf16.mxu0 0
          %3532 = vmatpush1.bf16.msra.mxu0 %v3510
          %3533 = vmatprep.subr.bf16.mxu0 0
          %3534 = vmatpush2.bf16.msra.mxu0 0
          %3535 = vmatprep.subr.bf16.mxu0 0
          %3536 = vmatpush2.bf16.msra.mxu0 0
          %3537 = vmatprep.subr.bf16.mxu0 0
          %3538 = vmatpush2.bf16.msra.mxu0 0
          %3539 = vmatprep.subr.bf16.mxu0 0
          %3540 = vmatpush2.bf16.msra.mxu0 0
          %3541 = vmatprep.subr.bf16.mxu0 0
          %3542 = vmatpush2.bf16.msra.mxu0 0
          %3543 = vmatprep.subr.bf16.mxu0 0
          %3544 = vmatpush2.bf16.msra.mxu0 0
          %3545 = vmatprep.subr.bf16.mxu0 0
          %3546 = vmatpush2.bf16.msra.mxu0 0
          %3547 = vmatprep.subr.bf16.mxu0 0
          %3548 = vmatpush2.bf16.msra.mxu0 0
          %3549 = vmatprep.mubr.bf16.mxu0 0
          %3550 = vmatmul.mubr.bf16.gmra.mxu0 %v3515
          %v3551 = vpop.f32.mrf.mxu0
          %v3552 = vadd.f32 %v3500, %v3551
          %v3553 = vpop.f32.mrf.mxu0
          %v3554 = vpop.f32.mrf.mxu0
          %v3555 = vpop.f32.mrf.mxu0
          %3556 = vdwg.mxu0
          %v3557 = vadd.f32 %v3552, %v3396
          %3558 = vst.msk [vmem:[%s592] sm:$0xff] %vm3350, %v3557
        $region116: #{tpu_custom_call.1} parent=67 // pred_fallthru
          _
        %s3559 = sand.u32 %s330, 1
        %s3560 = scalar_lea.sflag [#allocation10], %s3559
        %s3561 = sand.u32 %s330, 1
        %s3562 = smul.addr %s3561, 8
        %s3563 = scalar_lea.vmem [#allocation23], %s3562
        // Predicated region
        $region117: #{tpu_custom_call.1} parent=67 // pred_check
          %p3564 = pneg %p340
        $region118: #{tpu_custom_call.1} parent=67 // pred_check_branch
          %3566 = sbr.rel (%p3564) target = $region120
        $region119: #{tpu_custom_call.1} parent=67 // pred_region
          %s3568 = ssub.s32 128, 128
          %3569 = vsyncadd %s3560, %s3568
          %s3570 = smul.addr %s40, 2
          %s3571 = sadd.s32 %s41, %s3570
          %s3572 = smul.addr %s3571, 128
          %s3573 = scalar_lea.hbm %s12, %s3572
          %s3575 = sshll.u32 %s3563, 4
          %s3576 = int_to_ptr.vmem [resolvable:$true] %s3575
          %3578 = dma.vmem_to_hbm [thread:$0]  %s3576, 128, %s3573, %s3560
        $region120: #{tpu_custom_call.1} parent=67 // pred_fallthru
          _
      $region68: #{tpu_custom_call.1} parent=5 // pred_fallthru
        _
      %p3579 = scmp.le.s32.totalorder 2, %s30
      // Predicated region
      $region121: #{tpu_custom_call.1} parent=5 // pred_check
        %p3580 = pneg %p3579
      $region122: #{tpu_custom_call.1} parent=5 // pred_check_branch
        %3582 = sbr.rel (%p3580) target = $region124
      $region123: #{tpu_custom_call.1} parent=5 // pred_region
        %s3583 = ssub.s32 %s30, 2
        // Predicated region
        $region125: #{tpu_custom_call.1} parent=123 // pred_check
          %p3584 = pneg %p346
        $region126: #{tpu_custom_call.1} parent=123 // pred_check_branch
          %3586 = sbr.rel (%p3584) target = $region128
        $region127: #{tpu_custom_call.1} parent=123 // pred_region
          %s3587 = sand.u32 %s331, 1
          %s3588 = scalar_lea.sflag [#allocation10], %s3587
          %s3589 = sand.u32 %s331, 1
          %s3590 = smul.addr %s3589, 8
          %s3591 = scalar_lea.vmem [#allocation23], %s3590
          %3592 = dma.done %s3588, 128
        $region128: #{tpu_custom_call.1} parent=123 // pred_fallthru
          _
      $region124: #{tpu_custom_call.1} parent=5 // pred_fallthru
        _
    $region6: #{tpu_custom_call.1} parent=1 // loop_footer
      %s34 = sadd.s32 1, %s30
    $region7: #{tpu_custom_call.1} parent=1 // loop_footer_branch
      %29 = sbr.rel target = $region3
    $region8: #{tpu_custom_call.1} parent=1 // loop_exit
      _
    %3593 = vsyncpa [#allocation9], 1
    %s3594 = scalar_lea.sflag [#allocation9], 1
    %3595 = vsyncpa %s3594, 1
    %3596 = vsyncpa [#allocation12], 1
    %s3597 = scalar_lea.sflag [#allocation12], 1
    %3598 = vsyncpa %s3597, 1
    %3599 = vsyncpa [#allocation15], 1
    %3600 = vsyncpa [#allocation18], 1
    %3601 = vsyncpa [#allocation21], 1
    %3602 = vsyncpa [#allocation10], 1
    %s3603 = scalar_lea.sflag [#allocation10], 1
    %3604 = vsyncpa %s3603, 1

</llo_original>
